<compile_context>
chip_gen: v7x
topology: tpu7x:2x2x1
jax: 0.10.0
libtpu: 0.0.40
codegen_flags: <defaults>
</compile_context>

<pallas_src>
import functools

import jax
import jax.numpy as jnp
from jax.experimental import pallas as pl
from jax.experimental.pallas import tpu as pltpu

# LocalMHA (lucidrains) defaults: heads=8, dim_head=64, no qkv/out bias.
LOCAL_HEADS = 8
LOCAL_DIM_HEAD = 64


# ------------------------------ fused kernel ---------------------------------
def _fused_kernel(x_ref, w_qkv_l_ref, w_out_l_ref, w_qkv_r_ref,
                  w_mix_ref, b_mix_ref, w_proj_ref, b_proj_ref,
                  o_ref,
                  qkv_l_s, y1_s, qkv_r_s,
                  *, num_heads, head_dim, local_heads, local_dim_head,
                  window_size, block_q, matmul_dtype):
    f32 = jnp.float32
    md = matmul_dtype

    def mm(a, b):                       # MXU matmul, f32 accumulation
        return jnp.dot(a, b, preferred_element_type=f32)

    def softmax_rows(s):                # f32 softmax, EUP reciprocal
        m = jnp.max(s, axis=-1, keepdims=True)
        e = jnp.exp(s - m)
        return e * pl.reciprocal(jnp.sum(e, axis=-1, keepdims=True), approx=True)

    x = x_ref[0]                                        # (N, C) f32
    n, c = x.shape
    inner = local_heads * local_dim_head
    d_l = local_dim_head

    # ------------- LocalMHA: banded causal sliding-window attention ----------
    # qkv projection once for the whole sequence; 1/sqrt(d) already folded
    # into the q columns of the weight.
    qkv_l_s[...] = mm(x.astype(md), w_qkv_l_ref[...]).astype(md)

    n_blocks = n // block_q
    ctx = block_q if n_blocks == 1 else 2 * block_q     # previous + current block

    @pl.loop(0, n_blocks)
    def _(i):
        q_start = pl.multiple_of(i * block_q, block_q)
        ctx_start = pl.multiple_of(jnp.maximum(i - 1, 0) * block_q, block_q)

        # additive causal-window mask for this query block, shared by all heads
        q_pos = q_start + jax.lax.broadcasted_iota(jnp.int32, (block_q, ctx), 0)
        k_pos = ctx_start + jax.lax.broadcasted_iota(jnp.int32, (block_q, ctx), 1)
        diff = q_pos - k_pos
        mask_bias = jnp.where((diff >= 0) & (diff <= window_size),
                              jnp.float32(0.0), jnp.float32(-1e30))

        acc = jnp.zeros((block_q, c), f32)
        # TODO(synk): lucidrains LocalAttention uses bucketed windows (+ optional
        # rotary embeddings on q/k); an exact per-token sliding window is used here.
        for h in range(local_heads):                    # static 8-way unroll
            lo = h * d_l
            q_h = qkv_l_s[pl.ds(q_start, block_q), lo:lo + d_l]
            k_h = qkv_l_s[pl.ds(ctx_start, ctx), inner + lo:inner + lo + d_l]
            v_h = qkv_l_s[pl.ds(ctx_start, ctx), 2 * inner + lo:2 * inner + lo + d_l]
            s = jnp.einsum("qd,kd->qk", q_h, k_h, preferred_element_type=f32)
            p = softmax_rows(s + mask_bias)             # (BQ, ctx) f32
            o_h = mm(p.astype(md), v_h)                 # (BQ, d_l) f32
            acc = acc + mm(o_h.astype(md), w_out_l_ref[lo:lo + d_l, :])
        # re_alpha is already folded into w_out; residual x is added after loop.
        y1_s[pl.ds(q_start, block_q), :] = acc.astype(md)

    # attn_y_1 = x + re_alpha * to_out(local_attn)
    y1 = (x + y1_s[...].astype(f32)).astype(md)

    # ------------------------------ ReAttention ------------------------------
    qkv_r_s[...] = mm(y1, w_qkv_r_ref[...]).astype(md)  # (N, 3C), q pre-scaled
    v_r = qkv_r_s[:, 2 * c:3 * c]                       # (N, C)

    # folded 1x1-conv/BN bias: b[g] * (1_{NxN} @ v_g) == colsum(v) * bias_row
    acc = jnp.sum(v_r.astype(f32), axis=0, keepdims=True) * b_mix_ref[...]

    # One (N, N) probability map live at a time; the head mix is a lane-dense
    # (1, C) weight row per source head applied as a VPU FMA on (N, C).
    for h in range(num_heads):
        lo = h * head_dim
        q_h = qkv_r_s[:, lo:lo + head_dim]
        k_h = qkv_r_s[:, c + lo:c + lo + head_dim]
        s = jnp.einsum("nd,md->nm", q_h, k_h, preferred_element_type=f32)
        p = softmax_rows(s)                             # (N, N) f32
        u = mm(p.astype(md), v_r)                       # (N, C) f32, full lanes
        acc = acc + u * w_mix_ref[h:h + 1, :]
    # reatten_scale == 1.0 (transform_scale=False); attn/proj dropouts are p=0.

    # --------------------------- output projection ---------------------------
    y = mm(acc.astype(md), w_proj_ref[...]) + b_proj_ref[...]
    o_ref[0] = y.astype(o_ref.dtype)


# ------------------------------ parameters ------------------------------------
def init_params(key, dim, num_heads):
    ks = jax.random.split(key, 7)
    inner = LOCAL_HEADS * LOCAL_DIM_HEAD

    def w(k, shape, scale=0.02):
        return (scale * jax.random.normal(k, shape)).astype(jnp.float32)

    return {
        # LocalMHA: to_qkv (dim -> 3*inner, no bias), to_out (inner -> dim, no bias)
        "w_qkv_local": w(ks[0], (dim, 3 * inner)),
        "w_out_local": w(ks[1], (inner, dim)),
        # ReAttention: qkv (dim -> 3*dim, no bias), 1x1 conv over heads, BN, proj
        "w_qkv_re": w(ks[2], (dim, 3 * dim)),
        "w_conv": w(ks[3], (num_heads, num_heads), scale=0.3),
        "b_conv": w(ks[4], (num_heads,), scale=0.1),
        "bn_gamma": jnp.ones((num_heads,), jnp.float32),
        "bn_beta": jnp.zeros((num_heads,), jnp.float32),
        "bn_mean": jnp.zeros((num_heads,), jnp.float32),
        "bn_var": jnp.ones((num_heads,), jnp.float32),
        "w_proj": w(ks[5], (dim, dim)),
        "b_proj": w(ks[6], (dim,), scale=0.1),
    }


# ------------------------------- forward --------------------------------------
def sequence_attention_forward(params, x, re_alpha, *, num_heads=8,
                               window_size=7, matmul_dtype=jnp.bfloat16):
    B, N, C = x.shape
    inner = LOCAL_HEADS * LOCAL_DIM_HEAD
    head_dim = C // num_heads
    assert head_dim * num_heads == C
    md = matmul_dtype

    # Query-block size for the banded local attention.  Multiple of 16 so
    # dynamic sublane offsets stay aligned to the bf16 packing; the previous
    # block must cover the causal lookback window.
    block_q = 16
    while block_q < window_size:
        block_q *= 2
    block_q = min(block_q, N)
    assert N % block_q == 0, "N must be a multiple of the query block size"
    assert block_q >= window_size or block_q == N

    # ---- trace-time parameter folding (tiny XLA ops on the weights) ----
    # 1/sqrt(d) score scales folded into the q columns of the qkv projections.
    scale_l = float(LOCAL_DIM_HEAD) ** -0.5
    scale_r = float(head_dim) ** -0.5
    qscale_l = jnp.concatenate([jnp.full((inner,), scale_l, jnp.float32),
                                jnp.ones((2 * inner,), jnp.float32)])
    qscale_r = jnp.concatenate([jnp.full((C,), scale_r, jnp.float32),
                                jnp.ones((2 * C,), jnp.float32)])
    w_qkv_l = params["w_qkv_local"] * qscale_l[None, :]
    w_qkv_r = params["w_qkv_re"] * qscale_r[None, :]

    # Residual gate re_alpha folded into to_out (to_out has no bias).
    alpha = jnp.asarray(re_alpha, jnp.float32).reshape(())
    w_out = alpha * params["w_out_local"]

    # Fold eval-mode BatchNorm2d into the 1x1 head-mix conv, then expand the
    # (H_out, H_in) mix into lane-dense per-source-head rows of width C.
    # TODO(synk): training-mode BatchNorm2d batch statistics not implemented.
    eps = 1e-5
    cs = params["bn_gamma"] * jax.lax.rsqrt(params["bn_var"] + eps)
    w_mix = cs[:, None] * params["w_conv"]                                  # (g, h)
    b_mix = cs * (params["b_conv"] - params["bn_mean"]) + params["bn_beta"]
    w_mix_rows = jnp.repeat(w_mix.T, head_dim, axis=1).astype(jnp.float32)  # (H, C)
    b_mix_row = jnp.repeat(b_mix, head_dim)[None, :].astype(jnp.float32)    # (1, C)
    b_proj = params["b_proj"].reshape(1, C).astype(jnp.float32)

    kern = functools.partial(
        _fused_kernel,
        num_heads=num_heads, head_dim=head_dim,
        local_heads=LOCAL_HEADS, local_dim_head=LOCAL_DIM_HEAD,
        window_size=window_size, block_q=block_q, matmul_dtype=md)

    def resident(shape):   # full-array VMEM block, re-used every grid step
        return pl.BlockSpec(shape, lambda b: (0,) * len(shape))

    return pl.pallas_call(
        kern,
        grid=(B,),
        in_specs=[
            pl.BlockSpec((1, N, C), lambda b: (b, 0, 0)),  # x
            resident((C, 3 * inner)),                      # w_qkv_local (q pre-scaled)
            resident((inner, C)),                          # re_alpha * w_out_local
            resident((C, 3 * C)),                          # w_qkv_re (q pre-scaled)
            resident((num_heads, C)),                      # folded conv/BN mix rows
            resident((1, C)),                              # folded conv/BN bias row
            resident((C, C)),                              # w_proj
            resident((1, C)),                              # b_proj
        ],
        out_specs=pl.BlockSpec((1, N, C), lambda b: (b, 0, 0)),
        out_shape=jax.ShapeDtypeStruct((B, N, C), jnp.float32),
        scratch_shapes=[
            pltpu.VMEM((N, 3 * inner), md),   # fused local qkv (bf16)
            pltpu.VMEM((N, C), md),           # re_alpha * to_out(local_attn)
            pltpu.VMEM((N, 3 * C), md),       # fused re-attn qkv (bf16)
        ],
        compiler_params=pltpu.CompilerParams(
            dimension_semantics=("parallel",),
            vmem_limit_bytes=48 * 1024 * 1024),
    )(x, w_qkv_l.astype(md), w_out.astype(md), w_qkv_r.astype(md),
      w_mix_rows, b_mix_row, params["w_proj"].astype(md), b_proj)


if __name__ == "__main__":
    dim, num_heads, window_size = 32, 8, 7
    B, N = 2, 32

    key = jax.random.PRNGKey(0)
    kx, kp = jax.random.split(key)
    x = jax.random.normal(kx, (B, N, dim), dtype=jnp.float32)
    re_alpha = jnp.full((1, 1), 0.5, dtype=jnp.float32)
    params = init_params(kp, dim, num_heads)

    fwd = jax.jit(functools.partial(sequence_attention_forward,
                                    num_heads=num_heads,
                                    window_size=window_size))
    y = fwd(params, x, re_alpha)
    jax.block_until_ready(y)
    assert y.shape == (B, N, dim) and y.dtype == jnp.float32
    print("KERNEL_OK")
</pallas_src>

<mosaic_0001>
module attributes {stable_mosaic.version = 11 : i64} {
  func.func @_fused_kernel(%arg0: i32, %arg1: memref<1x32x32xf32, #tpu.memory_space<vmem>>, %arg2: memref<32x1536xbf16, #tpu.memory_space<vmem>>, %arg3: memref<512x32xbf16, #tpu.memory_space<vmem>>, %arg4: memref<32x96xbf16, #tpu.memory_space<vmem>>, %arg5: memref<8x32xf32, #tpu.memory_space<vmem>>, %arg6: memref<1x32xf32, #tpu.memory_space<vmem>>, %arg7: memref<32x32xbf16, #tpu.memory_space<vmem>>, %arg8: memref<1x32xf32, #tpu.memory_space<vmem>>, %arg9: memref<1x32x32xf32, #tpu.memory_space<vmem>>, %arg10: memref<32x1536xbf16, #tpu.memory_space<vmem>>, %arg11: memref<32x32xbf16, #tpu.memory_space<vmem>>, %arg12: memref<32x96xbf16, #tpu.memory_space<vmem>>) attributes {dimension_semantics = [#tpu.dimension_semantics<parallel>], iteration_bounds = array<i64: 2>, scalar_prefetch = 0 : i64, scratch_operands = 3 : i64, tpu.core_type = #tpu.core_type<tc>, window_params = [{transform_indices = @transform_0, window_bounds = array<i64: 1, 32, 32>}, {pipeline_mode = #tpu.pipeline_mode<synchronous>, transform_indices = @transform_1, window_bounds = array<i64: 32, 1536>}, {pipeline_mode = #tpu.pipeline_mode<synchronous>, transform_indices = @transform_2, window_bounds = array<i64: 512, 32>}, {pipeline_mode = #tpu.pipeline_mode<synchronous>, transform_indices = @transform_3, window_bounds = array<i64: 32, 96>}, {pipeline_mode = #tpu.pipeline_mode<synchronous>, transform_indices = @transform_4, window_bounds = array<i64: 8, 32>}, {pipeline_mode = #tpu.pipeline_mode<synchronous>, transform_indices = @transform_5, window_bounds = array<i64: 1, 32>}, {pipeline_mode = #tpu.pipeline_mode<synchronous>, transform_indices = @transform_6, window_bounds = array<i64: 32, 32>}, {pipeline_mode = #tpu.pipeline_mode<synchronous>, transform_indices = @transform_7, window_bounds = array<i64: 1, 32>}, {transform_indices = @transform_8, window_bounds = array<i64: 1, 32, 32>}]} {
    %c0 = arith.constant 0 : index
    %c0_0 = arith.constant 0 : index
    %c0_1 = arith.constant 0 : index
    %0 = vector.load %arg1[%c0, %c0_0, %c0_1] : memref<1x32x32xf32, #tpu.memory_space<vmem>>, vector<1x32x32xf32>
    %1 = vector.shape_cast %0 : vector<1x32x32xf32> to vector<32x32xf32>
    %2 = arith.truncf %1 : vector<32x32xf32> to vector<32x32xbf16>
    %c0_2 = arith.constant 0 : index
    %c0_3 = arith.constant 0 : index
    %3 = vector.load %arg2[%c0_2, %c0_3] : memref<32x1536xbf16, #tpu.memory_space<vmem>>, vector<32x1536xbf16>
    %cst = arith.constant dense<0.000000e+00> : vector<32x1536xf32>
    %4 = tpu.matmul %2, %3, %cst {dimension_numbers = #tpu.dot_dimension_numbers<[1], [0], [0], [1], [0, 0, 1, 1], [], []>} : vector<32x32xbf16>, vector<32x1536xbf16>, vector<32x1536xf32> -> vector<32x1536xf32>
    %5 = arith.truncf %4 : vector<32x1536xf32> to vector<32x1536xbf16>
    %c0_4 = arith.constant 0 : index
    %c0_5 = arith.constant 0 : index
    %6 = vector.load %arg10[%c0_4, %c0_5] : memref<32x1536xbf16, #tpu.memory_space<vmem>>, vector<32x1536xbf16>
    tpu.vector_store %arg10[%c0_4, %c0_5], %5 {strides = array<i32>} : memref<32x1536xbf16, #tpu.memory_space<vmem>>, vector<32x1536xbf16>,
    %c0_i32 = arith.constant 0 : i32
    %c2_i32 = arith.constant 2 : i32
    %7 = arith.addi %c0_i32, %c2_i32 : i32
    %c1_i32 = arith.constant 1 : i32
    scf.for %arg13 = %c0_i32 to %7 step %c1_i32  : i32 {
      %c1_i32_85 = arith.constant 1 : i32
      %184 = arith.muli %arg13, %c1_i32_85 : i32
      %c0_i32_86 = arith.constant 0 : i32
      %185 = arith.addi %c0_i32_86, %184 : i32
      %c16_i32 = arith.constant 16 : i32
      %186 = arith.muli %185, %c16_i32 : i32
      %187 = tpu.assume_multiple %186, 16 : i32
      %c1_i32_87 = arith.constant 1 : i32
      %188 = arith.subi %185, %c1_i32_87 : i32
      %c0_i32_88 = arith.constant 0 : i32
      %189 = arith.maxsi %188, %c0_i32_88 : i32
      %c16_i32_89 = arith.constant 16 : i32
      %190 = arith.muli %189, %c16_i32_89 : i32
      %191 = tpu.assume_multiple %190, 16 : i32
      %192 = tpu.iota {dimensions = array<i32: 0>} : vector<16x32xi32>
      %193 = vector.broadcast %187 : i32 to vector<16x32xi32>
      %194 = arith.addi %193, %192 : vector<16x32xi32>
      %195 = tpu.iota {dimensions = array<i32: 1>} : vector<16x32xi32>
      %196 = vector.broadcast %191 : i32 to vector<16x32xi32>
      %197 = arith.addi %196, %195 : vector<16x32xi32>
      %198 = arith.subi %194, %197 : vector<16x32xi32>
      %c0_i32_90 = arith.constant 0 : i32
      %199 = vector.broadcast %c0_i32_90 : i32 to vector<16x32xi32>
      %200 = arith.cmpi sge, %198, %199 : vector<16x32xi32>
      %c7_i32 = arith.constant 7 : i32
      %201 = vector.broadcast %c7_i32 : i32 to vector<16x32xi32>
      %202 = arith.cmpi sle, %198, %201 : vector<16x32xi32>
      %203 = arith.andi %200, %202 : vector<16x32xi1>
      %cst_91 = arith.constant 0.000000e+00 : f32
      %cst_92 = arith.constant -1.000000e+30 : f32
      %204 = vector.broadcast %cst_91 : f32 to vector<16x32xf32>
      %205 = vector.broadcast %cst_92 : f32 to vector<16x32xf32>
      %206 = arith.select %203, %204, %205 : vector<16x32xi1>, vector<16x32xf32>
      %cst_93 = arith.constant 0.000000e+00 : f32
      %207 = vector.broadcast %cst_93 : f32 to vector<16x32xf32>
      %208 = arith.index_cast %187 : i32 to index
      %c0_94 = arith.constant 0 : index
      %209 = vector.load %arg10[%208, %c0_94] : memref<32x1536xbf16, #tpu.memory_space<vmem>>, vector<16x64xbf16>
      %210 = arith.index_cast %191 : i32 to index
      %c512 = arith.constant 512 : index
      %211 = vector.load %arg10[%210, %c512] : memref<32x1536xbf16, #tpu.memory_space<vmem>>, vector<32x64xbf16>
      %212 = arith.index_cast %191 : i32 to index
      %c1024 = arith.constant 1024 : index
      %213 = vector.load %arg10[%212, %c1024] : memref<32x1536xbf16, #tpu.memory_space<vmem>>, vector<32x64xbf16>
      "tpu.trace_start"() <{level = 10 : i32, message = "qd,kd->qk"}> : () -> ()
      %cst_95 = arith.constant dense<0.000000e+00> : vector<16x32xf32>
      %214 = tpu.matmul %209, %211, %cst_95 {dimension_numbers = #tpu.dot_dimension_numbers<[1], [1], [0], [0], [0, 0, 1, 0], [], []>} : vector<16x64xbf16>, vector<32x64xbf16>, vector<16x32xf32> -> vector<16x32xf32>
      "tpu.trace_stop"() : () -> ()
      %215 = arith.addf %214, %206 : vector<16x32xf32>
      %cst_96 = arith.constant dense<0xFF800000> : vector<16xf32>
      %216 = vector.multi_reduction <maximumf>, %215, %cst_96 [1] : vector<16x32xf32> to vector<16xf32>
      %217 = vector.shape_cast %216 : vector<16xf32> to vector<16x1xf32>
      %218 = vector.broadcast %217 : vector<16x1xf32> to vector<16x32xf32>
      %219 = arith.subf %215, %218 : vector<16x32xf32>
      %220 = math.exp %219 : vector<16x32xf32>
      %cst_97 = arith.constant dense<0.000000e+00> : vector<16xf32>
      %221 = vector.multi_reduction <add>, %220, %cst_97 [1] : vector<16x32xf32> to vector<16xf32>
      %222 = vector.shape_cast %221 : vector<16xf32> to vector<16x1xf32>
      %223 = tpu.reciprocal %222 {approx = true} : vector<16x1xf32> -> vector<16x1xf32>
      %224 = vector.broadcast %223 : vector<16x1xf32> to vector<16x32xf32>
      %225 = arith.mulf %220, %224 : vector<16x32xf32>
      %226 = arith.truncf %225 : vector<16x32xf32> to vector<16x32xbf16>
      %cst_98 = arith.constant dense<0.000000e+00> : vector<16x64xf32>
      %227 = tpu.matmul %226, %213, %cst_98 {dimension_numbers = #tpu.dot_dimension_numbers<[1], [0], [0], [1], [0, 0, 1, 1], [], []>} : vector<16x32xbf16>, vector<32x64xbf16>, vector<16x64xf32> -> vector<16x64xf32>
      %228 = arith.truncf %227 : vector<16x64xf32> to vector<16x64xbf16>
      %c0_99 = arith.constant 0 : index
      %c0_100 = arith.constant 0 : index
      %229 = vector.load %arg3[%c0_99, %c0_100] : memref<512x32xbf16, #tpu.memory_space<vmem>>, vector<64x32xbf16>
      %cst_101 = arith.constant dense<0.000000e+00> : vector<16x32xf32>
      %230 = tpu.matmul %228, %229, %cst_101 {dimension_numbers = #tpu.dot_dimension_numbers<[1], [0], [0], [1], [0, 0, 1, 1], [], []>} : vector<16x64xbf16>, vector<64x32xbf16>, vector<16x32xf32> -> vector<16x32xf32>
      %231 = arith.addf %207, %230 : vector<16x32xf32>
      %232 = arith.index_cast %187 : i32 to index
      %c64_102 = arith.constant 64 : index
      %233 = vector.load %arg10[%232, %c64_102] : memref<32x1536xbf16, #tpu.memory_space<vmem>>, vector<16x64xbf16>
      %234 = arith.index_cast %191 : i32 to index
      %c576 = arith.constant 576 : index
      %235 = vector.load %arg10[%234, %c576] : memref<32x1536xbf16, #tpu.memory_space<vmem>>, vector<32x64xbf16>
      %236 = arith.index_cast %191 : i32 to index
      %c1088 = arith.constant 1088 : index
      %237 = vector.load %arg10[%236, %c1088] : memref<32x1536xbf16, #tpu.memory_space<vmem>>, vector<32x64xbf16>
      "tpu.trace_start"() <{level = 10 : i32, message = "qd,kd->qk"}> : () -> ()
      %cst_103 = arith.constant dense<0.000000e+00> : vector<16x32xf32>
      %238 = tpu.matmul %233, %235, %cst_103 {dimension_numbers = #tpu.dot_dimension_numbers<[1], [1], [0], [0], [0, 0, 1, 0], [], []>} : vector<16x64xbf16>, vector<32x64xbf16>, vector<16x32xf32> -> vector<16x32xf32>
      "tpu.trace_stop"() : () -> ()
      %239 = arith.addf %238, %206 : vector<16x32xf32>
      %cst_104 = arith.constant dense<0xFF800000> : vector<16xf32>
      %240 = vector.multi_reduction <maximumf>, %239, %cst_104 [1] : vector<16x32xf32> to vector<16xf32>
      %241 = vector.shape_cast %240 : vector<16xf32> to vector<16x1xf32>
      %242 = vector.broadcast %241 : vector<16x1xf32> to vector<16x32xf32>
      %243 = arith.subf %239, %242 : vector<16x32xf32>
      %244 = math.exp %243 : vector<16x32xf32>
      %cst_105 = arith.constant dense<0.000000e+00> : vector<16xf32>
      %245 = vector.multi_reduction <add>, %244, %cst_105 [1] : vector<16x32xf32> to vector<16xf32>
      %246 = vector.shape_cast %245 : vector<16xf32> to vector<16x1xf32>
      %247 = tpu.reciprocal %246 {approx = true} : vector<16x1xf32> -> vector<16x1xf32>
      %248 = vector.broadcast %247 : vector<16x1xf32> to vector<16x32xf32>
      %249 = arith.mulf %244, %248 : vector<16x32xf32>
      %250 = arith.truncf %249 : vector<16x32xf32> to vector<16x32xbf16>
      %cst_106 = arith.constant dense<0.000000e+00> : vector<16x64xf32>
      %251 = tpu.matmul %250, %237, %cst_106 {dimension_numbers = #tpu.dot_dimension_numbers<[1], [0], [0], [1], [0, 0, 1, 1], [], []>} : vector<16x32xbf16>, vector<32x64xbf16>, vector<16x64xf32> -> vector<16x64xf32>
      %252 = arith.truncf %251 : vector<16x64xf32> to vector<16x64xbf16>
      %c64_107 = arith.constant 64 : index
      %c0_108 = arith.constant 0 : index
      %253 = vector.load %arg3[%c64_107, %c0_108] : memref<512x32xbf16, #tpu.memory_space<vmem>>, vector<64x32xbf16>
      %cst_109 = arith.constant dense<0.000000e+00> : vector<16x32xf32>
      %254 = tpu.matmul %252, %253, %cst_109 {dimension_numbers = #tpu.dot_dimension_numbers<[1], [0], [0], [1], [0, 0, 1, 1], [], []>} : vector<16x64xbf16>, vector<64x32xbf16>, vector<16x32xf32> -> vector<16x32xf32>
      %255 = arith.addf %231, %254 : vector<16x32xf32>
      %256 = arith.index_cast %187 : i32 to index
      %c128 = arith.constant 128 : index
      %257 = vector.load %arg10[%256, %c128] : memref<32x1536xbf16, #tpu.memory_space<vmem>>, vector<16x64xbf16>
      %258 = arith.index_cast %191 : i32 to index
      %c640 = arith.constant 640 : index
      %259 = vector.load %arg10[%258, %c640] : memref<32x1536xbf16, #tpu.memory_space<vmem>>, vector<32x64xbf16>
      %260 = arith.index_cast %191 : i32 to index
      %c1152 = arith.constant 1152 : index
      %261 = vector.load %arg10[%260, %c1152] : memref<32x1536xbf16, #tpu.memory_space<vmem>>, vector<32x64xbf16>
      "tpu.trace_start"() <{level = 10 : i32, message = "qd,kd->qk"}> : () -> ()
      %cst_110 = arith.constant dense<0.000000e+00> : vector<16x32xf32>
      %262 = tpu.matmul %257, %259, %cst_110 {dimension_numbers = #tpu.dot_dimension_numbers<[1], [1], [0], [0], [0, 0, 1, 0], [], []>} : vector<16x64xbf16>, vector<32x64xbf16>, vector<16x32xf32> -> vector<16x32xf32>
      "tpu.trace_stop"() : () -> ()
      %263 = arith.addf %262, %206 : vector<16x32xf32>
      %cst_111 = arith.constant dense<0xFF800000> : vector<16xf32>
      %264 = vector.multi_reduction <maximumf>, %263, %cst_111 [1] : vector<16x32xf32> to vector<16xf32>
      %265 = vector.shape_cast %264 : vector<16xf32> to vector<16x1xf32>
      %266 = vector.broadcast %265 : vector<16x1xf32> to vector<16x32xf32>
      %267 = arith.subf %263, %266 : vector<16x32xf32>
      %268 = math.exp %267 : vector<16x32xf32>
      %cst_112 = arith.constant dense<0.000000e+00> : vector<16xf32>
      %269 = vector.multi_reduction <add>, %268, %cst_112 [1] : vector<16x32xf32> to vector<16xf32>
      %270 = vector.shape_cast %269 : vector<16xf32> to vector<16x1xf32>
      %271 = tpu.reciprocal %270 {approx = true} : vector<16x1xf32> -> vector<16x1xf32>
      %272 = vector.broadcast %271 : vector<16x1xf32> to vector<16x32xf32>
      %273 = arith.mulf %268, %272 : vector<16x32xf32>
      %274 = arith.truncf %273 : vector<16x32xf32> to vector<16x32xbf16>
      %cst_113 = arith.constant dense<0.000000e+00> : vector<16x64xf32>
      %275 = tpu.matmul %274, %261, %cst_113 {dimension_numbers = #tpu.dot_dimension_numbers<[1], [0], [0], [1], [0, 0, 1, 1], [], []>} : vector<16x32xbf16>, vector<32x64xbf16>, vector<16x64xf32> -> vector<16x64xf32>
      %276 = arith.truncf %275 : vector<16x64xf32> to vector<16x64xbf16>
      %c128_114 = arith.constant 128 : index
      %c0_115 = arith.constant 0 : index
      %277 = vector.load %arg3[%c128_114, %c0_115] : memref<512x32xbf16, #tpu.memory_space<vmem>>, vector<64x32xbf16>
      %cst_116 = arith.constant dense<0.000000e+00> : vector<16x32xf32>
      %278 = tpu.matmul %276, %277, %cst_116 {dimension_numbers = #tpu.dot_dimension_numbers<[1], [0], [0], [1], [0, 0, 1, 1], [], []>} : vector<16x64xbf16>, vector<64x32xbf16>, vector<16x32xf32> -> vector<16x32xf32>
      %279 = arith.addf %255, %278 : vector<16x32xf32>
      %280 = arith.index_cast %187 : i32 to index
      %c192 = arith.constant 192 : index
      %281 = vector.load %arg10[%280, %c192] : memref<32x1536xbf16, #tpu.memory_space<vmem>>, vector<16x64xbf16>
      %282 = arith.index_cast %191 : i32 to index
      %c704 = arith.constant 704 : index
      %283 = vector.load %arg10[%282, %c704] : memref<32x1536xbf16, #tpu.memory_space<vmem>>, vector<32x64xbf16>
      %284 = arith.index_cast %191 : i32 to index
      %c1216 = arith.constant 1216 : index
      %285 = vector.load %arg10[%284, %c1216] : memref<32x1536xbf16, #tpu.memory_space<vmem>>, vector<32x64xbf16>
      "tpu.trace_start"() <{level = 10 : i32, message = "qd,kd->qk"}> : () -> ()
      %cst_117 = arith.constant dense<0.000000e+00> : vector<16x32xf32>
      %286 = tpu.matmul %281, %283, %cst_117 {dimension_numbers = #tpu.dot_dimension_numbers<[1], [1], [0], [0], [0, 0, 1, 0], [], []>} : vector<16x64xbf16>, vector<32x64xbf16>, vector<16x32xf32> -> vector<16x32xf32>
      "tpu.trace_stop"() : () -> ()
      %287 = arith.addf %286, %206 : vector<16x32xf32>
      %cst_118 = arith.constant dense<0xFF800000> : vector<16xf32>
      %288 = vector.multi_reduction <maximumf>, %287, %cst_118 [1] : vector<16x32xf32> to vector<16xf32>
      %289 = vector.shape_cast %288 : vector<16xf32> to vector<16x1xf32>
      %290 = vector.broadcast %289 : vector<16x1xf32> to vector<16x32xf32>
      %291 = arith.subf %287, %290 : vector<16x32xf32>
      %292 = math.exp %291 : vector<16x32xf32>
      %cst_119 = arith.constant dense<0.000000e+00> : vector<16xf32>
      %293 = vector.multi_reduction <add>, %292, %cst_119 [1] : vector<16x32xf32> to vector<16xf32>
      %294 = vector.shape_cast %293 : vector<16xf32> to vector<16x1xf32>
      %295 = tpu.reciprocal %294 {approx = true} : vector<16x1xf32> -> vector<16x1xf32>
      %296 = vector.broadcast %295 : vector<16x1xf32> to vector<16x32xf32>
      %297 = arith.mulf %292, %296 : vector<16x32xf32>
      %298 = arith.truncf %297 : vector<16x32xf32> to vector<16x32xbf16>
      %cst_120 = arith.constant dense<0.000000e+00> : vector<16x64xf32>
      %299 = tpu.matmul %298, %285, %cst_120 {dimension_numbers = #tpu.dot_dimension_numbers<[1], [0], [0], [1], [0, 0, 1, 1], [], []>} : vector<16x32xbf16>, vector<32x64xbf16>, vector<16x64xf32> -> vector<16x64xf32>
      %300 = arith.truncf %299 : vector<16x64xf32> to vector<16x64xbf16>
      %c192_121 = arith.constant 192 : index
      %c0_122 = arith.constant 0 : index
      %301 = vector.load %arg3[%c192_121, %c0_122] : memref<512x32xbf16, #tpu.memory_space<vmem>>, vector<64x32xbf16>
      %cst_123 = arith.constant dense<0.000000e+00> : vector<16x32xf32>
      %302 = tpu.matmul %300, %301, %cst_123 {dimension_numbers = #tpu.dot_dimension_numbers<[1], [0], [0], [1], [0, 0, 1, 1], [], []>} : vector<16x64xbf16>, vector<64x32xbf16>, vector<16x32xf32> -> vector<16x32xf32>
      %303 = arith.addf %279, %302 : vector<16x32xf32>
      %304 = arith.index_cast %187 : i32 to index
      %c256 = arith.constant 256 : index
      %305 = vector.load %arg10[%304, %c256] : memref<32x1536xbf16, #tpu.memory_space<vmem>>, vector<16x64xbf16>
      %306 = arith.index_cast %191 : i32 to index
      %c768 = arith.constant 768 : index
      %307 = vector.load %arg10[%306, %c768] : memref<32x1536xbf16, #tpu.memory_space<vmem>>, vector<32x64xbf16>
      %308 = arith.index_cast %191 : i32 to index
      %c1280 = arith.constant 1280 : index
      %309 = vector.load %arg10[%308, %c1280] : memref<32x1536xbf16, #tpu.memory_space<vmem>>, vector<32x64xbf16>
      "tpu.trace_start"() <{level = 10 : i32, message = "qd,kd->qk"}> : () -> ()
      %cst_124 = arith.constant dense<0.000000e+00> : vector<16x32xf32>
      %310 = tpu.matmul %305, %307, %cst_124 {dimension_numbers = #tpu.dot_dimension_numbers<[1], [1], [0], [0], [0, 0, 1, 0], [], []>} : vector<16x64xbf16>, vector<32x64xbf16>, vector<16x32xf32> -> vector<16x32xf32>
      "tpu.trace_stop"() : () -> ()
      %311 = arith.addf %310, %206 : vector<16x32xf32>
      %cst_125 = arith.constant dense<0xFF800000> : vector<16xf32>
      %312 = vector.multi_reduction <maximumf>, %311, %cst_125 [1] : vector<16x32xf32> to vector<16xf32>
      %313 = vector.shape_cast %312 : vector<16xf32> to vector<16x1xf32>
      %314 = vector.broadcast %313 : vector<16x1xf32> to vector<16x32xf32>
      %315 = arith.subf %311, %314 : vector<16x32xf32>
      %316 = math.exp %315 : vector<16x32xf32>
      %cst_126 = arith.constant dense<0.000000e+00> : vector<16xf32>
      %317 = vector.multi_reduction <add>, %316, %cst_126 [1] : vector<16x32xf32> to vector<16xf32>
      %318 = vector.shape_cast %317 : vector<16xf32> to vector<16x1xf32>
      %319 = tpu.reciprocal %318 {approx = true} : vector<16x1xf32> -> vector<16x1xf32>
      %320 = vector.broadcast %319 : vector<16x1xf32> to vector<16x32xf32>
      %321 = arith.mulf %316, %320 : vector<16x32xf32>
      %322 = arith.truncf %321 : vector<16x32xf32> to vector<16x32xbf16>
      %cst_127 = arith.constant dense<0.000000e+00> : vector<16x64xf32>
      %323 = tpu.matmul %322, %309, %cst_127 {dimension_numbers = #tpu.dot_dimension_numbers<[1], [0], [0], [1], [0, 0, 1, 1], [], []>} : vector<16x32xbf16>, vector<32x64xbf16>, vector<16x64xf32> -> vector<16x64xf32>
      %324 = arith.truncf %323 : vector<16x64xf32> to vector<16x64xbf16>
      %c256_128 = arith.constant 256 : index
      %c0_129 = arith.constant 0 : index
      %325 = vector.load %arg3[%c256_128, %c0_129] : memref<512x32xbf16, #tpu.memory_space<vmem>>, vector<64x32xbf16>
      %cst_130 = arith.constant dense<0.000000e+00> : vector<16x32xf32>
      %326 = tpu.matmul %324, %325, %cst_130 {dimension_numbers = #tpu.dot_dimension_numbers<[1], [0], [0], [1], [0, 0, 1, 1], [], []>} : vector<16x64xbf16>, vector<64x32xbf16>, vector<16x32xf32> -> vector<16x32xf32>
      %327 = arith.addf %303, %326 : vector<16x32xf32>
      %328 = arith.index_cast %187 : i32 to index
      %c320 = arith.constant 320 : index
      %329 = vector.load %arg10[%328, %c320] : memref<32x1536xbf16, #tpu.memory_space<vmem>>, vector<16x64xbf16>
      %330 = arith.index_cast %191 : i32 to index
      %c832 = arith.constant 832 : index
      %331 = vector.load %arg10[%330, %c832] : memref<32x1536xbf16, #tpu.memory_space<vmem>>, vector<32x64xbf16>
      %332 = arith.index_cast %191 : i32 to index
      %c1344 = arith.constant 1344 : index
      %333 = vector.load %arg10[%332, %c1344] : memref<32x1536xbf16, #tpu.memory_space<vmem>>, vector<32x64xbf16>
      "tpu.trace_start"() <{level = 10 : i32, message = "qd,kd->qk"}> : () -> ()
      %cst_131 = arith.constant dense<0.000000e+00> : vector<16x32xf32>
      %334 = tpu.matmul %329, %331, %cst_131 {dimension_numbers = #tpu.dot_dimension_numbers<[1], [1], [0], [0], [0, 0, 1, 0], [], []>} : vector<16x64xbf16>, vector<32x64xbf16>, vector<16x32xf32> -> vector<16x32xf32>
      "tpu.trace_stop"() : () -> ()
      %335 = arith.addf %334, %206 : vector<16x32xf32>
      %cst_132 = arith.constant dense<0xFF800000> : vector<16xf32>
      %336 = vector.multi_reduction <maximumf>, %335, %cst_132 [1] : vector<16x32xf32> to vector<16xf32>
      %337 = vector.shape_cast %336 : vector<16xf32> to vector<16x1xf32>
      %338 = vector.broadcast %337 : vector<16x1xf32> to vector<16x32xf32>
      %339 = arith.subf %335, %338 : vector<16x32xf32>
      %340 = math.exp %339 : vector<16x32xf32>
      %cst_133 = arith.constant dense<0.000000e+00> : vector<16xf32>
      %341 = vector.multi_reduction <add>, %340, %cst_133 [1] : vector<16x32xf32> to vector<16xf32>
      %342 = vector.shape_cast %341 : vector<16xf32> to vector<16x1xf32>
      %343 = tpu.reciprocal %342 {approx = true} : vector<16x1xf32> -> vector<16x1xf32>
      %344 = vector.broadcast %343 : vector<16x1xf32> to vector<16x32xf32>
      %345 = arith.mulf %340, %344 : vector<16x32xf32>
      %346 = arith.truncf %345 : vector<16x32xf32> to vector<16x32xbf16>
      %cst_134 = arith.constant dense<0.000000e+00> : vector<16x64xf32>
      %347 = tpu.matmul %346, %333, %cst_134 {dimension_numbers = #tpu.dot_dimension_numbers<[1], [0], [0], [1], [0, 0, 1, 1], [], []>} : vector<16x32xbf16>, vector<32x64xbf16>, vector<16x64xf32> -> vector<16x64xf32>
      %348 = arith.truncf %347 : vector<16x64xf32> to vector<16x64xbf16>
      %c320_135 = arith.constant 320 : index
      %c0_136 = arith.constant 0 : index
      %349 = vector.load %arg3[%c320_135, %c0_136] : memref<512x32xbf16, #tpu.memory_space<vmem>>, vector<64x32xbf16>
      %cst_137 = arith.constant dense<0.000000e+00> : vector<16x32xf32>
      %350 = tpu.matmul %348, %349, %cst_137 {dimension_numbers = #tpu.dot_dimension_numbers<[1], [0], [0], [1], [0, 0, 1, 1], [], []>} : vector<16x64xbf16>, vector<64x32xbf16>, vector<16x32xf32> -> vector<16x32xf32>
      %351 = arith.addf %327, %350 : vector<16x32xf32>
      %352 = arith.index_cast %187 : i32 to index
      %c384 = arith.constant 384 : index
      %353 = vector.load %arg10[%352, %c384] : memref<32x1536xbf16, #tpu.memory_space<vmem>>, vector<16x64xbf16>
      %354 = arith.index_cast %191 : i32 to index
      %c896 = arith.constant 896 : index
      %355 = vector.load %arg10[%354, %c896] : memref<32x1536xbf16, #tpu.memory_space<vmem>>, vector<32x64xbf16>
      %356 = arith.index_cast %191 : i32 to index
      %c1408 = arith.constant 1408 : index
      %357 = vector.load %arg10[%356, %c1408] : memref<32x1536xbf16, #tpu.memory_space<vmem>>, vector<32x64xbf16>
      "tpu.trace_start"() <{level = 10 : i32, message = "qd,kd->qk"}> : () -> ()
      %cst_138 = arith.constant dense<0.000000e+00> : vector<16x32xf32>
      %358 = tpu.matmul %353, %355, %cst_138 {dimension_numbers = #tpu.dot_dimension_numbers<[1], [1], [0], [0], [0, 0, 1, 0], [], []>} : vector<16x64xbf16>, vector<32x64xbf16>, vector<16x32xf32> -> vector<16x32xf32>
      "tpu.trace_stop"() : () -> ()
      %359 = arith.addf %358, %206 : vector<16x32xf32>
      %cst_139 = arith.constant dense<0xFF800000> : vector<16xf32>
      %360 = vector.multi_reduction <maximumf>, %359, %cst_139 [1] : vector<16x32xf32> to vector<16xf32>
      %361 = vector.shape_cast %360 : vector<16xf32> to vector<16x1xf32>
      %362 = vector.broadcast %361 : vector<16x1xf32> to vector<16x32xf32>
      %363 = arith.subf %359, %362 : vector<16x32xf32>
      %364 = math.exp %363 : vector<16x32xf32>
      %cst_140 = arith.constant dense<0.000000e+00> : vector<16xf32>
      %365 = vector.multi_reduction <add>, %364, %cst_140 [1] : vector<16x32xf32> to vector<16xf32>
      %366 = vector.shape_cast %365 : vector<16xf32> to vector<16x1xf32>
      %367 = tpu.reciprocal %366 {approx = true} : vector<16x1xf32> -> vector<16x1xf32>
      %368 = vector.broadcast %367 : vector<16x1xf32> to vector<16x32xf32>
      %369 = arith.mulf %364, %368 : vector<16x32xf32>
      %370 = arith.truncf %369 : vector<16x32xf32> to vector<16x32xbf16>
      %cst_141 = arith.constant dense<0.000000e+00> : vector<16x64xf32>
      %371 = tpu.matmul %370, %357, %cst_141 {dimension_numbers = #tpu.dot_dimension_numbers<[1], [0], [0], [1], [0, 0, 1, 1], [], []>} : vector<16x32xbf16>, vector<32x64xbf16>, vector<16x64xf32> -> vector<16x64xf32>
      %372 = arith.truncf %371 : vector<16x64xf32> to vector<16x64xbf16>
      %c384_142 = arith.constant 384 : index
      %c0_143 = arith.constant 0 : index
      %373 = vector.load %arg3[%c384_142, %c0_143] : memref<512x32xbf16, #tpu.memory_space<vmem>>, vector<64x32xbf16>
      %cst_144 = arith.constant dense<0.000000e+00> : vector<16x32xf32>
      %374 = tpu.matmul %372, %373, %cst_144 {dimension_numbers = #tpu.dot_dimension_numbers<[1], [0], [0], [1], [0, 0, 1, 1], [], []>} : vector<16x64xbf16>, vector<64x32xbf16>, vector<16x32xf32> -> vector<16x32xf32>
      %375 = arith.addf %351, %374 : vector<16x32xf32>
      %376 = arith.index_cast %187 : i32 to index
      %c448 = arith.constant 448 : index
      %377 = vector.load %arg10[%376, %c448] : memref<32x1536xbf16, #tpu.memory_space<vmem>>, vector<16x64xbf16>
      %378 = arith.index_cast %191 : i32 to index
      %c960 = arith.constant 960 : index
      %379 = vector.load %arg10[%378, %c960] : memref<32x1536xbf16, #tpu.memory_space<vmem>>, vector<32x64xbf16>
      %380 = arith.index_cast %191 : i32 to index
      %c1472 = arith.constant 1472 : index
      %381 = vector.load %arg10[%380, %c1472] : memref<32x1536xbf16, #tpu.memory_space<vmem>>, vector<32x64xbf16>
      "tpu.trace_start"() <{level = 10 : i32, message = "qd,kd->qk"}> : () -> ()
      %cst_145 = arith.constant dense<0.000000e+00> : vector<16x32xf32>
      %382 = tpu.matmul %377, %379, %cst_145 {dimension_numbers = #tpu.dot_dimension_numbers<[1], [1], [0], [0], [0, 0, 1, 0], [], []>} : vector<16x64xbf16>, vector<32x64xbf16>, vector<16x32xf32> -> vector<16x32xf32>
      "tpu.trace_stop"() : () -> ()
      %383 = arith.addf %382, %206 : vector<16x32xf32>
      %cst_146 = arith.constant dense<0xFF800000> : vector<16xf32>
      %384 = vector.multi_reduction <maximumf>, %383, %cst_146 [1] : vector<16x32xf32> to vector<16xf32>
      %385 = vector.shape_cast %384 : vector<16xf32> to vector<16x1xf32>
      %386 = vector.broadcast %385 : vector<16x1xf32> to vector<16x32xf32>
      %387 = arith.subf %383, %386 : vector<16x32xf32>
      %388 = math.exp %387 : vector<16x32xf32>
      %cst_147 = arith.constant dense<0.000000e+00> : vector<16xf32>
      %389 = vector.multi_reduction <add>, %388, %cst_147 [1] : vector<16x32xf32> to vector<16xf32>
      %390 = vector.shape_cast %389 : vector<16xf32> to vector<16x1xf32>
      %391 = tpu.reciprocal %390 {approx = true} : vector<16x1xf32> -> vector<16x1xf32>
      %392 = vector.broadcast %391 : vector<16x1xf32> to vector<16x32xf32>
      %393 = arith.mulf %388, %392 : vector<16x32xf32>
      %394 = arith.truncf %393 : vector<16x32xf32> to vector<16x32xbf16>
      %cst_148 = arith.constant dense<0.000000e+00> : vector<16x64xf32>
      %395 = tpu.matmul %394, %381, %cst_148 {dimension_numbers = #tpu.dot_dimension_numbers<[1], [0], [0], [1], [0, 0, 1, 1], [], []>} : vector<16x32xbf16>, vector<32x64xbf16>, vector<16x64xf32> -> vector<16x64xf32>
      %396 = arith.truncf %395 : vector<16x64xf32> to vector<16x64xbf16>
      %c448_149 = arith.constant 448 : index
      %c0_150 = arith.constant 0 : index
      %397 = vector.load %arg3[%c448_149, %c0_150] : memref<512x32xbf16, #tpu.memory_space<vmem>>, vector<64x32xbf16>
      %cst_151 = arith.constant dense<0.000000e+00> : vector<16x32xf32>
      %398 = tpu.matmul %396, %397, %cst_151 {dimension_numbers = #tpu.dot_dimension_numbers<[1], [0], [0], [1], [0, 0, 1, 1], [], []>} : vector<16x64xbf16>, vector<64x32xbf16>, vector<16x32xf32> -> vector<16x32xf32>
      %399 = arith.addf %375, %398 : vector<16x32xf32>
      %400 = arith.truncf %399 : vector<16x32xf32> to vector<16x32xbf16>
      %401 = arith.index_cast %187 : i32 to index
      %c0_152 = arith.constant 0 : index
      %402 = vector.load %arg11[%401, %c0_152] : memref<32x32xbf16, #tpu.memory_space<vmem>>, vector<16x32xbf16>
      tpu.vector_store %arg11[%401, %c0_152], %400 {strides = array<i32>} : memref<32x32xbf16, #tpu.memory_space<vmem>>, vector<16x32xbf16>,
    }
    %c2_i32_6 = arith.constant 2 : i32
    %c0_7 = arith.constant 0 : index
    %c0_8 = arith.constant 0 : index
    %8 = vector.load %arg11[%c0_7, %c0_8] : memref<32x32xbf16, #tpu.memory_space<vmem>>, vector<32x32xbf16>
    %9 = arith.extf %8 : vector<32x32xbf16> to vector<32x32xf32>
    %10 = arith.addf %1, %9 : vector<32x32xf32>
    %11 = arith.truncf %10 : vector<32x32xf32> to vector<32x32xbf16>
    %c0_9 = arith.constant 0 : index
    %c0_10 = arith.constant 0 : index
    %12 = vector.load %arg4[%c0_9, %c0_10] : memref<32x96xbf16, #tpu.memory_space<vmem>>, vector<32x96xbf16>
    %cst_11 = arith.constant dense<0.000000e+00> : vector<32x96xf32>
    %13 = tpu.matmul %11, %12, %cst_11 {dimension_numbers = #tpu.dot_dimension_numbers<[1], [0], [0], [1], [0, 0, 1, 1], [], []>} : vector<32x32xbf16>, vector<32x96xbf16>, vector<32x96xf32> -> vector<32x96xf32>
    %14 = arith.truncf %13 : vector<32x96xf32> to vector<32x96xbf16>
    %c0_12 = arith.constant 0 : index
    %c0_13 = arith.constant 0 : index
    %15 = vector.load %arg12[%c0_12, %c0_13] : memref<32x96xbf16, #tpu.memory_space<vmem>>, vector<32x96xbf16>
    tpu.vector_store %arg12[%c0_12, %c0_13], %14 {strides = array<i32>} : memref<32x96xbf16, #tpu.memory_space<vmem>>, vector<32x96xbf16>,
    %c0_14 = arith.constant 0 : index
    %c64 = arith.constant 64 : index
    %16 = vector.load %arg12[%c0_14, %c64] : memref<32x96xbf16, #tpu.memory_space<vmem>>, vector<32x32xbf16>
    %17 = arith.extf %16 : vector<32x32xbf16> to vector<32x32xf32>
    %cst_15 = arith.constant dense<0.000000e+00> : vector<32xf32>
    %18 = vector.multi_reduction <add>, %17, %cst_15 [0] : vector<32x32xf32> to vector<32xf32>
    %19 = vector.shape_cast %18 : vector<32xf32> to vector<1x32xf32>
    %c0_16 = arith.constant 0 : index
    %c0_17 = arith.constant 0 : index
    %20 = vector.load %arg6[%c0_16, %c0_17] : memref<1x32xf32, #tpu.memory_space<vmem>>, vector<1x32xf32>
    %21 = arith.mulf %19, %20 : vector<1x32xf32>
    %c0_18 = arith.constant 0 : index
    %c0_19 = arith.constant 0 : index
    %22 = vector.load %arg12[%c0_18, %c0_19] : memref<32x96xbf16, #tpu.memory_space<vmem>>, vector<32x4xbf16>
    %c0_20 = arith.constant 0 : index
    %c32 = arith.constant 32 : index
    %23 = vector.load %arg12[%c0_20, %c32] : memref<32x96xbf16, #tpu.memory_space<vmem>>, vector<32x4xbf16>
    "tpu.trace_start"() <{level = 10 : i32, message = "nd,md->nm"}> : () -> ()
    %cst_21 = arith.constant dense<0.000000e+00> : vector<32x32xf32>
    %24 = tpu.matmul %22, %23, %cst_21 {dimension_numbers = #tpu.dot_dimension_numbers<[1], [1], [0], [0], [0, 0, 1, 0], [], []>} : vector<32x4xbf16>, vector<32x4xbf16>, vector<32x32xf32> -> vector<32x32xf32>
    "tpu.trace_stop"() : () -> ()
    %cst_22 = arith.constant dense<0xFF800000> : vector<32xf32>
    %25 = vector.multi_reduction <maximumf>, %24, %cst_22 [1] : vector<32x32xf32> to vector<32xf32>
    %26 = vector.shape_cast %25 : vector<32xf32> to vector<32x1xf32>
    %27 = vector.broadcast %26 : vector<32x1xf32> to vector<32x32xf32>
    %28 = arith.subf %24, %27 : vector<32x32xf32>
    %29 = math.exp %28 : vector<32x32xf32>
    %cst_23 = arith.constant dense<0.000000e+00> : vector<32xf32>
    %30 = vector.multi_reduction <add>, %29, %cst_23 [1] : vector<32x32xf32> to vector<32xf32>
    %31 = vector.shape_cast %30 : vector<32xf32> to vector<32x1xf32>
    %32 = tpu.reciprocal %31 {approx = true} : vector<32x1xf32> -> vector<32x1xf32>
    %33 = vector.broadcast %32 : vector<32x1xf32> to vector<32x32xf32>
    %34 = arith.mulf %29, %33 : vector<32x32xf32>
    %35 = arith.truncf %34 : vector<32x32xf32> to vector<32x32xbf16>
    %cst_24 = arith.constant dense<0.000000e+00> : vector<32x32xf32>
    %36 = tpu.matmul %35, %16, %cst_24 {dimension_numbers = #tpu.dot_dimension_numbers<[1], [0], [0], [1], [0, 0, 1, 1], [], []>} : vector<32x32xbf16>, vector<32x32xbf16>, vector<32x32xf32> -> vector<32x32xf32>
    %c0_25 = arith.constant 0 : index
    %c0_26 = arith.constant 0 : index
    %37 = vector.load %arg5[%c0_25, %c0_26] : memref<8x32xf32, #tpu.memory_space<vmem>>, vector<1x32xf32>
    %38 = vector.broadcast %37 : vector<1x32xf32> to vector<32x32xf32>
    %39 = arith.mulf %36, %38 : vector<32x32xf32>
    %40 = vector.broadcast %21 : vector<1x32xf32> to vector<32x32xf32>
    %41 = arith.addf %40, %39 : vector<32x32xf32>
    %c0_27 = arith.constant 0 : index
    %c4 = arith.constant 4 : index
    %42 = vector.load %arg12[%c0_27, %c4] : memref<32x96xbf16, #tpu.memory_space<vmem>>, vector<32x4xbf16>
    %c0_28 = arith.constant 0 : index
    %c36 = arith.constant 36 : index
    %43 = vector.load %arg12[%c0_28, %c36] : memref<32x96xbf16, #tpu.memory_space<vmem>>, vector<32x4xbf16>
    "tpu.trace_start"() <{level = 10 : i32, message = "nd,md->nm"}> : () -> ()
    %cst_29 = arith.constant dense<0.000000e+00> : vector<32x32xf32>
    %44 = tpu.matmul %42, %43, %cst_29 {dimension_numbers = #tpu.dot_dimension_numbers<[1], [1], [0], [0], [0, 0, 1, 0], [], []>} : vector<32x4xbf16>, vector<32x4xbf16>, vector<32x32xf32> -> vector<32x32xf32>
    "tpu.trace_stop"() : () -> ()
    %cst_30 = arith.constant dense<0xFF800000> : vector<32xf32>
    %45 = vector.multi_reduction <maximumf>, %44, %cst_30 [1] : vector<32x32xf32> to vector<32xf32>
    %46 = vector.shape_cast %45 : vector<32xf32> to vector<32x1xf32>
    %47 = vector.broadcast %46 : vector<32x1xf32> to vector<32x32xf32>
    %48 = arith.subf %44, %47 : vector<32x32xf32>
    %49 = math.exp %48 : vector<32x32xf32>
    %cst_31 = arith.constant dense<0.000000e+00> : vector<32xf32>
    %50 = vector.multi_reduction <add>, %49, %cst_31 [1] : vector<32x32xf32> to vector<32xf32>
    %51 = vector.shape_cast %50 : vector<32xf32> to vector<32x1xf32>
    %52 = tpu.reciprocal %51 {approx = true} : vector<32x1xf32> -> vector<32x1xf32>
    %53 = vector.broadcast %52 : vector<32x1xf32> to vector<32x32xf32>
    %54 = arith.mulf %49, %53 : vector<32x32xf32>
    %55 = arith.truncf %54 : vector<32x32xf32> to vector<32x32xbf16>
    %cst_32 = arith.constant dense<0.000000e+00> : vector<32x32xf32>
    %56 = tpu.matmul %55, %16, %cst_32 {dimension_numbers = #tpu.dot_dimension_numbers<[1], [0], [0], [1], [0, 0, 1, 1], [], []>} : vector<32x32xbf16>, vector<32x32xbf16>, vector<32x32xf32> -> vector<32x32xf32>
    %c1 = arith.constant 1 : index
    %c0_33 = arith.constant 0 : index
    %57 = vector.load %arg5[%c1, %c0_33] : memref<8x32xf32, #tpu.memory_space<vmem>>, vector<1x32xf32>
    %58 = vector.broadcast %57 : vector<1x32xf32> to vector<32x32xf32>
    %59 = arith.mulf %56, %58 : vector<32x32xf32>
    %60 = arith.addf %41, %59 : vector<32x32xf32>
    %c0_34 = arith.constant 0 : index
    %c8 = arith.constant 8 : index
    %61 = vector.load %arg12[%c0_34, %c8] : memref<32x96xbf16, #tpu.memory_space<vmem>>, vector<32x4xbf16>
    %c0_35 = arith.constant 0 : index
    %c40 = arith.constant 40 : index
    %62 = vector.load %arg12[%c0_35, %c40] : memref<32x96xbf16, #tpu.memory_space<vmem>>, vector<32x4xbf16>
    "tpu.trace_start"() <{level = 10 : i32, message = "nd,md->nm"}> : () -> ()
    %cst_36 = arith.constant dense<0.000000e+00> : vector<32x32xf32>
    %63 = tpu.matmul %61, %62, %cst_36 {dimension_numbers = #tpu.dot_dimension_numbers<[1], [1], [0], [0], [0, 0, 1, 0], [], []>} : vector<32x4xbf16>, vector<32x4xbf16>, vector<32x32xf32> -> vector<32x32xf32>
    "tpu.trace_stop"() : () -> ()
    %cst_37 = arith.constant dense<0xFF800000> : vector<32xf32>
    %64 = vector.multi_reduction <maximumf>, %63, %cst_37 [1] : vector<32x32xf32> to vector<32xf32>
    %65 = vector.shape_cast %64 : vector<32xf32> to vector<32x1xf32>
    %66 = vector.broadcast %65 : vector<32x1xf32> to vector<32x32xf32>
    %67 = arith.subf %63, %66 : vector<32x32xf32>
    %68 = math.exp %67 : vector<32x32xf32>
    %cst_38 = arith.constant dense<0.000000e+00> : vector<32xf32>
    %69 = vector.multi_reduction <add>, %68, %cst_38 [1] : vector<32x32xf32> to vector<32xf32>
    %70 = vector.shape_cast %69 : vector<32xf32> to vector<32x1xf32>
    %71 = tpu.reciprocal %70 {approx = true} : vector<32x1xf32> -> vector<32x1xf32>
    %72 = vector.broadcast %71 : vector<32x1xf32> to vector<32x32xf32>
    %73 = arith.mulf %68, %72 : vector<32x32xf32>
    %74 = arith.truncf %73 : vector<32x32xf32> to vector<32x32xbf16>
    %cst_39 = arith.constant dense<0.000000e+00> : vector<32x32xf32>
    %75 = tpu.matmul %74, %16, %cst_39 {dimension_numbers = #tpu.dot_dimension_numbers<[1], [0], [0], [1], [0, 0, 1, 1], [], []>} : vector<32x32xbf16>, vector<32x32xbf16>, vector<32x32xf32> -> vector<32x32xf32>
    %c2 = arith.constant 2 : index
    %c0_40 = arith.constant 0 : index
    %76 = vector.load %arg5[%c2, %c0_40] : memref<8x32xf32, #tpu.memory_space<vmem>>, vector<1x32xf32>
    %77 = vector.broadcast %76 : vector<1x32xf32> to vector<32x32xf32>
    %78 = arith.mulf %75, %77 : vector<32x32xf32>
    %79 = arith.addf %60, %78 : vector<32x32xf32>
    %c0_41 = arith.constant 0 : index
    %c12 = arith.constant 12 : index
    %80 = vector.load %arg12[%c0_41, %c12] : memref<32x96xbf16, #tpu.memory_space<vmem>>, vector<32x4xbf16>
    %c0_42 = arith.constant 0 : index
    %c44 = arith.constant 44 : index
    %81 = vector.load %arg12[%c0_42, %c44] : memref<32x96xbf16, #tpu.memory_space<vmem>>, vector<32x4xbf16>
    "tpu.trace_start"() <{level = 10 : i32, message = "nd,md->nm"}> : () -> ()
    %cst_43 = arith.constant dense<0.000000e+00> : vector<32x32xf32>
    %82 = tpu.matmul %80, %81, %cst_43 {dimension_numbers = #tpu.dot_dimension_numbers<[1], [1], [0], [0], [0, 0, 1, 0], [], []>} : vector<32x4xbf16>, vector<32x4xbf16>, vector<32x32xf32> -> vector<32x32xf32>
    "tpu.trace_stop"() : () -> ()
    %cst_44 = arith.constant dense<0xFF800000> : vector<32xf32>
    %83 = vector.multi_reduction <maximumf>, %82, %cst_44 [1] : vector<32x32xf32> to vector<32xf32>
    %84 = vector.shape_cast %83 : vector<32xf32> to vector<32x1xf32>
    %85 = vector.broadcast %84 : vector<32x1xf32> to vector<32x32xf32>
    %86 = arith.subf %82, %85 : vector<32x32xf32>
    %87 = math.exp %86 : vector<32x32xf32>
    %cst_45 = arith.constant dense<0.000000e+00> : vector<32xf32>
    %88 = vector.multi_reduction <add>, %87, %cst_45 [1] : vector<32x32xf32> to vector<32xf32>
    %89 = vector.shape_cast %88 : vector<32xf32> to vector<32x1xf32>
    %90 = tpu.reciprocal %89 {approx = true} : vector<32x1xf32> -> vector<32x1xf32>
    %91 = vector.broadcast %90 : vector<32x1xf32> to vector<32x32xf32>
    %92 = arith.mulf %87, %91 : vector<32x32xf32>
    %93 = arith.truncf %92 : vector<32x32xf32> to vector<32x32xbf16>
    %cst_46 = arith.constant dense<0.000000e+00> : vector<32x32xf32>
    %94 = tpu.matmul %93, %16, %cst_46 {dimension_numbers = #tpu.dot_dimension_numbers<[1], [0], [0], [1], [0, 0, 1, 1], [], []>} : vector<32x32xbf16>, vector<32x32xbf16>, vector<32x32xf32> -> vector<32x32xf32>
    %c3 = arith.constant 3 : index
    %c0_47 = arith.constant 0 : index
    %95 = vector.load %arg5[%c3, %c0_47] : memref<8x32xf32, #tpu.memory_space<vmem>>, vector<1x32xf32>
    %96 = vector.broadcast %95 : vector<1x32xf32> to vector<32x32xf32>
    %97 = arith.mulf %94, %96 : vector<32x32xf32>
    %98 = arith.addf %79, %97 : vector<32x32xf32>
    %c0_48 = arith.constant 0 : index
    %c16 = arith.constant 16 : index
    %99 = vector.load %arg12[%c0_48, %c16] : memref<32x96xbf16, #tpu.memory_space<vmem>>, vector<32x4xbf16>
    %c0_49 = arith.constant 0 : index
    %c48 = arith.constant 48 : index
    %100 = vector.load %arg12[%c0_49, %c48] : memref<32x96xbf16, #tpu.memory_space<vmem>>, vector<32x4xbf16>
    "tpu.trace_start"() <{level = 10 : i32, message = "nd,md->nm"}> : () -> ()
    %cst_50 = arith.constant dense<0.000000e+00> : vector<32x32xf32>
    %101 = tpu.matmul %99, %100, %cst_50 {dimension_numbers = #tpu.dot_dimension_numbers<[1], [1], [0], [0], [0, 0, 1, 0], [], []>} : vector<32x4xbf16>, vector<32x4xbf16>, vector<32x32xf32> -> vector<32x32xf32>
    "tpu.trace_stop"() : () -> ()
    %cst_51 = arith.constant dense<0xFF800000> : vector<32xf32>
    %102 = vector.multi_reduction <maximumf>, %101, %cst_51 [1] : vector<32x32xf32> to vector<32xf32>
    %103 = vector.shape_cast %102 : vector<32xf32> to vector<32x1xf32>
    %104 = vector.broadcast %103 : vector<32x1xf32> to vector<32x32xf32>
    %105 = arith.subf %101, %104 : vector<32x32xf32>
    %106 = math.exp %105 : vector<32x32xf32>
    %cst_52 = arith.constant dense<0.000000e+00> : vector<32xf32>
    %107 = vector.multi_reduction <add>, %106, %cst_52 [1] : vector<32x32xf32> to vector<32xf32>
    %108 = vector.shape_cast %107 : vector<32xf32> to vector<32x1xf32>
    %109 = tpu.reciprocal %108 {approx = true} : vector<32x1xf32> -> vector<32x1xf32>
    %110 = vector.broadcast %109 : vector<32x1xf32> to vector<32x32xf32>
    %111 = arith.mulf %106, %110 : vector<32x32xf32>
    %112 = arith.truncf %111 : vector<32x32xf32> to vector<32x32xbf16>
    %cst_53 = arith.constant dense<0.000000e+00> : vector<32x32xf32>
    %113 = tpu.matmul %112, %16, %cst_53 {dimension_numbers = #tpu.dot_dimension_numbers<[1], [0], [0], [1], [0, 0, 1, 1], [], []>} : vector<32x32xbf16>, vector<32x32xbf16>, vector<32x32xf32> -> vector<32x32xf32>
    %c4_54 = arith.constant 4 : index
    %c0_55 = arith.constant 0 : index
    %114 = vector.load %arg5[%c4_54, %c0_55] : memref<8x32xf32, #tpu.memory_space<vmem>>, vector<1x32xf32>
    %115 = vector.broadcast %114 : vector<1x32xf32> to vector<32x32xf32>
    %116 = arith.mulf %113, %115 : vector<32x32xf32>
    %117 = arith.addf %98, %116 : vector<32x32xf32>
    %c0_56 = arith.constant 0 : index
    %c20 = arith.constant 20 : index
    %118 = vector.load %arg12[%c0_56, %c20] : memref<32x96xbf16, #tpu.memory_space<vmem>>, vector<32x4xbf16>
    %c0_57 = arith.constant 0 : index
    %c52 = arith.constant 52 : index
    %119 = vector.load %arg12[%c0_57, %c52] : memref<32x96xbf16, #tpu.memory_space<vmem>>, vector<32x4xbf16>
    "tpu.trace_start"() <{level = 10 : i32, message = "nd,md->nm"}> : () -> ()
    %cst_58 = arith.constant dense<0.000000e+00> : vector<32x32xf32>
    %120 = tpu.matmul %118, %119, %cst_58 {dimension_numbers = #tpu.dot_dimension_numbers<[1], [1], [0], [0], [0, 0, 1, 0], [], []>} : vector<32x4xbf16>, vector<32x4xbf16>, vector<32x32xf32> -> vector<32x32xf32>
    "tpu.trace_stop"() : () -> ()
    %cst_59 = arith.constant dense<0xFF800000> : vector<32xf32>
    %121 = vector.multi_reduction <maximumf>, %120, %cst_59 [1] : vector<32x32xf32> to vector<32xf32>
    %122 = vector.shape_cast %121 : vector<32xf32> to vector<32x1xf32>
    %123 = vector.broadcast %122 : vector<32x1xf32> to vector<32x32xf32>
    %124 = arith.subf %120, %123 : vector<32x32xf32>
    %125 = math.exp %124 : vector<32x32xf32>
    %cst_60 = arith.constant dense<0.000000e+00> : vector<32xf32>
    %126 = vector.multi_reduction <add>, %125, %cst_60 [1] : vector<32x32xf32> to vector<32xf32>
    %127 = vector.shape_cast %126 : vector<32xf32> to vector<32x1xf32>
    %128 = tpu.reciprocal %127 {approx = true} : vector<32x1xf32> -> vector<32x1xf32>
    %129 = vector.broadcast %128 : vector<32x1xf32> to vector<32x32xf32>
    %130 = arith.mulf %125, %129 : vector<32x32xf32>
    %131 = arith.truncf %130 : vector<32x32xf32> to vector<32x32xbf16>
    %cst_61 = arith.constant dense<0.000000e+00> : vector<32x32xf32>
    %132 = tpu.matmul %131, %16, %cst_61 {dimension_numbers = #tpu.dot_dimension_numbers<[1], [0], [0], [1], [0, 0, 1, 1], [], []>} : vector<32x32xbf16>, vector<32x32xbf16>, vector<32x32xf32> -> vector<32x32xf32>
    %c5 = arith.constant 5 : index
    %c0_62 = arith.constant 0 : index
    %133 = vector.load %arg5[%c5, %c0_62] : memref<8x32xf32, #tpu.memory_space<vmem>>, vector<1x32xf32>
    %134 = vector.broadcast %133 : vector<1x32xf32> to vector<32x32xf32>
    %135 = arith.mulf %132, %134 : vector<32x32xf32>
    %136 = arith.addf %117, %135 : vector<32x32xf32>
    %c0_63 = arith.constant 0 : index
    %c24 = arith.constant 24 : index
    %137 = vector.load %arg12[%c0_63, %c24] : memref<32x96xbf16, #tpu.memory_space<vmem>>, vector<32x4xbf16>
    %c0_64 = arith.constant 0 : index
    %c56 = arith.constant 56 : index
    %138 = vector.load %arg12[%c0_64, %c56] : memref<32x96xbf16, #tpu.memory_space<vmem>>, vector<32x4xbf16>
    "tpu.trace_start"() <{level = 10 : i32, message = "nd,md->nm"}> : () -> ()
    %cst_65 = arith.constant dense<0.000000e+00> : vector<32x32xf32>
    %139 = tpu.matmul %137, %138, %cst_65 {dimension_numbers = #tpu.dot_dimension_numbers<[1], [1], [0], [0], [0, 0, 1, 0], [], []>} : vector<32x4xbf16>, vector<32x4xbf16>, vector<32x32xf32> -> vector<32x32xf32>
    "tpu.trace_stop"() : () -> ()
    %cst_66 = arith.constant dense<0xFF800000> : vector<32xf32>
    %140 = vector.multi_reduction <maximumf>, %139, %cst_66 [1] : vector<32x32xf32> to vector<32xf32>
    %141 = vector.shape_cast %140 : vector<32xf32> to vector<32x1xf32>
    %142 = vector.broadcast %141 : vector<32x1xf32> to vector<32x32xf32>
    %143 = arith.subf %139, %142 : vector<32x32xf32>
    %144 = math.exp %143 : vector<32x32xf32>
    %cst_67 = arith.constant dense<0.000000e+00> : vector<32xf32>
    %145 = vector.multi_reduction <add>, %144, %cst_67 [1] : vector<32x32xf32> to vector<32xf32>
    %146 = vector.shape_cast %145 : vector<32xf32> to vector<32x1xf32>
    %147 = tpu.reciprocal %146 {approx = true} : vector<32x1xf32> -> vector<32x1xf32>
    %148 = vector.broadcast %147 : vector<32x1xf32> to vector<32x32xf32>
    %149 = arith.mulf %144, %148 : vector<32x32xf32>
    %150 = arith.truncf %149 : vector<32x32xf32> to vector<32x32xbf16>
    %cst_68 = arith.constant dense<0.000000e+00> : vector<32x32xf32>
    %151 = tpu.matmul %150, %16, %cst_68 {dimension_numbers = #tpu.dot_dimension_numbers<[1], [0], [0], [1], [0, 0, 1, 1], [], []>} : vector<32x32xbf16>, vector<32x32xbf16>, vector<32x32xf32> -> vector<32x32xf32>
    %c6 = arith.constant 6 : index
    %c0_69 = arith.constant 0 : index
    %152 = vector.load %arg5[%c6, %c0_69] : memref<8x32xf32, #tpu.memory_space<vmem>>, vector<1x32xf32>
    %153 = vector.broadcast %152 : vector<1x32xf32> to vector<32x32xf32>
    %154 = arith.mulf %151, %153 : vector<32x32xf32>
    %155 = arith.addf %136, %154 : vector<32x32xf32>
    %c0_70 = arith.constant 0 : index
    %c28 = arith.constant 28 : index
    %156 = vector.load %arg12[%c0_70, %c28] : memref<32x96xbf16, #tpu.memory_space<vmem>>, vector<32x4xbf16>
    %c0_71 = arith.constant 0 : index
    %c60 = arith.constant 60 : index
    %157 = vector.load %arg12[%c0_71, %c60] : memref<32x96xbf16, #tpu.memory_space<vmem>>, vector<32x4xbf16>
    "tpu.trace_start"() <{level = 10 : i32, message = "nd,md->nm"}> : () -> ()
    %cst_72 = arith.constant dense<0.000000e+00> : vector<32x32xf32>
    %158 = tpu.matmul %156, %157, %cst_72 {dimension_numbers = #tpu.dot_dimension_numbers<[1], [1], [0], [0], [0, 0, 1, 0], [], []>} : vector<32x4xbf16>, vector<32x4xbf16>, vector<32x32xf32> -> vector<32x32xf32>
    "tpu.trace_stop"() : () -> ()
    %cst_73 = arith.constant dense<0xFF800000> : vector<32xf32>
    %159 = vector.multi_reduction <maximumf>, %158, %cst_73 [1] : vector<32x32xf32> to vector<32xf32>
    %160 = vector.shape_cast %159 : vector<32xf32> to vector<32x1xf32>
    %161 = vector.broadcast %160 : vector<32x1xf32> to vector<32x32xf32>
    %162 = arith.subf %158, %161 : vector<32x32xf32>
    %163 = math.exp %162 : vector<32x32xf32>
    %cst_74 = arith.constant dense<0.000000e+00> : vector<32xf32>
    %164 = vector.multi_reduction <add>, %163, %cst_74 [1] : vector<32x32xf32> to vector<32xf32>
    %165 = vector.shape_cast %164 : vector<32xf32> to vector<32x1xf32>
    %166 = tpu.reciprocal %165 {approx = true} : vector<32x1xf32> -> vector<32x1xf32>
    %167 = vector.broadcast %166 : vector<32x1xf32> to vector<32x32xf32>
    %168 = arith.mulf %163, %167 : vector<32x32xf32>
    %169 = arith.truncf %168 : vector<32x32xf32> to vector<32x32xbf16>
    %cst_75 = arith.constant dense<0.000000e+00> : vector<32x32xf32>
    %170 = tpu.matmul %169, %16, %cst_75 {dimension_numbers = #tpu.dot_dimension_numbers<[1], [0], [0], [1], [0, 0, 1, 1], [], []>} : vector<32x32xbf16>, vector<32x32xbf16>, vector<32x32xf32> -> vector<32x32xf32>
    %c7 = arith.constant 7 : index
    %c0_76 = arith.constant 0 : index
    %171 = vector.load %arg5[%c7, %c0_76] : memref<8x32xf32, #tpu.memory_space<vmem>>, vector<1x32xf32>
    %172 = vector.broadcast %171 : vector<1x32xf32> to vector<32x32xf32>
    %173 = arith.mulf %170, %172 : vector<32x32xf32>
    %174 = arith.addf %155, %173 : vector<32x32xf32>
    %175 = arith.truncf %174 : vector<32x32xf32> to vector<32x32xbf16>
    %c0_77 = arith.constant 0 : index
    %c0_78 = arith.constant 0 : index
    %176 = vector.load %arg7[%c0_77, %c0_78] : memref<32x32xbf16, #tpu.memory_space<vmem>>, vector<32x32xbf16>
    %cst_79 = arith.constant dense<0.000000e+00> : vector<32x32xf32>
    %177 = tpu.matmul %175, %176, %cst_79 {dimension_numbers = #tpu.dot_dimension_numbers<[1], [0], [0], [1], [0, 0, 1, 1], [], []>} : vector<32x32xbf16>, vector<32x32xbf16>, vector<32x32xf32> -> vector<32x32xf32>
    %c0_80 = arith.constant 0 : index
    %c0_81 = arith.constant 0 : index
    %178 = vector.load %arg8[%c0_80, %c0_81] : memref<1x32xf32, #tpu.memory_space<vmem>>, vector<1x32xf32>
    %179 = vector.broadcast %178 : vector<1x32xf32> to vector<32x32xf32>
    %180 = arith.addf %177, %179 : vector<32x32xf32>
    %c0_82 = arith.constant 0 : index
    %c0_83 = arith.constant 0 : index
    %c0_84 = arith.constant 0 : index
    %181 = vector.load %arg9[%c0_82, %c0_83, %c0_84] : memref<1x32x32xf32, #tpu.memory_space<vmem>>, vector<1x32x32xf32>
    %182 = vector.shape_cast %181 : vector<1x32x32xf32> to vector<32x32xf32>
    %183 = vector.shape_cast %180 : vector<32x32xf32> to vector<1x32x32xf32>
    tpu.vector_store %arg9[%c0_82, %c0_83, %c0_84], %183 {strides = array<i32>} : memref<1x32x32xf32, #tpu.memory_space<vmem>>, vector<1x32x32xf32>,
    return
  }
  func.func @transform_0(%arg0: i32) -> (i32, i32, i32) {
    %c0_i32 = arith.constant 0 : i32
    %c0_i32_0 = arith.constant 0 : i32
    %c0_i32_1 = arith.constant 0 : i32
    return %arg0, %c0_i32, %c0_i32_0 : i32, i32, i32
  }
  func.func @transform_1(%arg0: i32) -> (i32, i32) {
    %c0_i32 = arith.constant 0 : i32
    %c0_i32_0 = arith.constant 0 : i32
    %c0_i32_1 = arith.constant 0 : i32
    return %c0_i32, %c0_i32_0 : i32, i32
  }
  func.func @transform_2(%arg0: i32) -> (i32, i32) {
    %c0_i32 = arith.constant 0 : i32
    %c0_i32_0 = arith.constant 0 : i32
    %c0_i32_1 = arith.constant 0 : i32
    return %c0_i32, %c0_i32_0 : i32, i32
  }
  func.func @transform_3(%arg0: i32) -> (i32, i32) {
    %c0_i32 = arith.constant 0 : i32
    %c0_i32_0 = arith.constant 0 : i32
    %c0_i32_1 = arith.constant 0 : i32
    return %c0_i32, %c0_i32_0 : i32, i32
  }
  func.func @transform_4(%arg0: i32) -> (i32, i32) {
    %c0_i32 = arith.constant 0 : i32
    %c0_i32_0 = arith.constant 0 : i32
    %c0_i32_1 = arith.constant 0 : i32
    return %c0_i32, %c0_i32_0 : i32, i32
  }
  func.func @transform_5(%arg0: i32) -> (i32, i32) {
    %c0_i32 = arith.constant 0 : i32
    %c0_i32_0 = arith.constant 0 : i32
    %c0_i32_1 = arith.constant 0 : i32
    return %c0_i32, %c0_i32_0 : i32, i32
  }
  func.func @transform_6(%arg0: i32) -> (i32, i32) {
    %c0_i32 = arith.constant 0 : i32
    %c0_i32_0 = arith.constant 0 : i32
    %c0_i32_1 = arith.constant 0 : i32
    return %c0_i32, %c0_i32_0 : i32, i32
  }
  func.func @transform_7(%arg0: i32) -> (i32, i32) {
    %c0_i32 = arith.constant 0 : i32
    %c0_i32_0 = arith.constant 0 : i32
    %c0_i32_1 = arith.constant 0 : i32
    return %c0_i32, %c0_i32_0 : i32, i32
  }
  func.func @transform_8(%arg0: i32) -> (i32, i32, i32) {
    %c0_i32 = arith.constant 0 : i32
    %c0_i32_0 = arith.constant 0 : i32
    %c0_i32_1 = arith.constant 0 : i32
    return %arg0, %c0_i32, %c0_i32_0 : i32, i32, i32
  }
}

</mosaic_0001>

<llo_original>
// kernel: sequence_attention_forward.1
$region0: #{sequence_attention_forward.1}
  #allocation0 [shape = 'u32[]', space=smem, size = 0x4, offset = 0x4, fixed_abs, tag = 'smem constant byte address 0x4 - core index']
  #allocation1 [shape = 'u32[144,128]{1,0:T(1,128)}', space=vmem, size = 0x12000, scoped, tag = 'internal scratch']
  #allocation2 [shape = 'bf16[32,1536]{1,0:T(16,128)(2,1)}', space=vmem, size = 0x18000, scoped, tag = 'scratch operand']
  #allocation3 [shape = 'bf16[32,32]{1,0:T(16,128)(2,1)}', space=vmem, size = 0x2000, scoped, tag = 'scratch operand']
  #allocation4 [shape = 'bf16[32,96]{1,0:T(16,128)(2,1)}', space=vmem, size = 0x2000, scoped, tag = 'scratch operand']
  %s0 = inlined_call_operand.vmem [shape: f32[2,32,32], index: 0, kind: input, shape index: {}]
  %s1 = inlined_call_operand.vmem [shape: bf16[32,1536], index: 1, kind: input, shape index: {}]
  %s2 = inlined_call_operand.vmem [shape: bf16[512,32], index: 2, kind: input, shape index: {}]
  %s3 = inlined_call_operand.vmem [shape: bf16[32,96], index: 3, kind: input, shape index: {}]
  %s4 = inlined_call_operand.vmem [shape: f32[8,32], index: 4, kind: input, shape index: {}]
  %s5 = inlined_call_operand.vmem [shape: f32[1,32], index: 5, kind: input, shape index: {}]
  %s6 = inlined_call_operand.vmem [shape: bf16[32,32], index: 6, kind: input, shape index: {}]
  %s7 = inlined_call_operand.vmem [shape: f32[1,32], index: 7, kind: input, shape index: {}]
  %s8 = inlined_call_operand.hbm [shape: f32[2,32,32], index: 8, kind: output, shape index: {}]
  %s9 = sld [smem:[#allocation0]]
  $region72: #{sequence_attention_forward.1} parent=0
    _
  %s11 = ssub.s32 1, %s9
  %s12 = scalar_select 0, %s11, %s9
  $region1: #{sequence_attention_forward.1} parent=0
    #allocation5 [shape = 'u8[32768]{0}', space=vmem, size = 0x8000, scoped, tag = 'output window, operand 0']
    #allocation6 [shape = 's32[2]{0}', space=sflag, size = 0x8, scoped, tag = 'scoped memory for sequence_attention_forward.1']
    %13 = vsyncpa [#allocation6], 0
    %s14 = scalar_lea.sflag [#allocation6], 1
    %15 = vsyncpa %s14, 0
    loop: start=0, step=1, limit=4
    $region2: #{sequence_attention_forward.1} parent=1 // loop_pre_header
      _
    $region3: #{sequence_attention_forward.1} parent=1 // loop_header
      %s17 = sphi 0, %s21
      %p18 = scmp.ge.s32.totalorder %s17, 4
      %s27 = sphi 0, %s29
      %s30 = sphi 0, %s27
      %s31 = sphi 0, %s30
      %s47 = sphi 0, %s31
      %s51 = sphi 0, %s51
      %s53 = sphi 0, %s51
      %s54 = sphi 0, %s53
      %s68 = sphi 0, %s54
      %s72 = sphi 0, %s72
      %s74 = sphi 0, %s72
      %s75 = sphi 0, %s74
      %s89 = sphi 0, %s75
      %s93 = sphi 0, %s93
      %s95 = sphi 0, %s93
      %s96 = sphi 0, %s95
      %s110 = sphi 0, %s96
      %s114 = sphi 0, %s114
      %s116 = sphi 0, %s114
      %s117 = sphi 0, %s116
      %s131 = sphi 0, %s117
      %s135 = sphi 0, %s135
      %s137 = sphi 0, %s135
      %s138 = sphi 0, %s137
      %s152 = sphi 0, %s138
      %s156 = sphi 0, %s156
      %s158 = sphi 0, %s156
      %s159 = sphi 0, %s158
      %s173 = sphi 0, %s159
      %s177 = sphi 0, %s177
      %s179 = sphi 0, %s177
      %s180 = sphi 0, %s179
      %s194 = sphi 0, %s180
      %s200 = sphi 0, %s202
      %s203 = sphi 0, %s200
      %s204 = sphi 0, %s203
      %s220 = sphi 0, %s204
    $region4: #{sequence_attention_forward.1} parent=1 // loop_header_branch
      %20 = sbr.rel (%p18) target = $region8
    $region5: #{sequence_attention_forward.1} parent=1 // loop_body
      %s22 = ssub.s32 %s17, 1
      %s23 = ssub.s32 %s17, 2
      %s24 = sadd.s32 %s17, 1
      %s25 = ssub.s32 %s17, %s24
      %p26 = scmp.eq.s32.totalorder %s25, 0
      %s28 = sadd.s32 %s27, 1
      %s29 = scalar_select %p26, %s27, %s28
      %p32 = pneg %p26
      %p33 = scmp.eq.s32.totalorder %s17, 1
      %p34 = por %p32, %p33
      %p35 = scmp.ne.s32.totalorder %s27, %s30
      %p36 = scmp.eq.s32.totalorder %s17, 0
      %p37 = por %p35, %p36
      %p38 = scmp.ne.s32.totalorder %s27, %s30
      %p39 = scmp.eq.s32.totalorder %s22, 1
      %p40 = por %p38, %p39
      %p41 = scmp.ne.s32.totalorder %s30, %s31
      %p42 = scmp.eq.s32.totalorder %s22, 0
      %p43 = por %p41, %p42
      %p44 = scmp.ne.s32.totalorder %s30, %s31
      %p45 = scmp.eq.s32.totalorder %s23, 1
      %p46 = por %p44, %p45
      %p48 = scmp.ne.s32.totalorder %s31, %s47
      %p49 = scmp.eq.s32.totalorder %s23, 0
      %p50 = por %p48, %p49
      %s52 = sadd.s32 %s51, 1
      %p55 = scmp.eq.s32.totalorder %s17, 1
      %p56 = scmp.ne.s32.totalorder %s51, %s53
      %p57 = scmp.eq.s32.totalorder %s17, 0
      %p58 = por %p56, %p57
      %p59 = scmp.ne.s32.totalorder %s51, %s53
      %p60 = scmp.eq.s32.totalorder %s22, 1
      %p61 = por %p59, %p60
      %p62 = scmp.ne.s32.totalorder %s53, %s54
      %p63 = scmp.eq.s32.totalorder %s22, 0
      %p64 = por %p62, %p63
      %p65 = scmp.ne.s32.totalorder %s53, %s54
      %p66 = scmp.eq.s32.totalorder %s23, 1
      %p67 = por %p65, %p66
      %p69 = scmp.ne.s32.totalorder %s54, %s68
      %p70 = scmp.eq.s32.totalorder %s23, 0
      %p71 = por %p69, %p70
      %s73 = sadd.s32 %s72, 1
      %p76 = scmp.eq.s32.totalorder %s17, 1
      %p77 = scmp.ne.s32.totalorder %s72, %s74
      %p78 = scmp.eq.s32.totalorder %s17, 0
      %p79 = por %p77, %p78
      %p80 = scmp.ne.s32.totalorder %s72, %s74
      %p81 = scmp.eq.s32.totalorder %s22, 1
      %p82 = por %p80, %p81
      %p83 = scmp.ne.s32.totalorder %s74, %s75
      %p84 = scmp.eq.s32.totalorder %s22, 0
      %p85 = por %p83, %p84
      %p86 = scmp.ne.s32.totalorder %s74, %s75
      %p87 = scmp.eq.s32.totalorder %s23, 1
      %p88 = por %p86, %p87
      %p90 = scmp.ne.s32.totalorder %s75, %s89
      %p91 = scmp.eq.s32.totalorder %s23, 0
      %p92 = por %p90, %p91
      %s94 = sadd.s32 %s93, 1
      %p97 = scmp.eq.s32.totalorder %s17, 1
      %p98 = scmp.ne.s32.totalorder %s93, %s95
      %p99 = scmp.eq.s32.totalorder %s17, 0
      %p100 = por %p98, %p99
      %p101 = scmp.ne.s32.totalorder %s93, %s95
      %p102 = scmp.eq.s32.totalorder %s22, 1
      %p103 = por %p101, %p102
      %p104 = scmp.ne.s32.totalorder %s95, %s96
      %p105 = scmp.eq.s32.totalorder %s22, 0
      %p106 = por %p104, %p105
      %p107 = scmp.ne.s32.totalorder %s95, %s96
      %p108 = scmp.eq.s32.totalorder %s23, 1
      %p109 = por %p107, %p108
      %p111 = scmp.ne.s32.totalorder %s96, %s110
      %p112 = scmp.eq.s32.totalorder %s23, 0
      %p113 = por %p111, %p112
      %s115 = sadd.s32 %s114, 1
      %p118 = scmp.eq.s32.totalorder %s17, 1
      %p119 = scmp.ne.s32.totalorder %s114, %s116
      %p120 = scmp.eq.s32.totalorder %s17, 0
      %p121 = por %p119, %p120
      %p122 = scmp.ne.s32.totalorder %s114, %s116
      %p123 = scmp.eq.s32.totalorder %s22, 1
      %p124 = por %p122, %p123
      %p125 = scmp.ne.s32.totalorder %s116, %s117
      %p126 = scmp.eq.s32.totalorder %s22, 0
      %p127 = por %p125, %p126
      %p128 = scmp.ne.s32.totalorder %s116, %s117
      %p129 = scmp.eq.s32.totalorder %s23, 1
      %p130 = por %p128, %p129
      %p132 = scmp.ne.s32.totalorder %s117, %s131
      %p133 = scmp.eq.s32.totalorder %s23, 0
      %p134 = por %p132, %p133
      %s136 = sadd.s32 %s135, 1
      %p139 = scmp.eq.s32.totalorder %s17, 1
      %p140 = scmp.ne.s32.totalorder %s135, %s137
      %p141 = scmp.eq.s32.totalorder %s17, 0
      %p142 = por %p140, %p141
      %p143 = scmp.ne.s32.totalorder %s135, %s137
      %p144 = scmp.eq.s32.totalorder %s22, 1
      %p145 = por %p143, %p144
      %p146 = scmp.ne.s32.totalorder %s137, %s138
      %p147 = scmp.eq.s32.totalorder %s22, 0
      %p148 = por %p146, %p147
      %p149 = scmp.ne.s32.totalorder %s137, %s138
      %p150 = scmp.eq.s32.totalorder %s23, 1
      %p151 = por %p149, %p150
      %p153 = scmp.ne.s32.totalorder %s138, %s152
      %p154 = scmp.eq.s32.totalorder %s23, 0
      %p155 = por %p153, %p154
      %s157 = sadd.s32 %s156, 1
      %p160 = scmp.eq.s32.totalorder %s17, 1
      %p161 = scmp.ne.s32.totalorder %s156, %s158
      %p162 = scmp.eq.s32.totalorder %s17, 0
      %p163 = por %p161, %p162
      %p164 = scmp.ne.s32.totalorder %s156, %s158
      %p165 = scmp.eq.s32.totalorder %s22, 1
      %p166 = por %p164, %p165
      %p167 = scmp.ne.s32.totalorder %s158, %s159
      %p168 = scmp.eq.s32.totalorder %s22, 0
      %p169 = por %p167, %p168
      %p170 = scmp.ne.s32.totalorder %s158, %s159
      %p171 = scmp.eq.s32.totalorder %s23, 1
      %p172 = por %p170, %p171
      %p174 = scmp.ne.s32.totalorder %s159, %s173
      %p175 = scmp.eq.s32.totalorder %s23, 0
      %p176 = por %p174, %p175
      %s178 = sadd.s32 %s177, 1
      %p181 = scmp.eq.s32.totalorder %s17, 1
      %p182 = scmp.ne.s32.totalorder %s177, %s179
      %p183 = scmp.eq.s32.totalorder %s17, 0
      %p184 = por %p182, %p183
      %p185 = scmp.ne.s32.totalorder %s177, %s179
      %p186 = scmp.eq.s32.totalorder %s22, 1
      %p187 = por %p185, %p186
      %p188 = scmp.ne.s32.totalorder %s179, %s180
      %p189 = scmp.eq.s32.totalorder %s22, 0
      %p190 = por %p188, %p189
      %p191 = scmp.ne.s32.totalorder %s179, %s180
      %p192 = scmp.eq.s32.totalorder %s23, 1
      %p193 = por %p191, %p192
      %p195 = scmp.ne.s32.totalorder %s180, %s194
      %p196 = scmp.eq.s32.totalorder %s23, 0
      %p197 = por %p195, %p196
      %s198 = ssub.s32 %s17, %s24
      %p199 = scmp.eq.s32.totalorder %s198, 0
      %s201 = sadd.s32 %s200, 1
      %s202 = scalar_select %p199, %s200, %s201
      %p205 = pneg %p199
      %p206 = scmp.eq.s32.totalorder %s17, 1
      %p207 = por %p205, %p206
      %p208 = scmp.ne.s32.totalorder %s200, %s203
      %p209 = scmp.eq.s32.totalorder %s17, 0
      %p210 = por %p208, %p209
      %p211 = scmp.ne.s32.totalorder %s200, %s203
      %p212 = scmp.eq.s32.totalorder %s22, 1
      %p213 = por %p211, %p212
      %p214 = scmp.ne.s32.totalorder %s203, %s204
      %p215 = scmp.eq.s32.totalorder %s22, 0
      %p216 = por %p214, %p215
      %p217 = scmp.ne.s32.totalorder %s203, %s204
      %p218 = scmp.eq.s32.totalorder %s23, 1
      %p219 = por %p217, %p218
      %p221 = scmp.ne.s32.totalorder %s204, %s220
      %p222 = scmp.eq.s32.totalorder %s23, 0
      %p223 = por %p221, %p222
      %p224 = scmp.le.s32.totalorder 1, %s17
      %p225 = scmp.lt.s32.totalorder %s17, 3
      %p226 = pnand %p224, %p225
      %p227 = pneg %p226
      // Predicated region
      $region9: #{sequence_attention_forward.1} parent=5 // pred_check
        _
      $region10: #{sequence_attention_forward.1} parent=5 // pred_check_branch
        %229 = sbr.rel (%p226) target = $region12
      $region11: #{sequence_attention_forward.1} parent=5 // pred_region
        %s230 = ssub.s32 %s17, 1
        // Predicated region
        $region13: #{sequence_attention_forward.1} parent=11 // pred_check
          %p231 = pneg %p64
        $region14: #{sequence_attention_forward.1} parent=11 // pred_check_branch
          %233 = sbr.rel (%p231) target = $region16
        $region15: #{sequence_attention_forward.1} parent=11 // pred_region
          _
        $region16: #{sequence_attention_forward.1} parent=11 // pred_fallthru
          _
        // Predicated region
        $region17: #{sequence_attention_forward.1} parent=11 // pred_check
          %p234 = pneg %p85
        $region18: #{sequence_attention_forward.1} parent=11 // pred_check_branch
          %236 = sbr.rel (%p234) target = $region20
        $region19: #{sequence_attention_forward.1} parent=11 // pred_region
          _
        $region20: #{sequence_attention_forward.1} parent=11 // pred_fallthru
          _
        // Predicated region
        $region21: #{sequence_attention_forward.1} parent=11 // pred_check
          %p237 = pneg %p106
        $region22: #{sequence_attention_forward.1} parent=11 // pred_check_branch
          %239 = sbr.rel (%p237) target = $region24
        $region23: #{sequence_attention_forward.1} parent=11 // pred_region
          _
        $region24: #{sequence_attention_forward.1} parent=11 // pred_fallthru
          _
        // Predicated region
        $region25: #{sequence_attention_forward.1} parent=11 // pred_check
          %p240 = pneg %p127
        $region26: #{sequence_attention_forward.1} parent=11 // pred_check_branch
          %242 = sbr.rel (%p240) target = $region28
        $region27: #{sequence_attention_forward.1} parent=11 // pred_region
          _
        $region28: #{sequence_attention_forward.1} parent=11 // pred_fallthru
          _
        // Predicated region
        $region29: #{sequence_attention_forward.1} parent=11 // pred_check
          %p243 = pneg %p148
        $region30: #{sequence_attention_forward.1} parent=11 // pred_check_branch
          %245 = sbr.rel (%p243) target = $region32
        $region31: #{sequence_attention_forward.1} parent=11 // pred_region
          _
        $region32: #{sequence_attention_forward.1} parent=11 // pred_fallthru
          _
        // Predicated region
        $region33: #{sequence_attention_forward.1} parent=11 // pred_check
          %p246 = pneg %p169
        $region34: #{sequence_attention_forward.1} parent=11 // pred_check_branch
          %248 = sbr.rel (%p246) target = $region36
        $region35: #{sequence_attention_forward.1} parent=11 // pred_region
          _
        $region36: #{sequence_attention_forward.1} parent=11 // pred_fallthru
          _
        // Predicated region
        $region37: #{sequence_attention_forward.1} parent=11 // pred_check
          %p249 = pneg %p190
        $region38: #{sequence_attention_forward.1} parent=11 // pred_check_branch
          %251 = sbr.rel (%p249) target = $region40
        $region39: #{sequence_attention_forward.1} parent=11 // pred_region
          _
        $region40: #{sequence_attention_forward.1} parent=11 // pred_fallthru
          _
      $region12: #{sequence_attention_forward.1} parent=5 // pred_fallthru
        _
      %p252 = scmp.lt.s32.totalorder %s17, 2
      // Predicated region
      $region41: #{sequence_attention_forward.1} parent=5 // pred_check
        %p253 = pneg %p252
      $region42: #{sequence_attention_forward.1} parent=5 // pred_check_branch
        %255 = sbr.rel (%p253) target = $region44
      $region43: #{sequence_attention_forward.1} parent=5 // pred_region
        // Predicated region
        $region45: #{sequence_attention_forward.1} parent=43 // pred_check
          %p256 = pneg %p37
        $region46: #{sequence_attention_forward.1} parent=43 // pred_check_branch
          %258 = sbr.rel (%p256) target = $region48
        $region47: #{sequence_attention_forward.1} parent=43 // pred_region
          %p259 = scmp.lt.s32.totalorder %s17, 1
          %s260 = scalar_select %p259, %s17, 1
          %s261 = smul.addr %s260, 4
          %s262 = smul.addr %s261, 8
          %s263 = scalar_lea.vmem %s0, %s262
        $region48: #{sequence_attention_forward.1} parent=43 // pred_fallthru
          _
      $region44: #{sequence_attention_forward.1} parent=5 // pred_fallthru
        _
      %p264 = scmp.le.s32.totalorder 1, %s17
      %p265 = scmp.lt.s32.totalorder %s17, 3
      %p266 = pnand %p264, %p265
      %p267 = pneg %p266
      // Predicated region
      $region49: #{sequence_attention_forward.1} parent=5 // pred_check
        _
      $region50: #{sequence_attention_forward.1} parent=5 // pred_check_branch
        %269 = sbr.rel (%p266) target = $region52
      $region51: #{sequence_attention_forward.1} parent=5 // pred_region
        %s270 = ssub.s32 %s17, 1
        %p271 = scmp.lt.s32.totalorder %s22, 1
        %s272 = scalar_select %p271, %s22, 1
        %s273 = smul.addr %s272, 4
        %s274 = smul.addr %s273, 8
        %s275 = scalar_lea.vmem %s0, %s274
        %p276 = pneg %p43
        %p277 = pneg %p40
        %p278 = pneg %p64
        %p279 = pneg %p61
        %p280 = pneg %p85
        %p281 = pneg %p82
        %p282 = pneg %p106
        %p283 = pneg %p103
        %p284 = pneg %p127
        %p285 = pneg %p124
        %p286 = pneg %p148
        %p287 = pneg %p145
        %p288 = pneg %p169
        %p289 = pneg %p166
        %p290 = pneg %p190
        %p291 = pneg %p187
        %p292 = pneg %p216
        %p293 = pneg %p213
        %s294 = sand.u32 %s203, 1
        %s295 = scalar_lea.sflag [#allocation6], %s294
        %s296 = sand.u32 %s203, 1
        %s297 = smul.addr %s296, 32
        %s298 = scalar_lea.vmem [#allocation5], %s297
        %p299 = scmp.lt.s32.totalorder %s22, 1
        %s300 = scalar_select %p299, %s22, 1
        %s301 = smul.addr %s300, 4
        %s302 = smul.addr %s301, 8
        %s303 = scalar_lea.vmem %s0, %s302
        %v305 = vld [vmem:[%s303] sm:$0xff]
        %v306 = vld [vmem:[%s303 + $0x8] sm:$0xff]
        %v307 = vld [vmem:[%s303 + $0x10] sm:$0xff]
        %v308 = vld [vmem:[%s303 + $0x18] sm:$0xff]
        %v309 = vpack.c.bf16 %v306, %v305
        %v310 = vpack.c.bf16 %v308, %v307
        %v311 = vld [vmem:[%s1] sm:$0xff]
        %v312 = vld [vmem:[%s1 + $0x8] sm:$0xff]
        %v313 = vld [vmem:[%s1 + $0x10] sm:$0xff]
        %v314 = vld [vmem:[%s1 + $0x18] sm:$0xff]
        %v315 = vld [vmem:[%s1 + $0x20] sm:$0xff]
        %v316 = vld [vmem:[%s1 + $0x28] sm:$0xff]
        %v317 = vld [vmem:[%s1 + $0x30] sm:$0xff]
        %v318 = vld [vmem:[%s1 + $0x38] sm:$0xff]
        %v319 = vld [vmem:[%s1 + $0x40] sm:$0xff]
        %v320 = vld [vmem:[%s1 + $0x48] sm:$0xff]
        %v321 = vld [vmem:[%s1 + $0x50] sm:$0xff]
        %v322 = vld [vmem:[%s1 + $0x58] sm:$0xff]
        %v323 = vld [vmem:[%s1 + $0x60] sm:$0xff]
        %v324 = vld [vmem:[%s1 + $0x68] sm:$0xff]
        %v325 = vld [vmem:[%s1 + $0x70] sm:$0xff]
        %v326 = vld [vmem:[%s1 + $0x78] sm:$0xff]
        %v327 = vld [vmem:[%s1 + $0x80] sm:$0xff]
        %v328 = vld [vmem:[%s1 + $0x88] sm:$0xff]
        %v329 = vld [vmem:[%s1 + $0x90] sm:$0xff]
        %v330 = vld [vmem:[%s1 + $0x98] sm:$0xff]
        %v331 = vld [vmem:[%s1 + $0xa0] sm:$0xff]
        %v332 = vld [vmem:[%s1 + $0xa8] sm:$0xff]
        %v333 = vld [vmem:[%s1 + $0xb0] sm:$0xff]
        %v334 = vld [vmem:[%s1 + $0xb8] sm:$0xff]
        %v359 = vunpack.c.l.b16 %v311
        %v360 = vunpack.c.h.b16 %v311
        %v361 = vunpack.c.l.b16 %v312
        %v362 = vunpack.c.h.b16 %v312
        %v363 = vunpack.c.l.b16 %v313
        %v364 = vunpack.c.h.b16 %v313
        %v365 = vunpack.c.l.b16 %v314
        %v366 = vunpack.c.h.b16 %v314
        %v367 = vunpack.c.l.b16 %v315
        %v368 = vunpack.c.h.b16 %v315
        %v369 = vunpack.c.l.b16 %v316
        %v370 = vunpack.c.h.b16 %v316
        %v371 = vunpack.c.l.b16 %v317
        %v372 = vunpack.c.h.b16 %v317
        %v373 = vunpack.c.l.b16 %v318
        %v374 = vunpack.c.h.b16 %v318
        %v375 = vunpack.c.l.b16 %v319
        %v376 = vunpack.c.h.b16 %v319
        %v377 = vunpack.c.l.b16 %v320
        %v378 = vunpack.c.h.b16 %v320
        %v379 = vunpack.c.l.b16 %v321
        %v380 = vunpack.c.h.b16 %v321
        %v381 = vunpack.c.l.b16 %v322
        %v382 = vunpack.c.h.b16 %v322
        %v383 = vunpack.c.l.b16 %v323
        %v384 = vunpack.c.h.b16 %v323
        %v385 = vunpack.c.l.b16 %v324
        %v386 = vunpack.c.h.b16 %v324
        %v387 = vunpack.c.l.b16 %v325
        %v388 = vunpack.c.h.b16 %v325
        %v389 = vunpack.c.l.b16 %v326
        %v390 = vunpack.c.h.b16 %v326
        %v391 = vunpack.c.l.b16 %v327
        %v392 = vunpack.c.h.b16 %v327
        %v393 = vunpack.c.l.b16 %v328
        %v394 = vunpack.c.h.b16 %v328
        %v395 = vunpack.c.l.b16 %v329
        %v396 = vunpack.c.h.b16 %v329
        %v397 = vunpack.c.l.b16 %v330
        %v398 = vunpack.c.h.b16 %v330
        %v399 = vunpack.c.l.b16 %v331
        %v400 = vunpack.c.h.b16 %v331
        %v401 = vunpack.c.l.b16 %v332
        %v402 = vunpack.c.h.b16 %v332
        %v403 = vunpack.c.l.b16 %v333
        %v404 = vunpack.c.h.b16 %v333
        %v405 = vunpack.c.l.b16 %v334
        %v406 = vunpack.c.h.b16 %v334
        %v407 = vpack.c.b16 %v371, %v359
        %v408 = vpack.c.b16 %v372, %v360
        %v409 = vpack.c.b16 %v373, %v361
        %v410 = vpack.c.b16 %v374, %v362
        %v411 = vpack.c.b16 %v375, %v363
        %v412 = vpack.c.b16 %v376, %v364
        %v413 = vpack.c.b16 %v377, %v365
        %v414 = vpack.c.b16 %v378, %v366
        %v415 = vpack.c.b16 %v379, %v367
        %v416 = vpack.c.b16 %v380, %v368
        %v417 = vpack.c.b16 %v381, %v369
        %v418 = vpack.c.b16 %v382, %v370
        %v419 = vpack.c.b16 %v395, %v383
        %v420 = vpack.c.b16 %v396, %v384
        %v421 = vpack.c.b16 %v397, %v385
        %v422 = vpack.c.b16 %v398, %v386
        %v423 = vpack.c.b16 %v399, %v387
        %v424 = vpack.c.b16 %v400, %v388
        %v425 = vpack.c.b16 %v401, %v389
        %v426 = vpack.c.b16 %v402, %v390
        %v427 = vpack.c.b16 %v403, %v391
        %v428 = vpack.c.b16 %v404, %v392
        %v429 = vpack.c.b16 %v405, %v393
        %v430 = vpack.c.b16 %v406, %v394
        %vm455 = vcmask 261120
        %v457 = vsel %vm455, %v309, 0
        %v460 = vsel %vm455, %v310, 0
        %462 = vmatprep.subr.bf16.mxu0 %v408
        %463 = vmatpush1.bf16.msra.mxu0 %v407
        %464 = vmatprep.subr.bf16.mxu0 %v420
        %465 = vmatpush1.bf16.msra.mxu0 %v419
        %466 = vmatprep.subr.bf16.mxu0 0
        %467 = vmatpush1.bf16.msra.mxu0 0
        %468 = vmatprep.subr.bf16.mxu0 0
        %469 = vmatpush1.bf16.msra.mxu0 0
        %470 = vmatprep.subr.bf16.mxu0 0
        %471 = vmatpush1.bf16.msra.mxu0 0
        %472 = vmatprep.subr.bf16.mxu0 0
        %473 = vmatpush1.bf16.msra.mxu0 0
        %474 = vmatprep.subr.bf16.mxu0 0
        %475 = vmatpush1.bf16.msra.mxu0 0
        %476 = vmatprep.subr.bf16.mxu0 0
        %477 = vmatpush1.bf16.msra.mxu0 0
        %478 = vmatprep.subr.bf16.mxu0 0
        %479 = vmatpush1.bf16.msra.mxu0 0
        %480 = vmatprep.subr.bf16.mxu0 0
        %481 = vmatpush1.bf16.msra.mxu0 0
        %482 = vmatprep.subr.bf16.mxu0 0
        %483 = vmatpush1.bf16.msra.mxu0 0
        %484 = vmatprep.subr.bf16.mxu0 0
        %485 = vmatpush1.bf16.msra.mxu0 0
        %486 = vmatprep.subr.bf16.mxu0 0
        %487 = vmatpush1.bf16.msra.mxu0 0
        %488 = vmatprep.subr.bf16.mxu0 0
        %489 = vmatpush1.bf16.msra.mxu0 0
        %490 = vmatprep.subr.bf16.mxu0 0
        %491 = vmatpush1.bf16.msra.mxu0 0
        %492 = vmatprep.subr.bf16.mxu0 0
        %493 = vmatpush1.bf16.msra.mxu0 0
        %494 = vmatprep.mubr.bf16.mxu0 0
        %495 = vmatmul.mubr.bf16.gmra.mrb[0].mxu0 %v457
        %v496 = vpop.f32.mrb[0].mxu0
        %v497 = vadd.f32 0.0, %v496
        %v498 = vpop.f32.mrb[0].mxu0
        %v499 = vadd.f32 0.0, %v498
        %v500 = vpop.f32.mrb[0].mxu0
        %v501 = vadd.f32 0.0, %v500
        %v502 = vpop.f32.mrb[0].mxu0
        %v503 = vadd.f32 0.0, %v502
        %504 = vmatprep.mubr.bf16.mxu0 0
        %505 = vmatmul.mubr.bf16.gmra.mrb[0].mxu0 %v460
        %v506 = vpop.f32.mrb[0].mxu0
        %v507 = vadd.f32 0.0, %v506
        %v508 = vpop.f32.mrb[0].mxu0
        %v509 = vadd.f32 0.0, %v508
        %v510 = vpop.f32.mrb[0].mxu0
        %v511 = vadd.f32 0.0, %v510
        %v512 = vpop.f32.mrb[0].mxu0
        %v513 = vadd.f32 0.0, %v512
        %514 = vdwg.mxu0
        %515 = vmatprep.subr.bf16.mxu0 %v410
        %516 = vmatpush1.bf16.msra.mxu0 %v409
        %517 = vmatprep.subr.bf16.mxu0 %v422
        %518 = vmatpush1.bf16.msra.mxu0 %v421
        %519 = vmatprep.subr.bf16.mxu0 0
        %520 = vmatpush1.bf16.msra.mxu0 0
        %521 = vmatprep.subr.bf16.mxu0 0
        %522 = vmatpush1.bf16.msra.mxu0 0
        %523 = vmatprep.subr.bf16.mxu0 0
        %524 = vmatpush1.bf16.msra.mxu0 0
        %525 = vmatprep.subr.bf16.mxu0 0
        %526 = vmatpush1.bf16.msra.mxu0 0
        %527 = vmatprep.subr.bf16.mxu0 0
        %528 = vmatpush1.bf16.msra.mxu0 0
        %529 = vmatprep.subr.bf16.mxu0 0
        %530 = vmatpush1.bf16.msra.mxu0 0
        %531 = vmatprep.subr.bf16.mxu0 0
        %532 = vmatpush1.bf16.msra.mxu0 0
        %533 = vmatprep.subr.bf16.mxu0 0
        %534 = vmatpush1.bf16.msra.mxu0 0
        %535 = vmatprep.subr.bf16.mxu0 0
        %536 = vmatpush1.bf16.msra.mxu0 0
        %537 = vmatprep.subr.bf16.mxu0 0
        %538 = vmatpush1.bf16.msra.mxu0 0
        %539 = vmatprep.subr.bf16.mxu0 0
        %540 = vmatpush1.bf16.msra.mxu0 0
        %541 = vmatprep.subr.bf16.mxu0 0
        %542 = vmatpush1.bf16.msra.mxu0 0
        %543 = vmatprep.subr.bf16.mxu0 0
        %544 = vmatpush1.bf16.msra.mxu0 0
        %545 = vmatprep.subr.bf16.mxu0 0
        %546 = vmatpush1.bf16.msra.mxu0 0
        %547 = vmatprep.mubr.bf16.mxu0 0
        %548 = vmatmul.mubr.bf16.gmra.mrb[0].mxu0 %v457
        %v549 = vpop.f32.mrb[0].mxu0
        %v550 = vadd.f32 0.0, %v549
        %v551 = vpop.f32.mrb[0].mxu0
        %v552 = vadd.f32 0.0, %v551
        %v553 = vpop.f32.mrb[0].mxu0
        %v554 = vadd.f32 0.0, %v553
        %v555 = vpop.f32.mrb[0].mxu0
        %v556 = vadd.f32 0.0, %v555
        %557 = vmatprep.mubr.bf16.mxu0 0
        %558 = vmatmul.mubr.bf16.gmra.mrb[0].mxu0 %v460
        %v559 = vpop.f32.mrb[0].mxu0
        %v560 = vadd.f32 0.0, %v559
        %v561 = vpop.f32.mrb[0].mxu0
        %v562 = vadd.f32 0.0, %v561
        %v563 = vpop.f32.mrb[0].mxu0
        %v564 = vadd.f32 0.0, %v563
        %v565 = vpop.f32.mrb[0].mxu0
        %v566 = vadd.f32 0.0, %v565
        %567 = vdwg.mxu0
        %568 = vmatprep.subr.bf16.mxu0 %v412
        %569 = vmatpush1.bf16.msra.mxu0 %v411
        %570 = vmatprep.subr.bf16.mxu0 %v424
        %571 = vmatpush1.bf16.msra.mxu0 %v423
        %572 = vmatprep.subr.bf16.mxu0 0
        %573 = vmatpush1.bf16.msra.mxu0 0
        %574 = vmatprep.subr.bf16.mxu0 0
        %575 = vmatpush1.bf16.msra.mxu0 0
        %576 = vmatprep.subr.bf16.mxu0 0
        %577 = vmatpush1.bf16.msra.mxu0 0
        %578 = vmatprep.subr.bf16.mxu0 0
        %579 = vmatpush1.bf16.msra.mxu0 0
        %580 = vmatprep.subr.bf16.mxu0 0
        %581 = vmatpush1.bf16.msra.mxu0 0
        %582 = vmatprep.subr.bf16.mxu0 0
        %583 = vmatpush1.bf16.msra.mxu0 0
        %584 = vmatprep.subr.bf16.mxu0 0
        %585 = vmatpush1.bf16.msra.mxu0 0
        %586 = vmatprep.subr.bf16.mxu0 0
        %587 = vmatpush1.bf16.msra.mxu0 0
        %588 = vmatprep.subr.bf16.mxu0 0
        %589 = vmatpush1.bf16.msra.mxu0 0
        %590 = vmatprep.subr.bf16.mxu0 0
        %591 = vmatpush1.bf16.msra.mxu0 0
        %592 = vmatprep.subr.bf16.mxu0 0
        %593 = vmatpush1.bf16.msra.mxu0 0
        %594 = vmatprep.subr.bf16.mxu0 0
        %595 = vmatpush1.bf16.msra.mxu0 0
        %596 = vmatprep.subr.bf16.mxu0 0
        %597 = vmatpush1.bf16.msra.mxu0 0
        %598 = vmatprep.subr.bf16.mxu0 0
        %599 = vmatpush1.bf16.msra.mxu0 0
        %600 = vmatprep.mubr.bf16.mxu0 0
        %601 = vmatmul.mubr.bf16.gmra.mrb[0].mxu0 %v457
        %v602 = vpop.f32.mrb[0].mxu0
        %v603 = vadd.f32 0.0, %v602
        %v604 = vpop.f32.mrb[0].mxu0
        %v605 = vadd.f32 0.0, %v604
        %v606 = vpop.f32.mrb[0].mxu0
        %v607 = vadd.f32 0.0, %v606
        %v608 = vpop.f32.mrb[0].mxu0
        %v609 = vadd.f32 0.0, %v608
        %610 = vmatprep.mubr.bf16.mxu0 0
        %611 = vmatmul.mubr.bf16.gmra.mrb[0].mxu0 %v460
        %v612 = vpop.f32.mrb[0].mxu0
        %v613 = vadd.f32 0.0, %v612
        %v614 = vpop.f32.mrb[0].mxu0
        %v615 = vadd.f32 0.0, %v614
        %v616 = vpop.f32.mrb[0].mxu0
        %v617 = vadd.f32 0.0, %v616
        %v618 = vpop.f32.mrb[0].mxu0
        %v619 = vadd.f32 0.0, %v618
        %620 = vdwg.mxu0
        %621 = vmatprep.subr.bf16.mxu0 %v414
        %622 = vmatpush1.bf16.msra.mxu0 %v413
        %623 = vmatprep.subr.bf16.mxu0 %v426
        %624 = vmatpush1.bf16.msra.mxu0 %v425
        %625 = vmatprep.subr.bf16.mxu0 0
        %626 = vmatpush1.bf16.msra.mxu0 0
        %627 = vmatprep.subr.bf16.mxu0 0
        %628 = vmatpush1.bf16.msra.mxu0 0
        %629 = vmatprep.subr.bf16.mxu0 0
        %630 = vmatpush1.bf16.msra.mxu0 0
        %631 = vmatprep.subr.bf16.mxu0 0
        %632 = vmatpush1.bf16.msra.mxu0 0
        %633 = vmatprep.subr.bf16.mxu0 0
        %634 = vmatpush1.bf16.msra.mxu0 0
        %635 = vmatprep.subr.bf16.mxu0 0
        %636 = vmatpush1.bf16.msra.mxu0 0
        %637 = vmatprep.subr.bf16.mxu0 0
        %638 = vmatpush1.bf16.msra.mxu0 0
        %639 = vmatprep.subr.bf16.mxu0 0
        %640 = vmatpush1.bf16.msra.mxu0 0
        %641 = vmatprep.subr.bf16.mxu0 0
        %642 = vmatpush1.bf16.msra.mxu0 0
        %643 = vmatprep.subr.bf16.mxu0 0
        %644 = vmatpush1.bf16.msra.mxu0 0
        %645 = vmatprep.subr.bf16.mxu0 0
        %646 = vmatpush1.bf16.msra.mxu0 0
        %647 = vmatprep.subr.bf16.mxu0 0
        %648 = vmatpush1.bf16.msra.mxu0 0
        %649 = vmatprep.subr.bf16.mxu0 0
        %650 = vmatpush1.bf16.msra.mxu0 0
        %651 = vmatprep.subr.bf16.mxu0 0
        %652 = vmatpush1.bf16.msra.mxu0 0
        %653 = vmatprep.mubr.bf16.mxu0 0
        %654 = vmatmul.mubr.bf16.gmra.mrb[0].mxu0 %v457
        %v655 = vpop.f32.mrb[0].mxu0
        %v656 = vadd.f32 0.0, %v655
        %v657 = vpop.f32.mrb[0].mxu0
        %v658 = vadd.f32 0.0, %v657
        %v659 = vpop.f32.mrb[0].mxu0
        %v660 = vadd.f32 0.0, %v659
        %v661 = vpop.f32.mrb[0].mxu0
        %v662 = vadd.f32 0.0, %v661
        %663 = vmatprep.mubr.bf16.mxu0 0
        %664 = vmatmul.mubr.bf16.gmra.mrb[0].mxu0 %v460
        %v665 = vpop.f32.mrb[0].mxu0
        %v666 = vadd.f32 0.0, %v665
        %v667 = vpop.f32.mrb[0].mxu0
        %v668 = vadd.f32 0.0, %v667
        %v669 = vpop.f32.mrb[0].mxu0
        %v670 = vadd.f32 0.0, %v669
        %v671 = vpop.f32.mrb[0].mxu0
        %v672 = vadd.f32 0.0, %v671
        %673 = vdwg.mxu0
        %674 = vmatprep.subr.bf16.mxu0 %v416
        %675 = vmatpush1.bf16.msra.mxu0 %v415
        %676 = vmatprep.subr.bf16.mxu0 %v428
        %677 = vmatpush1.bf16.msra.mxu0 %v427
        %678 = vmatprep.subr.bf16.mxu0 0
        %679 = vmatpush1.bf16.msra.mxu0 0
        %680 = vmatprep.subr.bf16.mxu0 0
        %681 = vmatpush1.bf16.msra.mxu0 0
        %682 = vmatprep.subr.bf16.mxu0 0
        %683 = vmatpush1.bf16.msra.mxu0 0
        %684 = vmatprep.subr.bf16.mxu0 0
        %685 = vmatpush1.bf16.msra.mxu0 0
        %686 = vmatprep.subr.bf16.mxu0 0
        %687 = vmatpush1.bf16.msra.mxu0 0
        %688 = vmatprep.subr.bf16.mxu0 0
        %689 = vmatpush1.bf16.msra.mxu0 0
        %690 = vmatprep.subr.bf16.mxu0 0
        %691 = vmatpush1.bf16.msra.mxu0 0
        %692 = vmatprep.subr.bf16.mxu0 0
        %693 = vmatpush1.bf16.msra.mxu0 0
        %694 = vmatprep.subr.bf16.mxu0 0
        %695 = vmatpush1.bf16.msra.mxu0 0
        %696 = vmatprep.subr.bf16.mxu0 0
        %697 = vmatpush1.bf16.msra.mxu0 0
        %698 = vmatprep.subr.bf16.mxu0 0
        %699 = vmatpush1.bf16.msra.mxu0 0
        %700 = vmatprep.subr.bf16.mxu0 0
        %701 = vmatpush1.bf16.msra.mxu0 0
        %702 = vmatprep.subr.bf16.mxu0 0
        %703 = vmatpush1.bf16.msra.mxu0 0
        %704 = vmatprep.subr.bf16.mxu0 0
        %705 = vmatpush1.bf16.msra.mxu0 0
        %706 = vmatprep.mubr.bf16.mxu0 0
        %707 = vmatmul.mubr.bf16.gmra.mrb[0].mxu0 %v457
        %v708 = vpop.f32.mrb[0].mxu0
        %v709 = vadd.f32 0.0, %v708
        %v710 = vpop.f32.mrb[0].mxu0
        %v711 = vadd.f32 0.0, %v710
        %v712 = vpop.f32.mrb[0].mxu0
        %v713 = vadd.f32 0.0, %v712
        %v714 = vpop.f32.mrb[0].mxu0
        %v715 = vadd.f32 0.0, %v714
        %716 = vmatprep.mubr.bf16.mxu0 0
        %717 = vmatmul.mubr.bf16.gmra.mrb[0].mxu0 %v460
        %v718 = vpop.f32.mrb[0].mxu0
        %v719 = vadd.f32 0.0, %v718
        %v720 = vpop.f32.mrb[0].mxu0
        %v721 = vadd.f32 0.0, %v720
        %v722 = vpop.f32.mrb[0].mxu0
        %v723 = vadd.f32 0.0, %v722
        %v724 = vpop.f32.mrb[0].mxu0
        %v725 = vadd.f32 0.0, %v724
        %726 = vdwg.mxu0
        %727 = vmatprep.subr.bf16.mxu0 %v418
        %728 = vmatpush1.bf16.msra.mxu0 %v417
        %729 = vmatprep.subr.bf16.mxu0 %v430
        %730 = vmatpush1.bf16.msra.mxu0 %v429
        %731 = vmatprep.subr.bf16.mxu0 0
        %732 = vmatpush1.bf16.msra.mxu0 0
        %733 = vmatprep.subr.bf16.mxu0 0
        %734 = vmatpush1.bf16.msra.mxu0 0
        %735 = vmatprep.subr.bf16.mxu0 0
        %736 = vmatpush1.bf16.msra.mxu0 0
        %737 = vmatprep.subr.bf16.mxu0 0
        %738 = vmatpush1.bf16.msra.mxu0 0
        %739 = vmatprep.subr.bf16.mxu0 0
        %740 = vmatpush1.bf16.msra.mxu0 0
        %741 = vmatprep.subr.bf16.mxu0 0
        %742 = vmatpush1.bf16.msra.mxu0 0
        %743 = vmatprep.subr.bf16.mxu0 0
        %744 = vmatpush1.bf16.msra.mxu0 0
        %745 = vmatprep.subr.bf16.mxu0 0
        %746 = vmatpush1.bf16.msra.mxu0 0
        %747 = vmatprep.subr.bf16.mxu0 0
        %748 = vmatpush1.bf16.msra.mxu0 0
        %749 = vmatprep.subr.bf16.mxu0 0
        %750 = vmatpush1.bf16.msra.mxu0 0
        %751 = vmatprep.subr.bf16.mxu0 0
        %752 = vmatpush1.bf16.msra.mxu0 0
        %753 = vmatprep.subr.bf16.mxu0 0
        %754 = vmatpush1.bf16.msra.mxu0 0
        %755 = vmatprep.subr.bf16.mxu0 0
        %756 = vmatpush1.bf16.msra.mxu0 0
        %757 = vmatprep.subr.bf16.mxu0 0
        %758 = vmatpush1.bf16.msra.mxu0 0
        %759 = vmatprep.mubr.bf16.mxu0 0
        %760 = vmatmul.mubr.bf16.gmra.mrb[0].mxu0 %v457
        %v761 = vpop.f32.mrb[0].mxu0
        %v762 = vadd.f32 0.0, %v761
        %v763 = vpop.f32.mrb[0].mxu0
        %v764 = vadd.f32 0.0, %v763
        %v765 = vpop.f32.mrb[0].mxu0
        %v766 = vadd.f32 0.0, %v765
        %v767 = vpop.f32.mrb[0].mxu0
        %v768 = vadd.f32 0.0, %v767
        %769 = vmatprep.mubr.bf16.mxu0 0
        %770 = vmatmul.mubr.bf16.gmra.mrb[0].mxu0 %v460
        %v771 = vpop.f32.mrb[0].mxu0
        %v772 = vadd.f32 0.0, %v771
        %v773 = vpop.f32.mrb[0].mxu0
        %v774 = vadd.f32 0.0, %v773
        %v775 = vpop.f32.mrb[0].mxu0
        %v776 = vadd.f32 0.0, %v775
        %v777 = vpop.f32.mrb[0].mxu0
        %v778 = vadd.f32 0.0, %v777
        %779 = vdwg.mxu0
        %v780 = vpack.c.bf16 %v501, %v497
        %v781 = vpack.c.bf16 %v503, %v499
        %v782 = vpack.c.bf16 %v554, %v550
        %v783 = vpack.c.bf16 %v556, %v552
        %v784 = vpack.c.bf16 %v607, %v603
        %v785 = vpack.c.bf16 %v609, %v605
        %v786 = vpack.c.bf16 %v660, %v656
        %v787 = vpack.c.bf16 %v662, %v658
        %v788 = vpack.c.bf16 %v713, %v709
        %v789 = vpack.c.bf16 %v715, %v711
        %v790 = vpack.c.bf16 %v766, %v762
        %v791 = vpack.c.bf16 %v768, %v764
        %v792 = vpack.c.bf16 %v511, %v507
        %v793 = vpack.c.bf16 %v513, %v509
        %v794 = vpack.c.bf16 %v564, %v560
        %v795 = vpack.c.bf16 %v566, %v562
        %v796 = vpack.c.bf16 %v617, %v613
        %v797 = vpack.c.bf16 %v619, %v615
        %v798 = vpack.c.bf16 %v670, %v666
        %v799 = vpack.c.bf16 %v672, %v668
        %v800 = vpack.c.bf16 %v723, %v719
        %v801 = vpack.c.bf16 %v725, %v721
        %v802 = vpack.c.bf16 %v776, %v772
        %v803 = vpack.c.bf16 %v778, %v774
        %804 = vst [vmem:[#allocation2] sm:$0xff] %v780
        %805 = vst [vmem:[#allocation2 + $0x8] sm:$0xff] %v781
        %806 = vst [vmem:[#allocation2 + $0x10] sm:$0xff] %v782
        %807 = vst [vmem:[#allocation2 + $0x18] sm:$0xff] %v783
        %808 = vst [vmem:[#allocation2 + $0x20] sm:$0xff] %v784
        %809 = vst [vmem:[#allocation2 + $0x28] sm:$0xff] %v785
        %810 = vst [vmem:[#allocation2 + $0x30] sm:$0xff] %v786
        %811 = vst [vmem:[#allocation2 + $0x38] sm:$0xff] %v787
        %812 = vst [vmem:[#allocation2 + $0x40] sm:$0xff] %v788
        %813 = vst [vmem:[#allocation2 + $0x48] sm:$0xff] %v789
        %814 = vst [vmem:[#allocation2 + $0x50] sm:$0xff] %v790
        %815 = vst [vmem:[#allocation2 + $0x58] sm:$0xff] %v791
        %816 = vst [vmem:[#allocation2 + $0x60] sm:$0xff] %v792
        %817 = vst [vmem:[#allocation2 + $0x68] sm:$0xff] %v793
        %818 = vst [vmem:[#allocation2 + $0x70] sm:$0xff] %v794
        %819 = vst [vmem:[#allocation2 + $0x78] sm:$0xff] %v795
        %820 = vst [vmem:[#allocation2 + $0x80] sm:$0xff] %v796
        %821 = vst [vmem:[#allocation2 + $0x88] sm:$0xff] %v797
        %822 = vst [vmem:[#allocation2 + $0x90] sm:$0xff] %v798
        %823 = vst [vmem:[#allocation2 + $0x98] sm:$0xff] %v799
        %824 = vst [vmem:[#allocation2 + $0xa0] sm:$0xff] %v800
        %825 = vst [vmem:[#allocation2 + $0xa8] sm:$0xff] %v801
        %826 = vst [vmem:[#allocation2 + $0xb0] sm:$0xff] %v802
        %827 = vst [vmem:[#allocation2 + $0xb8] sm:$0xff] %v803
        loop: start=0, step=1, limit=2
        $region53: #{sequence_attention_forward.1} parent=51 // loop_pre_header
          _
        $region54: #{sequence_attention_forward.1} parent=51 // loop_header
          %s829 = sphi 0, %s833
          %p830 = scmp.ge.s32.totalorder %s829, 2
        $region55: #{sequence_attention_forward.1} parent=51 // loop_header_branch
          %832 = sbr.rel (%p830) target = $region59
        $region56: #{sequence_attention_forward.1} parent=51 // loop_body
          %s834 = smul.u32 %s829, 16
          %s835 = ssub.s32 %s829, 1
          %p836 = scmp.gt.s32.totalorder %s835, 0
          %s837 = scalar_select %p836, %s835, 0
          %s838 = smul.u32 %s837, 16
          %v839 = vlaneseq
          %v840 = vshrl.u32 %v839, 7
          %v841 = vadd.s32 %v840, 8
          %v842 = vstv %s834
          %v843 = vadd.s32 %v842, %v840
          %v844 = vadd.s32 %v842, %v841
          %v845 = vlaneseq
          %v846 = vand.u32 %v845, 127
          %v847 = vstv %s838
          %v848 = vadd.s32 %v847, %v846
          %v849 = vsub.s32 %v843, %v848
          %v850 = vsub.s32 %v844, %v848
          %vm851 = vcmp.ge.s32.totalorder %v849, 0
          %vm852 = vcmp.ge.s32.totalorder %v850, 0
          %vm853 = vcmp.le.s32.totalorder %v849, 7
          %vm854 = vcmp.le.s32.totalorder %v850, 7
          %vm855 = vmand %vm851, %vm853
          %vm856 = vmand %vm852, %vm854
          %v857 = vsel %vm855, 0.0, -1e+30
          %v858 = vsel %vm856, 0.0, -1e+30
          %s859 = sshra.s32 %s834, 4
          %s860 = sand.u32 %s834, 15
          %s861 = smul.u32 %s859, 12
          %s862 = smul.addr %s861, 8
          %s863 = scalar_lea.vmem [#allocation2], %s862
          %v864 = vld [vmem:[%s863] sm:$0xff]
          %s865 = sshra.s32 %s838, 4
          %s866 = sand.u32 %s838, 15
          %s867 = smul.u32 %s865, 12
          %s868 = smul.addr %s867, 8
          %s869 = scalar_lea.vmem [#allocation2], %s868
          %v870 = vld [vmem:[%s869 + $0x20] sm:$0xff]
          %v871 = vld [vmem:[%s869 + $0x80] sm:$0xff]
          %v872 = vld [vmem:[%s869 + $0x40] sm:$0xff]
          %v873 = vld [vmem:[%s869 + $0xa0] sm:$0xff]
          %vm874 = vcmask 523264
          %v876 = vsel %vm874, %v864, 0
          %v879 = vsel %vm874, %v870, 0
          %v882 = vsel %vm874, %v871, 0
          %884 = vmatprep.subr.bf16.mxu0 0
          %885 = vmatpush1.bf16.xpose.msra.mxu0 %v879
          %886 = vmatprep.subr.bf16.mxu0 0
          %887 = vmatpush1.bf16.xpose.msra.mxu0 %v882
          %888 = vmatprep.subr.bf16.mxu0 0
          %889 = vmatpush1.bf16.xpose.msra.mxu0 0
          %890 = vmatprep.subr.bf16.mxu0 0
          %891 = vmatpush1.bf16.xpose.msra.mxu0 0
          %892 = vmatprep.subr.bf16.mxu0 0
          %893 = vmatpush1.bf16.xpose.msra.mxu0 0
          %894 = vmatprep.subr.bf16.mxu0 0
          %895 = vmatpush1.bf16.xpose.msra.mxu0 0
          %896 = vmatprep.subr.bf16.mxu0 0
          %897 = vmatpush1.bf16.xpose.msra.mxu0 0
          %898 = vmatprep.subr.bf16.mxu0 0
          %899 = vmatpush1.bf16.xpose.msra.mxu0 0
          %900 = vmatprep.subr.bf16.mxu0 0
          %901 = vmatpush1.bf16.xpose.msra.mxu0 0
          %902 = vmatprep.subr.bf16.mxu0 0
          %903 = vmatpush1.bf16.xpose.msra.mxu0 0
          %904 = vmatprep.subr.bf16.mxu0 0
          %905 = vmatpush1.bf16.xpose.msra.mxu0 0
          %906 = vmatprep.subr.bf16.mxu0 0
          %907 = vmatpush1.bf16.xpose.msra.mxu0 0
          %908 = vmatprep.subr.bf16.mxu0 0
          %909 = vmatpush1.bf16.xpose.msra.mxu0 0
          %910 = vmatprep.subr.bf16.mxu0 0
          %911 = vmatpush1.bf16.xpose.msra.mxu0 0
          %912 = vmatprep.subr.bf16.mxu0 0
          %913 = vmatpush1.bf16.xpose.msra.mxu0 0
          %914 = vmatprep.subr.bf16.mxu0 0
          %915 = vmatpush1.bf16.xpose.msra.mxu0 0
          %916 = vmatprep.mubr.bf16.mxu0 0
          %917 = vmatmul.mubr.bf16.gmra.mrb[0].mxu0 %v876
          %v918 = vpop.f32.mrb[0].mxu0
          %v919 = vadd.f32 %v857, %v918
          %v920 = vpop.f32.mrb[0].mxu0
          %v921 = vpop.f32.mrb[0].mxu0
          %v922 = vadd.f32 %v858, %v921
          %v923 = vpop.f32.mrb[0].mxu0
          %924 = vdwg.mxu0
          %v925 = vsel %vm455, %v919, -inf
          %926 = vmax.xlane.f32.xlu0 %v925
          %v927 = vpop.xlane.xlu0 %926
          %v928 = vsel %vm455, %v922, -inf
          %929 = vmax.xlane.f32.xlu0 %v928
          %v930 = vpop.xlane.xlu0 %929
          %v931 = vsub.f32 %v919, %v927
          %v932 = vsub.f32 %v922, %v930
          %v933 = vmul.f32 %v931, 1.442695
          %v934 = vpow.pop %v933
          %v935 = vmul.f32 %v932, 1.442695
          %v936 = vpow.pop %v935
          %v937 = vsel %vm455, %v934, 0.0
          %938 = vadd.xlane.f32.xlu0 %v937
          %v939 = vpop.xlane.xlu0 %938
          %v940 = vsel %vm455, %v936, 0.0
          %941 = vadd.xlane.f32.xlu0 %v940
          %v942 = vpop.xlane.xlu0 %941
          %v943 = vrcp.pop %v939
          %v944 = vrcp.pop %v942
          %v945 = vmul.f32 %v934, %v943
          %v946 = vmul.f32 %v936, %v944
          %v947 = vpack.c.bf16 %v946, %v945
          %v949 = vsel %vm455, %v947, 0
          %951 = vmatprep.subr.bf16.mxu0 0
          %952 = vmatpush1.bf16.msra.mxu0 %v872
          %953 = vmatprep.subr.bf16.mxu0 0
          %954 = vmatpush1.bf16.msra.mxu0 %v873
          %955 = vmatprep.subr.bf16.mxu0 0
          %956 = vmatpush1.bf16.msra.mxu0 0
          %957 = vmatprep.subr.bf16.mxu0 0
          %958 = vmatpush1.bf16.msra.mxu0 0
          %959 = vmatprep.subr.bf16.mxu0 0
          %960 = vmatpush1.bf16.msra.mxu0 0
          %961 = vmatprep.subr.bf16.mxu0 0
          %962 = vmatpush1.bf16.msra.mxu0 0
          %963 = vmatprep.subr.bf16.mxu0 0
          %964 = vmatpush1.bf16.msra.mxu0 0
          %965 = vmatprep.subr.bf16.mxu0 0
          %966 = vmatpush1.bf16.msra.mxu0 0
          %967 = vmatprep.subr.bf16.mxu0 0
          %968 = vmatpush1.bf16.msra.mxu0 0
          %969 = vmatprep.subr.bf16.mxu0 0
          %970 = vmatpush1.bf16.msra.mxu0 0
          %971 = vmatprep.subr.bf16.mxu0 0
          %972 = vmatpush1.bf16.msra.mxu0 0
          %973 = vmatprep.subr.bf16.mxu0 0
          %974 = vmatpush1.bf16.msra.mxu0 0
          %975 = vmatprep.subr.bf16.mxu0 0
          %976 = vmatpush1.bf16.msra.mxu0 0
          %977 = vmatprep.subr.bf16.mxu0 0
          %978 = vmatpush1.bf16.msra.mxu0 0
          %979 = vmatprep.subr.bf16.mxu0 0
          %980 = vmatpush1.bf16.msra.mxu0 0
          %981 = vmatprep.subr.bf16.mxu0 0
          %982 = vmatpush1.bf16.msra.mxu0 0
          %983 = vmatprep.mubr.bf16.mxu0 0
          %984 = vmatmul.mubr.bf16.gmra.mrb[0].mxu0 %v949
          %v985 = vpop.f32.mrb[0].mxu0
          %v986 = vadd.f32 0.0, %v985
          %v987 = vpop.f32.mrb[0].mxu0
          %v988 = vpop.f32.mrb[0].mxu0
          %v989 = vadd.f32 0.0, %v988
          %v990 = vpop.f32.mrb[0].mxu0
          %991 = vdwg.mxu0
          %v992 = vpack.c.bf16 %v989, %v986
          %v993 = vld [vmem:[%s2] sm:$0xf]
          %v994 = vld [vmem:[%s2 + $0x4] sm:$0xf]
          %v995 = vld [vmem:[%s2 + $0x8] sm:$0xf]
          %v996 = vld [vmem:[%s2 + $0xc] sm:$0xf]
          %v997 = vld [vmem:[%s2 + $0x10] sm:$0xf]
          %v998 = vld [vmem:[%s2 + $0x14] sm:$0xf]
          %v999 = vld [vmem:[%s2 + $0x18] sm:$0xf]
          %v1000 = vld [vmem:[%s2 + $0x1c] sm:$0xf]
          %v1001 = vld [vmem:[%s863] sm:$0xff]
          %v1002 = vld [vmem:[%s869 + $0x20] sm:$0xff]
          %v1003 = vld [vmem:[%s869 + $0x80] sm:$0xff]
          %v1004 = vld [vmem:[%s869 + $0x40] sm:$0xff]
          %v1005 = vld [vmem:[%s869 + $0xa0] sm:$0xff]
          %1007 = vrot.lane.b32.xlu0 %v1001, 64
          %v1008 = vpop.permute.xlu0 %1007
          %1011 = vrot.lane.b32.xlu0 %v1002, 64
          %v1012 = vpop.permute.xlu0 %1011
          %1013 = vrot.lane.b32.xlu0 %v1003, 64
          %v1014 = vpop.permute.xlu0 %1013
          %v1016 = vsel %vm874, %v1008, 0
          %v1019 = vsel %vm874, %v1012, 0
          %v1022 = vsel %vm874, %v1014, 0
          %1024 = vmatprep.subr.bf16.mxu0 0
          %1025 = vmatpush1.bf16.xpose.msra.mxu0 %v1019
          %1026 = vmatprep.subr.bf16.mxu0 0
          %1027 = vmatpush1.bf16.xpose.msra.mxu0 %v1022
          %1028 = vmatprep.subr.bf16.mxu0 0
          %1029 = vmatpush1.bf16.xpose.msra.mxu0 0
          %1030 = vmatprep.subr.bf16.mxu0 0
          %1031 = vmatpush1.bf16.xpose.msra.mxu0 0
          %1032 = vmatprep.subr.bf16.mxu0 0
          %1033 = vmatpush1.bf16.xpose.msra.mxu0 0
          %1034 = vmatprep.subr.bf16.mxu0 0
          %1035 = vmatpush1.bf16.xpose.msra.mxu0 0
          %1036 = vmatprep.subr.bf16.mxu0 0
          %1037 = vmatpush1.bf16.xpose.msra.mxu0 0
          %1038 = vmatprep.subr.bf16.mxu0 0
          %1039 = vmatpush1.bf16.xpose.msra.mxu0 0
          %1040 = vmatprep.subr.bf16.mxu0 0
          %1041 = vmatpush1.bf16.xpose.msra.mxu0 0
          %1042 = vmatprep.subr.bf16.mxu0 0
          %1043 = vmatpush1.bf16.xpose.msra.mxu0 0
          %1044 = vmatprep.subr.bf16.mxu0 0
          %1045 = vmatpush1.bf16.xpose.msra.mxu0 0
          %1046 = vmatprep.subr.bf16.mxu0 0
          %1047 = vmatpush1.bf16.xpose.msra.mxu0 0
          %1048 = vmatprep.subr.bf16.mxu0 0
          %1049 = vmatpush1.bf16.xpose.msra.mxu0 0
          %1050 = vmatprep.subr.bf16.mxu0 0
          %1051 = vmatpush1.bf16.xpose.msra.mxu0 0
          %1052 = vmatprep.subr.bf16.mxu0 0
          %1053 = vmatpush1.bf16.xpose.msra.mxu0 0
          %1054 = vmatprep.subr.bf16.mxu0 0
          %1055 = vmatpush1.bf16.xpose.msra.mxu0 0
          %1056 = vmatprep.mubr.bf16.mxu0 0
          %1057 = vmatmul.mubr.bf16.gmra.mrb[0].mxu0 %v1016
          %v1058 = vpop.f32.mrb[0].mxu0
          %v1059 = vadd.f32 %v857, %v1058
          %v1060 = vpop.f32.mrb[0].mxu0
          %v1061 = vpop.f32.mrb[0].mxu0
          %v1062 = vadd.f32 %v858, %v1061
          %v1063 = vpop.f32.mrb[0].mxu0
          %1064 = vdwg.mxu0
          %v1065 = vsel %vm455, %v1059, -inf
          %1066 = vmax.xlane.f32.xlu0 %v1065
          %v1067 = vpop.xlane.xlu0 %1066
          %v1068 = vsel %vm455, %v1062, -inf
          %1069 = vmax.xlane.f32.xlu0 %v1068
          %v1070 = vpop.xlane.xlu0 %1069
          %v1071 = vsub.f32 %v1059, %v1067
          %v1072 = vsub.f32 %v1062, %v1070
          %v1073 = vmul.f32 %v1071, 1.442695
          %v1074 = vpow.pop %v1073
          %v1075 = vmul.f32 %v1072, 1.442695
          %v1076 = vpow.pop %v1075
          %v1077 = vsel %vm455, %v1074, 0.0
          %1078 = vadd.xlane.f32.xlu0 %v1077
          %v1079 = vpop.xlane.xlu0 %1078
          %v1080 = vsel %vm455, %v1076, 0.0
          %1081 = vadd.xlane.f32.xlu0 %v1080
          %v1082 = vpop.xlane.xlu0 %1081
          %v1083 = vrcp.pop %v1079
          %v1084 = vrcp.pop %v1082
          %v1085 = vmul.f32 %v1074, %v1083
          %v1086 = vmul.f32 %v1076, %v1084
          %v1087 = vpack.c.bf16 %v1086, %v1085
          %1090 = vrot.lane.b32.xlu0 %v1004, 64
          %v1091 = vpop.permute.xlu0 %1090
          %1092 = vrot.lane.b32.xlu0 %v1005, 64
          %v1093 = vpop.permute.xlu0 %1092
          %v1097 = vsel %vm455, %v1087, 0
          %1099 = vmatprep.subr.bf16.mxu0 0
          %1100 = vmatpush1.bf16.msra.mxu0 %v1091
          %1101 = vmatprep.subr.bf16.mxu0 0
          %1102 = vmatpush1.bf16.msra.mxu0 %v1093
          %1103 = vmatprep.subr.bf16.mxu0 0
          %1104 = vmatpush1.bf16.msra.mxu0 0
          %1105 = vmatprep.subr.bf16.mxu0 0
          %1106 = vmatpush1.bf16.msra.mxu0 0
          %1107 = vmatprep.subr.bf16.mxu0 0
          %1108 = vmatpush1.bf16.msra.mxu0 0
          %1109 = vmatprep.subr.bf16.mxu0 0
          %1110 = vmatpush1.bf16.msra.mxu0 0
          %1111 = vmatprep.subr.bf16.mxu0 0
          %1112 = vmatpush1.bf16.msra.mxu0 0
          %1113 = vmatprep.subr.bf16.mxu0 0
          %1114 = vmatpush1.bf16.msra.mxu0 0
          %1115 = vmatprep.subr.bf16.mxu0 0
          %1116 = vmatpush1.bf16.msra.mxu0 0
          %1117 = vmatprep.subr.bf16.mxu0 0
          %1118 = vmatpush1.bf16.msra.mxu0 0
          %1119 = vmatprep.subr.bf16.mxu0 0
          %1120 = vmatpush1.bf16.msra.mxu0 0
          %1121 = vmatprep.subr.bf16.mxu0 0
          %1122 = vmatpush1.bf16.msra.mxu0 0
          %1123 = vmatprep.subr.bf16.mxu0 0
          %1124 = vmatpush1.bf16.msra.mxu0 0
          %1125 = vmatprep.subr.bf16.mxu0 0
          %1126 = vmatpush1.bf16.msra.mxu0 0
          %1127 = vmatprep.subr.bf16.mxu0 0
          %1128 = vmatpush1.bf16.msra.mxu0 0
          %1129 = vmatprep.subr.bf16.mxu0 0
          %1130 = vmatpush1.bf16.msra.mxu0 0
          %1131 = vmatprep.mubr.bf16.mxu0 0
          %1132 = vmatmul.mubr.bf16.gmra.mrb[0].mxu0 %v1097
          %v1133 = vpop.f32.mrb[0].mxu0
          %v1134 = vadd.f32 0.0, %v1133
          %v1135 = vpop.f32.mrb[0].mxu0
          %v1136 = vpop.f32.mrb[0].mxu0
          %v1137 = vadd.f32 0.0, %v1136
          %v1138 = vpop.f32.mrb[0].mxu0
          %1139 = vdwg.mxu0
          %v1140 = vpack.c.bf16 %v1137, %v1134
          %v1141 = vld [vmem:[%s2 + $0x20] sm:$0xf]
          %v1142 = vld [vmem:[%s2 + $0x24] sm:$0xf]
          %v1143 = vld [vmem:[%s2 + $0x28] sm:$0xf]
          %v1144 = vld [vmem:[%s2 + $0x2c] sm:$0xf]
          %v1145 = vld [vmem:[%s2 + $0x30] sm:$0xf]
          %v1146 = vld [vmem:[%s2 + $0x34] sm:$0xf]
          %v1147 = vld [vmem:[%s2 + $0x38] sm:$0xf]
          %v1148 = vld [vmem:[%s2 + $0x3c] sm:$0xf]
          %v1157 = vunpack.c.l.b16 %v1141
          %v1158 = vunpack.c.l.b16 %v1142
          %v1159 = vunpack.c.l.b16 %v1143
          %v1160 = vunpack.c.l.b16 %v1144
          %v1161 = vunpack.c.l.b16 %v1145
          %v1162 = vunpack.c.l.b16 %v1146
          %v1163 = vunpack.c.l.b16 %v1147
          %v1164 = vunpack.c.l.b16 %v1148
          %v1165 = vpack.c.b16 %v1158, %v1157
          %v1166 = vpack.c.b16 %v1160, %v1159
          %v1167 = vpack.c.b16 %v1162, %v1161
          %v1168 = vpack.c.b16 %v1164, %v1163
          %v1174 = vsel %vm874, %v1140, 0
          %1176 = vmatprep.subr.bf16.mxu0 0
          %1177 = vmatpush1.bf16.msra.mxu0 %v1165
          %1178 = vmatprep.subr.bf16.mxu0 0
          %1179 = vmatpush1.bf16.msra.mxu0 %v1166
          %1180 = vmatprep.subr.bf16.mxu0 0
          %1181 = vmatpush1.bf16.msra.mxu0 %v1167
          %1182 = vmatprep.subr.bf16.mxu0 0
          %1183 = vmatpush1.bf16.msra.mxu0 %v1168
          %1184 = vmatprep.subr.bf16.mxu0 0
          %1185 = vmatpush1.bf16.msra.mxu0 0
          %1186 = vmatprep.subr.bf16.mxu0 0
          %1187 = vmatpush1.bf16.msra.mxu0 0
          %1188 = vmatprep.subr.bf16.mxu0 0
          %1189 = vmatpush1.bf16.msra.mxu0 0
          %1190 = vmatprep.subr.bf16.mxu0 0
          %1191 = vmatpush1.bf16.msra.mxu0 0
          %1192 = vmatprep.subr.bf16.mxu0 0
          %1193 = vmatpush1.bf16.msra.mxu0 0
          %1194 = vmatprep.subr.bf16.mxu0 0
          %1195 = vmatpush1.bf16.msra.mxu0 0
          %1196 = vmatprep.subr.bf16.mxu0 0
          %1197 = vmatpush1.bf16.msra.mxu0 0
          %1198 = vmatprep.subr.bf16.mxu0 0
          %1199 = vmatpush1.bf16.msra.mxu0 0
          %1200 = vmatprep.subr.bf16.mxu0 0
          %1201 = vmatpush1.bf16.msra.mxu0 0
          %1202 = vmatprep.subr.bf16.mxu0 0
          %1203 = vmatpush1.bf16.msra.mxu0 0
          %1204 = vmatprep.subr.bf16.mxu0 0
          %1205 = vmatpush1.bf16.msra.mxu0 0
          %1206 = vmatprep.subr.bf16.mxu0 0
          %1207 = vmatpush1.bf16.msra.mxu0 0
          %1208 = vmatprep.mubr.bf16.mxu0 0
          %1209 = vmatmul.mubr.bf16.gmra.mrb[0].mxu0 %v1174
          %v1210 = vpop.f32.mrb[0].mxu0
          %v1211 = vadd.f32 0.0, %v1210
          %v1212 = vpop.f32.mrb[0].mxu0
          %v1213 = vpop.f32.mrb[0].mxu0
          %v1214 = vadd.f32 0.0, %v1213
          %v1215 = vpop.f32.mrb[0].mxu0
          %1216 = vdwg.mxu0
          %v1225 = vunpack.c.l.b16 %v993
          %v1226 = vunpack.c.l.b16 %v994
          %v1227 = vunpack.c.l.b16 %v995
          %v1228 = vunpack.c.l.b16 %v996
          %v1229 = vunpack.c.l.b16 %v997
          %v1230 = vunpack.c.l.b16 %v998
          %v1231 = vunpack.c.l.b16 %v999
          %v1232 = vunpack.c.l.b16 %v1000
          %v1233 = vpack.c.b16 %v1226, %v1225
          %v1234 = vpack.c.b16 %v1228, %v1227
          %v1235 = vpack.c.b16 %v1230, %v1229
          %v1236 = vpack.c.b16 %v1232, %v1231
          %v1242 = vsel %vm874, %v992, 0
          %1244 = vmatprep.subr.bf16.mxu0 0
          %1245 = vmatpush1.bf16.msra.mxu0 %v1233
          %1246 = vmatprep.subr.bf16.mxu0 0
          %1247 = vmatpush1.bf16.msra.mxu0 %v1234
          %1248 = vmatprep.subr.bf16.mxu0 0
          %1249 = vmatpush1.bf16.msra.mxu0 %v1235
          %1250 = vmatprep.subr.bf16.mxu0 0
          %1251 = vmatpush1.bf16.msra.mxu0 %v1236
          %1252 = vmatprep.subr.bf16.mxu0 0
          %1253 = vmatpush1.bf16.msra.mxu0 0
          %1254 = vmatprep.subr.bf16.mxu0 0
          %1255 = vmatpush1.bf16.msra.mxu0 0
          %1256 = vmatprep.subr.bf16.mxu0 0
          %1257 = vmatpush1.bf16.msra.mxu0 0
          %1258 = vmatprep.subr.bf16.mxu0 0
          %1259 = vmatpush1.bf16.msra.mxu0 0
          %1260 = vmatprep.subr.bf16.mxu0 0
          %1261 = vmatpush1.bf16.msra.mxu0 0
          %1262 = vmatprep.subr.bf16.mxu0 0
          %1263 = vmatpush1.bf16.msra.mxu0 0
          %1264 = vmatprep.subr.bf16.mxu0 0
          %1265 = vmatpush1.bf16.msra.mxu0 0
          %1266 = vmatprep.subr.bf16.mxu0 0
          %1267 = vmatpush1.bf16.msra.mxu0 0
          %1268 = vmatprep.subr.bf16.mxu0 0
          %1269 = vmatpush1.bf16.msra.mxu0 0
          %1270 = vmatprep.subr.bf16.mxu0 0
          %1271 = vmatpush1.bf16.msra.mxu0 0
          %1272 = vmatprep.subr.bf16.mxu0 0
          %1273 = vmatpush1.bf16.msra.mxu0 0
          %1274 = vmatprep.subr.bf16.mxu0 0
          %1275 = vmatpush1.bf16.msra.mxu0 0
          %1276 = vmatprep.mubr.bf16.mxu0 0
          %1277 = vmatmul.mubr.bf16.gmra.mrb[0].mxu0 %v1242
          %v1278 = vpop.f32.mrb[0].mxu0
          %v1279 = vadd.f32 %v1211, %v1278
          %v1280 = vpop.f32.mrb[0].mxu0
          %v1281 = vpop.f32.mrb[0].mxu0
          %v1282 = vadd.f32 %v1214, %v1281
          %v1283 = vpop.f32.mrb[0].mxu0
          %1284 = vdwg.mxu0
          %v1285 = vld [vmem:[%s863 + $0x8] sm:$0xff]
          %v1286 = vld [vmem:[%s869 + $0x28] sm:$0xff]
          %v1287 = vld [vmem:[%s869 + $0x88] sm:$0xff]
          %v1288 = vld [vmem:[%s869 + $0x48] sm:$0xff]
          %v1289 = vld [vmem:[%s869 + $0xa8] sm:$0xff]
          %v1291 = vsel %vm874, %v1285, 0
          %v1294 = vsel %vm874, %v1286, 0
          %v1297 = vsel %vm874, %v1287, 0
          %1299 = vmatprep.subr.bf16.mxu0 0
          %1300 = vmatpush1.bf16.xpose.msra.mxu0 %v1294
          %1301 = vmatprep.subr.bf16.mxu0 0
          %1302 = vmatpush1.bf16.xpose.msra.mxu0 %v1297
          %1303 = vmatprep.subr.bf16.mxu0 0
          %1304 = vmatpush1.bf16.xpose.msra.mxu0 0
          %1305 = vmatprep.subr.bf16.mxu0 0
          %1306 = vmatpush1.bf16.xpose.msra.mxu0 0
          %1307 = vmatprep.subr.bf16.mxu0 0
          %1308 = vmatpush1.bf16.xpose.msra.mxu0 0
          %1309 = vmatprep.subr.bf16.mxu0 0
          %1310 = vmatpush1.bf16.xpose.msra.mxu0 0
          %1311 = vmatprep.subr.bf16.mxu0 0
          %1312 = vmatpush1.bf16.xpose.msra.mxu0 0
          %1313 = vmatprep.subr.bf16.mxu0 0
          %1314 = vmatpush1.bf16.xpose.msra.mxu0 0
          %1315 = vmatprep.subr.bf16.mxu0 0
          %1316 = vmatpush1.bf16.xpose.msra.mxu0 0
          %1317 = vmatprep.subr.bf16.mxu0 0
          %1318 = vmatpush1.bf16.xpose.msra.mxu0 0
          %1319 = vmatprep.subr.bf16.mxu0 0
          %1320 = vmatpush1.bf16.xpose.msra.mxu0 0
          %1321 = vmatprep.subr.bf16.mxu0 0
          %1322 = vmatpush1.bf16.xpose.msra.mxu0 0
          %1323 = vmatprep.subr.bf16.mxu0 0
          %1324 = vmatpush1.bf16.xpose.msra.mxu0 0
          %1325 = vmatprep.subr.bf16.mxu0 0
          %1326 = vmatpush1.bf16.xpose.msra.mxu0 0
          %1327 = vmatprep.subr.bf16.mxu0 0
          %1328 = vmatpush1.bf16.xpose.msra.mxu0 0
          %1329 = vmatprep.subr.bf16.mxu0 0
          %1330 = vmatpush1.bf16.xpose.msra.mxu0 0
          %1331 = vmatprep.mubr.bf16.mxu0 0
          %1332 = vmatmul.mubr.bf16.gmra.mrb[0].mxu0 %v1291
          %v1333 = vpop.f32.mrb[0].mxu0
          %v1334 = vadd.f32 %v857, %v1333
          %v1335 = vpop.f32.mrb[0].mxu0
          %v1336 = vpop.f32.mrb[0].mxu0
          %v1337 = vadd.f32 %v858, %v1336
          %v1338 = vpop.f32.mrb[0].mxu0
          %1339 = vdwg.mxu0
          %v1340 = vsel %vm455, %v1334, -inf
          %1341 = vmax.xlane.f32.xlu0 %v1340
          %v1342 = vpop.xlane.xlu0 %1341
          %v1343 = vsel %vm455, %v1337, -inf
          %1344 = vmax.xlane.f32.xlu0 %v1343
          %v1345 = vpop.xlane.xlu0 %1344
          %v1346 = vsub.f32 %v1334, %v1342
          %v1347 = vsub.f32 %v1337, %v1345
          %v1348 = vmul.f32 %v1346, 1.442695
          %v1349 = vpow.pop %v1348
          %v1350 = vmul.f32 %v1347, 1.442695
          %v1351 = vpow.pop %v1350
          %v1352 = vsel %vm455, %v1349, 0.0
          %1353 = vadd.xlane.f32.xlu0 %v1352
          %v1354 = vpop.xlane.xlu0 %1353
          %v1355 = vsel %vm455, %v1351, 0.0
          %1356 = vadd.xlane.f32.xlu0 %v1355
          %v1357 = vpop.xlane.xlu0 %1356
          %v1358 = vrcp.pop %v1354
          %v1359 = vrcp.pop %v1357
          %v1360 = vmul.f32 %v1349, %v1358
          %v1361 = vmul.f32 %v1351, %v1359
          %v1362 = vpack.c.bf16 %v1361, %v1360
          %v1364 = vsel %vm455, %v1362, 0
          %1366 = vmatprep.subr.bf16.mxu0 0
          %1367 = vmatpush1.bf16.msra.mxu0 %v1288
          %1368 = vmatprep.subr.bf16.mxu0 0
          %1369 = vmatpush1.bf16.msra.mxu0 %v1289
          %1370 = vmatprep.subr.bf16.mxu0 0
          %1371 = vmatpush1.bf16.msra.mxu0 0
          %1372 = vmatprep.subr.bf16.mxu0 0
          %1373 = vmatpush1.bf16.msra.mxu0 0
          %1374 = vmatprep.subr.bf16.mxu0 0
          %1375 = vmatpush1.bf16.msra.mxu0 0
          %1376 = vmatprep.subr.bf16.mxu0 0
          %1377 = vmatpush1.bf16.msra.mxu0 0
          %1378 = vmatprep.subr.bf16.mxu0 0
          %1379 = vmatpush1.bf16.msra.mxu0 0
          %1380 = vmatprep.subr.bf16.mxu0 0
          %1381 = vmatpush1.bf16.msra.mxu0 0
          %1382 = vmatprep.subr.bf16.mxu0 0
          %1383 = vmatpush1.bf16.msra.mxu0 0
          %1384 = vmatprep.subr.bf16.mxu0 0
          %1385 = vmatpush1.bf16.msra.mxu0 0
          %1386 = vmatprep.subr.bf16.mxu0 0
          %1387 = vmatpush1.bf16.msra.mxu0 0
          %1388 = vmatprep.subr.bf16.mxu0 0
          %1389 = vmatpush1.bf16.msra.mxu0 0
          %1390 = vmatprep.subr.bf16.mxu0 0
          %1391 = vmatpush1.bf16.msra.mxu0 0
          %1392 = vmatprep.subr.bf16.mxu0 0
          %1393 = vmatpush1.bf16.msra.mxu0 0
          %1394 = vmatprep.subr.bf16.mxu0 0
          %1395 = vmatpush1.bf16.msra.mxu0 0
          %1396 = vmatprep.subr.bf16.mxu0 0
          %1397 = vmatpush1.bf16.msra.mxu0 0
          %1398 = vmatprep.mubr.bf16.mxu0 0
          %1399 = vmatmul.mubr.bf16.gmra.mrb[0].mxu0 %v1364
          %v1400 = vpop.f32.mrb[0].mxu0
          %v1401 = vadd.f32 0.0, %v1400
          %v1402 = vpop.f32.mrb[0].mxu0
          %v1403 = vpop.f32.mrb[0].mxu0
          %v1404 = vadd.f32 0.0, %v1403
          %v1405 = vpop.f32.mrb[0].mxu0
          %1406 = vdwg.mxu0
          %v1407 = vpack.c.bf16 %v1404, %v1401
          %v1408 = vld [vmem:[%s2 + $0x40] sm:$0xf]
          %v1409 = vld [vmem:[%s2 + $0x44] sm:$0xf]
          %v1410 = vld [vmem:[%s2 + $0x48] sm:$0xf]
          %v1411 = vld [vmem:[%s2 + $0x4c] sm:$0xf]
          %v1412 = vld [vmem:[%s2 + $0x50] sm:$0xf]
          %v1413 = vld [vmem:[%s2 + $0x54] sm:$0xf]
          %v1414 = vld [vmem:[%s2 + $0x58] sm:$0xf]
          %v1415 = vld [vmem:[%s2 + $0x5c] sm:$0xf]
          %v1424 = vunpack.c.l.b16 %v1408
          %v1425 = vunpack.c.l.b16 %v1409
          %v1426 = vunpack.c.l.b16 %v1410
          %v1427 = vunpack.c.l.b16 %v1411
          %v1428 = vunpack.c.l.b16 %v1412
          %v1429 = vunpack.c.l.b16 %v1413
          %v1430 = vunpack.c.l.b16 %v1414
          %v1431 = vunpack.c.l.b16 %v1415
          %v1432 = vpack.c.b16 %v1425, %v1424
          %v1433 = vpack.c.b16 %v1427, %v1426
          %v1434 = vpack.c.b16 %v1429, %v1428
          %v1435 = vpack.c.b16 %v1431, %v1430
          %v1441 = vsel %vm874, %v1407, 0
          %1443 = vmatprep.subr.bf16.mxu0 0
          %1444 = vmatpush1.bf16.msra.mxu0 %v1432
          %1445 = vmatprep.subr.bf16.mxu0 0
          %1446 = vmatpush1.bf16.msra.mxu0 %v1433
          %1447 = vmatprep.subr.bf16.mxu0 0
          %1448 = vmatpush1.bf16.msra.mxu0 %v1434
          %1449 = vmatprep.subr.bf16.mxu0 0
          %1450 = vmatpush1.bf16.msra.mxu0 %v1435
          %1451 = vmatprep.subr.bf16.mxu0 0
          %1452 = vmatpush1.bf16.msra.mxu0 0
          %1453 = vmatprep.subr.bf16.mxu0 0
          %1454 = vmatpush1.bf16.msra.mxu0 0
          %1455 = vmatprep.subr.bf16.mxu0 0
          %1456 = vmatpush1.bf16.msra.mxu0 0
          %1457 = vmatprep.subr.bf16.mxu0 0
          %1458 = vmatpush1.bf16.msra.mxu0 0
          %1459 = vmatprep.subr.bf16.mxu0 0
          %1460 = vmatpush1.bf16.msra.mxu0 0
          %1461 = vmatprep.subr.bf16.mxu0 0
          %1462 = vmatpush1.bf16.msra.mxu0 0
          %1463 = vmatprep.subr.bf16.mxu0 0
          %1464 = vmatpush1.bf16.msra.mxu0 0
          %1465 = vmatprep.subr.bf16.mxu0 0
          %1466 = vmatpush1.bf16.msra.mxu0 0
          %1467 = vmatprep.subr.bf16.mxu0 0
          %1468 = vmatpush1.bf16.msra.mxu0 0
          %1469 = vmatprep.subr.bf16.mxu0 0
          %1470 = vmatpush1.bf16.msra.mxu0 0
          %1471 = vmatprep.subr.bf16.mxu0 0
          %1472 = vmatpush1.bf16.msra.mxu0 0
          %1473 = vmatprep.subr.bf16.mxu0 0
          %1474 = vmatpush1.bf16.msra.mxu0 0
          %1475 = vmatprep.mubr.bf16.mxu0 0
          %1476 = vmatmul.mubr.bf16.gmra.mrb[0].mxu0 %v1441
          %v1477 = vpop.f32.mrb[0].mxu0
          %v1478 = vadd.f32 0.0, %v1477
          %v1479 = vpop.f32.mrb[0].mxu0
          %v1480 = vpop.f32.mrb[0].mxu0
          %v1481 = vadd.f32 0.0, %v1480
          %v1482 = vpop.f32.mrb[0].mxu0
          %1483 = vdwg.mxu0
          %v1484 = vadd.f32 %v1279, %v1478
          %v1485 = vadd.f32 %v1282, %v1481
          %v1486 = vld [vmem:[%s863 + $0x8] sm:$0xff]
          %v1487 = vld [vmem:[%s869 + $0x28] sm:$0xff]
          %v1488 = vld [vmem:[%s869 + $0x88] sm:$0xff]
          %v1489 = vld [vmem:[%s869 + $0x48] sm:$0xff]
          %v1490 = vld [vmem:[%s869 + $0xa8] sm:$0xff]
          %1492 = vrot.lane.b32.xlu0 %v1486, 64
          %v1493 = vpop.permute.xlu0 %1492
          %1496 = vrot.lane.b32.xlu0 %v1487, 64
          %v1497 = vpop.permute.xlu0 %1496
          %1498 = vrot.lane.b32.xlu0 %v1488, 64
          %v1499 = vpop.permute.xlu0 %1498
          %v1501 = vsel %vm874, %v1493, 0
          %v1504 = vsel %vm874, %v1497, 0
          %v1507 = vsel %vm874, %v1499, 0
          %1509 = vmatprep.subr.bf16.mxu0 0
          %1510 = vmatpush1.bf16.xpose.msra.mxu0 %v1504
          %1511 = vmatprep.subr.bf16.mxu0 0
          %1512 = vmatpush1.bf16.xpose.msra.mxu0 %v1507
          %1513 = vmatprep.subr.bf16.mxu0 0
          %1514 = vmatpush1.bf16.xpose.msra.mxu0 0
          %1515 = vmatprep.subr.bf16.mxu0 0
          %1516 = vmatpush1.bf16.xpose.msra.mxu0 0
          %1517 = vmatprep.subr.bf16.mxu0 0
          %1518 = vmatpush1.bf16.xpose.msra.mxu0 0
          %1519 = vmatprep.subr.bf16.mxu0 0
          %1520 = vmatpush1.bf16.xpose.msra.mxu0 0
          %1521 = vmatprep.subr.bf16.mxu0 0
          %1522 = vmatpush1.bf16.xpose.msra.mxu0 0
          %1523 = vmatprep.subr.bf16.mxu0 0
          %1524 = vmatpush1.bf16.xpose.msra.mxu0 0
          %1525 = vmatprep.subr.bf16.mxu0 0
          %1526 = vmatpush1.bf16.xpose.msra.mxu0 0
          %1527 = vmatprep.subr.bf16.mxu0 0
          %1528 = vmatpush1.bf16.xpose.msra.mxu0 0
          %1529 = vmatprep.subr.bf16.mxu0 0
          %1530 = vmatpush1.bf16.xpose.msra.mxu0 0
          %1531 = vmatprep.subr.bf16.mxu0 0
          %1532 = vmatpush1.bf16.xpose.msra.mxu0 0
          %1533 = vmatprep.subr.bf16.mxu0 0
          %1534 = vmatpush1.bf16.xpose.msra.mxu0 0
          %1535 = vmatprep.subr.bf16.mxu0 0
          %1536 = vmatpush1.bf16.xpose.msra.mxu0 0
          %1537 = vmatprep.subr.bf16.mxu0 0
          %1538 = vmatpush1.bf16.xpose.msra.mxu0 0
          %1539 = vmatprep.subr.bf16.mxu0 0
          %1540 = vmatpush1.bf16.xpose.msra.mxu0 0
          %1541 = vmatprep.mubr.bf16.mxu0 0
          %1542 = vmatmul.mubr.bf16.gmra.mrb[0].mxu0 %v1501
          %v1543 = vpop.f32.mrb[0].mxu0
          %v1544 = vadd.f32 %v857, %v1543
          %v1545 = vpop.f32.mrb[0].mxu0
          %v1546 = vpop.f32.mrb[0].mxu0
          %v1547 = vadd.f32 %v858, %v1546
          %v1548 = vpop.f32.mrb[0].mxu0
          %1549 = vdwg.mxu0
          %v1550 = vsel %vm455, %v1544, -inf
          %1551 = vmax.xlane.f32.xlu0 %v1550
          %v1552 = vpop.xlane.xlu0 %1551
          %v1553 = vsel %vm455, %v1547, -inf
          %1554 = vmax.xlane.f32.xlu0 %v1553
          %v1555 = vpop.xlane.xlu0 %1554
          %v1556 = vsub.f32 %v1544, %v1552
          %v1557 = vsub.f32 %v1547, %v1555
          %v1558 = vmul.f32 %v1556, 1.442695
          %v1559 = vpow.pop %v1558
          %v1560 = vmul.f32 %v1557, 1.442695
          %v1561 = vpow.pop %v1560
          %v1562 = vsel %vm455, %v1559, 0.0
          %1563 = vadd.xlane.f32.xlu0 %v1562
          %v1564 = vpop.xlane.xlu0 %1563
          %v1565 = vsel %vm455, %v1561, 0.0
          %1566 = vadd.xlane.f32.xlu0 %v1565
          %v1567 = vpop.xlane.xlu0 %1566
          %v1568 = vrcp.pop %v1564
          %v1569 = vrcp.pop %v1567
          %v1570 = vmul.f32 %v1559, %v1568
          %v1571 = vmul.f32 %v1561, %v1569
          %v1572 = vpack.c.bf16 %v1571, %v1570
          %1575 = vrot.lane.b32.xlu0 %v1489, 64
          %v1576 = vpop.permute.xlu0 %1575
          %1577 = vrot.lane.b32.xlu0 %v1490, 64
          %v1578 = vpop.permute.xlu0 %1577
          %v1582 = vsel %vm455, %v1572, 0
          %1584 = vmatprep.subr.bf16.mxu0 0
          %1585 = vmatpush1.bf16.msra.mxu0 %v1576
          %1586 = vmatprep.subr.bf16.mxu0 0
          %1587 = vmatpush1.bf16.msra.mxu0 %v1578
          %1588 = vmatprep.subr.bf16.mxu0 0
          %1589 = vmatpush1.bf16.msra.mxu0 0
          %1590 = vmatprep.subr.bf16.mxu0 0
          %1591 = vmatpush1.bf16.msra.mxu0 0
          %1592 = vmatprep.subr.bf16.mxu0 0
          %1593 = vmatpush1.bf16.msra.mxu0 0
          %1594 = vmatprep.subr.bf16.mxu0 0
          %1595 = vmatpush1.bf16.msra.mxu0 0
          %1596 = vmatprep.subr.bf16.mxu0 0
          %1597 = vmatpush1.bf16.msra.mxu0 0
          %1598 = vmatprep.subr.bf16.mxu0 0
          %1599 = vmatpush1.bf16.msra.mxu0 0
          %1600 = vmatprep.subr.bf16.mxu0 0
          %1601 = vmatpush1.bf16.msra.mxu0 0
          %1602 = vmatprep.subr.bf16.mxu0 0
          %1603 = vmatpush1.bf16.msra.mxu0 0
          %1604 = vmatprep.subr.bf16.mxu0 0
          %1605 = vmatpush1.bf16.msra.mxu0 0
          %1606 = vmatprep.subr.bf16.mxu0 0
          %1607 = vmatpush1.bf16.msra.mxu0 0
          %1608 = vmatprep.subr.bf16.mxu0 0
          %1609 = vmatpush1.bf16.msra.mxu0 0
          %1610 = vmatprep.subr.bf16.mxu0 0
          %1611 = vmatpush1.bf16.msra.mxu0 0
          %1612 = vmatprep.subr.bf16.mxu0 0
          %1613 = vmatpush1.bf16.msra.mxu0 0
          %1614 = vmatprep.subr.bf16.mxu0 0
          %1615 = vmatpush1.bf16.msra.mxu0 0
          %1616 = vmatprep.mubr.bf16.mxu0 0
          %1617 = vmatmul.mubr.bf16.gmra.mrb[0].mxu0 %v1582
          %v1618 = vpop.f32.mrb[0].mxu0
          %v1619 = vadd.f32 0.0, %v1618
          %v1620 = vpop.f32.mrb[0].mxu0
          %v1621 = vpop.f32.mrb[0].mxu0
          %v1622 = vadd.f32 0.0, %v1621
          %v1623 = vpop.f32.mrb[0].mxu0
          %1624 = vdwg.mxu0
          %v1625 = vpack.c.bf16 %v1622, %v1619
          %v1626 = vld [vmem:[%s2 + $0x60] sm:$0xf]
          %v1627 = vld [vmem:[%s2 + $0x64] sm:$0xf]
          %v1628 = vld [vmem:[%s2 + $0x68] sm:$0xf]
          %v1629 = vld [vmem:[%s2 + $0x6c] sm:$0xf]
          %v1630 = vld [vmem:[%s2 + $0x70] sm:$0xf]
          %v1631 = vld [vmem:[%s2 + $0x74] sm:$0xf]
          %v1632 = vld [vmem:[%s2 + $0x78] sm:$0xf]
          %v1633 = vld [vmem:[%s2 + $0x7c] sm:$0xf]
          %v1642 = vunpack.c.l.b16 %v1626
          %v1643 = vunpack.c.l.b16 %v1627
          %v1644 = vunpack.c.l.b16 %v1628
          %v1645 = vunpack.c.l.b16 %v1629
          %v1646 = vunpack.c.l.b16 %v1630
          %v1647 = vunpack.c.l.b16 %v1631
          %v1648 = vunpack.c.l.b16 %v1632
          %v1649 = vunpack.c.l.b16 %v1633
          %v1650 = vpack.c.b16 %v1643, %v1642
          %v1651 = vpack.c.b16 %v1645, %v1644
          %v1652 = vpack.c.b16 %v1647, %v1646
          %v1653 = vpack.c.b16 %v1649, %v1648
          %v1659 = vsel %vm874, %v1625, 0
          %1661 = vmatprep.subr.bf16.mxu0 0
          %1662 = vmatpush1.bf16.msra.mxu0 %v1650
          %1663 = vmatprep.subr.bf16.mxu0 0
          %1664 = vmatpush1.bf16.msra.mxu0 %v1651
          %1665 = vmatprep.subr.bf16.mxu0 0
          %1666 = vmatpush1.bf16.msra.mxu0 %v1652
          %1667 = vmatprep.subr.bf16.mxu0 0
          %1668 = vmatpush1.bf16.msra.mxu0 %v1653
          %1669 = vmatprep.subr.bf16.mxu0 0
          %1670 = vmatpush1.bf16.msra.mxu0 0
          %1671 = vmatprep.subr.bf16.mxu0 0
          %1672 = vmatpush1.bf16.msra.mxu0 0
          %1673 = vmatprep.subr.bf16.mxu0 0
          %1674 = vmatpush1.bf16.msra.mxu0 0
          %1675 = vmatprep.subr.bf16.mxu0 0
          %1676 = vmatpush1.bf16.msra.mxu0 0
          %1677 = vmatprep.subr.bf16.mxu0 0
          %1678 = vmatpush1.bf16.msra.mxu0 0
          %1679 = vmatprep.subr.bf16.mxu0 0
          %1680 = vmatpush1.bf16.msra.mxu0 0
          %1681 = vmatprep.subr.bf16.mxu0 0
          %1682 = vmatpush1.bf16.msra.mxu0 0
          %1683 = vmatprep.subr.bf16.mxu0 0
          %1684 = vmatpush1.bf16.msra.mxu0 0
          %1685 = vmatprep.subr.bf16.mxu0 0
          %1686 = vmatpush1.bf16.msra.mxu0 0
          %1687 = vmatprep.subr.bf16.mxu0 0
          %1688 = vmatpush1.bf16.msra.mxu0 0
          %1689 = vmatprep.subr.bf16.mxu0 0
          %1690 = vmatpush1.bf16.msra.mxu0 0
          %1691 = vmatprep.subr.bf16.mxu0 0
          %1692 = vmatpush1.bf16.msra.mxu0 0
          %1693 = vmatprep.mubr.bf16.mxu0 0
          %1694 = vmatmul.mubr.bf16.gmra.mrb[0].mxu0 %v1659
          %v1695 = vpop.f32.mrb[0].mxu0
          %v1696 = vadd.f32 0.0, %v1695
          %v1697 = vpop.f32.mrb[0].mxu0
          %v1698 = vpop.f32.mrb[0].mxu0
          %v1699 = vadd.f32 0.0, %v1698
          %v1700 = vpop.f32.mrb[0].mxu0
          %1701 = vdwg.mxu0
          %v1702 = vadd.f32 %v1484, %v1696
          %v1703 = vadd.f32 %v1485, %v1699
          %v1704 = vld [vmem:[%s863 + $0x10] sm:$0xff]
          %v1705 = vld [vmem:[%s869 + $0x30] sm:$0xff]
          %v1706 = vld [vmem:[%s869 + $0x90] sm:$0xff]
          %v1707 = vld [vmem:[%s869 + $0x50] sm:$0xff]
          %v1708 = vld [vmem:[%s869 + $0xb0] sm:$0xff]
          %v1710 = vsel %vm874, %v1704, 0
          %v1713 = vsel %vm874, %v1705, 0
          %v1716 = vsel %vm874, %v1706, 0
          %1718 = vmatprep.subr.bf16.mxu0 0
          %1719 = vmatpush1.bf16.xpose.msra.mxu0 %v1713
          %1720 = vmatprep.subr.bf16.mxu0 0
          %1721 = vmatpush1.bf16.xpose.msra.mxu0 %v1716
          %1722 = vmatprep.subr.bf16.mxu0 0
          %1723 = vmatpush1.bf16.xpose.msra.mxu0 0
          %1724 = vmatprep.subr.bf16.mxu0 0
          %1725 = vmatpush1.bf16.xpose.msra.mxu0 0
          %1726 = vmatprep.subr.bf16.mxu0 0
          %1727 = vmatpush1.bf16.xpose.msra.mxu0 0
          %1728 = vmatprep.subr.bf16.mxu0 0
          %1729 = vmatpush1.bf16.xpose.msra.mxu0 0
          %1730 = vmatprep.subr.bf16.mxu0 0
          %1731 = vmatpush1.bf16.xpose.msra.mxu0 0
          %1732 = vmatprep.subr.bf16.mxu0 0
          %1733 = vmatpush1.bf16.xpose.msra.mxu0 0
          %1734 = vmatprep.subr.bf16.mxu0 0
          %1735 = vmatpush1.bf16.xpose.msra.mxu0 0
          %1736 = vmatprep.subr.bf16.mxu0 0
          %1737 = vmatpush1.bf16.xpose.msra.mxu0 0
          %1738 = vmatprep.subr.bf16.mxu0 0
          %1739 = vmatpush1.bf16.xpose.msra.mxu0 0
          %1740 = vmatprep.subr.bf16.mxu0 0
          %1741 = vmatpush1.bf16.xpose.msra.mxu0 0
          %1742 = vmatprep.subr.bf16.mxu0 0
          %1743 = vmatpush1.bf16.xpose.msra.mxu0 0
          %1744 = vmatprep.subr.bf16.mxu0 0
          %1745 = vmatpush1.bf16.xpose.msra.mxu0 0
          %1746 = vmatprep.subr.bf16.mxu0 0
          %1747 = vmatpush1.bf16.xpose.msra.mxu0 0
          %1748 = vmatprep.subr.bf16.mxu0 0
          %1749 = vmatpush1.bf16.xpose.msra.mxu0 0
          %1750 = vmatprep.mubr.bf16.mxu0 0
          %1751 = vmatmul.mubr.bf16.gmra.mrb[0].mxu0 %v1710
          %v1752 = vpop.f32.mrb[0].mxu0
          %v1753 = vadd.f32 %v857, %v1752
          %v1754 = vpop.f32.mrb[0].mxu0
          %v1755 = vpop.f32.mrb[0].mxu0
          %v1756 = vadd.f32 %v858, %v1755
          %v1757 = vpop.f32.mrb[0].mxu0
          %1758 = vdwg.mxu0
          %v1759 = vsel %vm455, %v1753, -inf
          %1760 = vmax.xlane.f32.xlu0 %v1759
          %v1761 = vpop.xlane.xlu0 %1760
          %v1762 = vsel %vm455, %v1756, -inf
          %1763 = vmax.xlane.f32.xlu0 %v1762
          %v1764 = vpop.xlane.xlu0 %1763
          %v1765 = vsub.f32 %v1753, %v1761
          %v1766 = vsub.f32 %v1756, %v1764
          %v1767 = vmul.f32 %v1765, 1.442695
          %v1768 = vpow.pop %v1767
          %v1769 = vmul.f32 %v1766, 1.442695
          %v1770 = vpow.pop %v1769
          %v1771 = vsel %vm455, %v1768, 0.0
          %1772 = vadd.xlane.f32.xlu0 %v1771
          %v1773 = vpop.xlane.xlu0 %1772
          %v1774 = vsel %vm455, %v1770, 0.0
          %1775 = vadd.xlane.f32.xlu0 %v1774
          %v1776 = vpop.xlane.xlu0 %1775
          %v1777 = vrcp.pop %v1773
          %v1778 = vrcp.pop %v1776
          %v1779 = vmul.f32 %v1768, %v1777
          %v1780 = vmul.f32 %v1770, %v1778
          %v1781 = vpack.c.bf16 %v1780, %v1779
          %v1783 = vsel %vm455, %v1781, 0
          %1785 = vmatprep.subr.bf16.mxu0 0
          %1786 = vmatpush1.bf16.msra.mxu0 %v1707
          %1787 = vmatprep.subr.bf16.mxu0 0
          %1788 = vmatpush1.bf16.msra.mxu0 %v1708
          %1789 = vmatprep.subr.bf16.mxu0 0
          %1790 = vmatpush1.bf16.msra.mxu0 0
          %1791 = vmatprep.subr.bf16.mxu0 0
          %1792 = vmatpush1.bf16.msra.mxu0 0
          %1793 = vmatprep.subr.bf16.mxu0 0
          %1794 = vmatpush1.bf16.msra.mxu0 0
          %1795 = vmatprep.subr.bf16.mxu0 0
          %1796 = vmatpush1.bf16.msra.mxu0 0
          %1797 = vmatprep.subr.bf16.mxu0 0
          %1798 = vmatpush1.bf16.msra.mxu0 0
          %1799 = vmatprep.subr.bf16.mxu0 0
          %1800 = vmatpush1.bf16.msra.mxu0 0
          %1801 = vmatprep.subr.bf16.mxu0 0
          %1802 = vmatpush1.bf16.msra.mxu0 0
          %1803 = vmatprep.subr.bf16.mxu0 0
          %1804 = vmatpush1.bf16.msra.mxu0 0
          %1805 = vmatprep.subr.bf16.mxu0 0
          %1806 = vmatpush1.bf16.msra.mxu0 0
          %1807 = vmatprep.subr.bf16.mxu0 0
          %1808 = vmatpush1.bf16.msra.mxu0 0
          %1809 = vmatprep.subr.bf16.mxu0 0
          %1810 = vmatpush1.bf16.msra.mxu0 0
          %1811 = vmatprep.subr.bf16.mxu0 0
          %1812 = vmatpush1.bf16.msra.mxu0 0
          %1813 = vmatprep.subr.bf16.mxu0 0
          %1814 = vmatpush1.bf16.msra.mxu0 0
          %1815 = vmatprep.subr.bf16.mxu0 0
          %1816 = vmatpush1.bf16.msra.mxu0 0
          %1817 = vmatprep.mubr.bf16.mxu0 0
          %1818 = vmatmul.mubr.bf16.gmra.mrb[0].mxu0 %v1783
          %v1819 = vpop.f32.mrb[0].mxu0
          %v1820 = vadd.f32 0.0, %v1819
          %v1821 = vpop.f32.mrb[0].mxu0
          %v1822 = vpop.f32.mrb[0].mxu0
          %v1823 = vadd.f32 0.0, %v1822
          %v1824 = vpop.f32.mrb[0].mxu0
          %1825 = vdwg.mxu0
          %v1826 = vpack.c.bf16 %v1823, %v1820
          %v1827 = vld [vmem:[%s2 + $0x80] sm:$0xf]
          %v1828 = vld [vmem:[%s2 + $0x84] sm:$0xf]
          %v1829 = vld [vmem:[%s2 + $0x88] sm:$0xf]
          %v1830 = vld [vmem:[%s2 + $0x8c] sm:$0xf]
          %v1831 = vld [vmem:[%s2 + $0x90] sm:$0xf]
          %v1832 = vld [vmem:[%s2 + $0x94] sm:$0xf]
          %v1833 = vld [vmem:[%s2 + $0x98] sm:$0xf]
          %v1834 = vld [vmem:[%s2 + $0x9c] sm:$0xf]
          %v1843 = vunpack.c.l.b16 %v1827
          %v1844 = vunpack.c.l.b16 %v1828
          %v1845 = vunpack.c.l.b16 %v1829
          %v1846 = vunpack.c.l.b16 %v1830
          %v1847 = vunpack.c.l.b16 %v1831
          %v1848 = vunpack.c.l.b16 %v1832
          %v1849 = vunpack.c.l.b16 %v1833
          %v1850 = vunpack.c.l.b16 %v1834
          %v1851 = vpack.c.b16 %v1844, %v1843
          %v1852 = vpack.c.b16 %v1846, %v1845
          %v1853 = vpack.c.b16 %v1848, %v1847
          %v1854 = vpack.c.b16 %v1850, %v1849
          %v1860 = vsel %vm874, %v1826, 0
          %1862 = vmatprep.subr.bf16.mxu0 0
          %1863 = vmatpush1.bf16.msra.mxu0 %v1851
          %1864 = vmatprep.subr.bf16.mxu0 0
          %1865 = vmatpush1.bf16.msra.mxu0 %v1852
          %1866 = vmatprep.subr.bf16.mxu0 0
          %1867 = vmatpush1.bf16.msra.mxu0 %v1853
          %1868 = vmatprep.subr.bf16.mxu0 0
          %1869 = vmatpush1.bf16.msra.mxu0 %v1854
          %1870 = vmatprep.subr.bf16.mxu0 0
          %1871 = vmatpush1.bf16.msra.mxu0 0
          %1872 = vmatprep.subr.bf16.mxu0 0
          %1873 = vmatpush1.bf16.msra.mxu0 0
          %1874 = vmatprep.subr.bf16.mxu0 0
          %1875 = vmatpush1.bf16.msra.mxu0 0
          %1876 = vmatprep.subr.bf16.mxu0 0
          %1877 = vmatpush1.bf16.msra.mxu0 0
          %1878 = vmatprep.subr.bf16.mxu0 0
          %1879 = vmatpush1.bf16.msra.mxu0 0
          %1880 = vmatprep.subr.bf16.mxu0 0
          %1881 = vmatpush1.bf16.msra.mxu0 0
          %1882 = vmatprep.subr.bf16.mxu0 0
          %1883 = vmatpush1.bf16.msra.mxu0 0
          %1884 = vmatprep.subr.bf16.mxu0 0
          %1885 = vmatpush1.bf16.msra.mxu0 0
          %1886 = vmatprep.subr.bf16.mxu0 0
          %1887 = vmatpush1.bf16.msra.mxu0 0
          %1888 = vmatprep.subr.bf16.mxu0 0
          %1889 = vmatpush1.bf16.msra.mxu0 0
          %1890 = vmatprep.subr.bf16.mxu0 0
          %1891 = vmatpush1.bf16.msra.mxu0 0
          %1892 = vmatprep.subr.bf16.mxu0 0
          %1893 = vmatpush1.bf16.msra.mxu0 0
          %1894 = vmatprep.mubr.bf16.mxu0 0
          %1895 = vmatmul.mubr.bf16.gmra.mrb[0].mxu0 %v1860
          %v1896 = vpop.f32.mrb[0].mxu0
          %v1897 = vadd.f32 0.0, %v1896
          %v1898 = vpop.f32.mrb[0].mxu0
          %v1899 = vpop.f32.mrb[0].mxu0
          %v1900 = vadd.f32 0.0, %v1899
          %v1901 = vpop.f32.mrb[0].mxu0
          %1902 = vdwg.mxu0
          %v1903 = vadd.f32 %v1702, %v1897
          %v1904 = vadd.f32 %v1703, %v1900
          %v1905 = vld [vmem:[%s863 + $0x10] sm:$0xff]
          %v1906 = vld [vmem:[%s869 + $0x30] sm:$0xff]
          %v1907 = vld [vmem:[%s869 + $0x90] sm:$0xff]
          %v1908 = vld [vmem:[%s869 + $0x50] sm:$0xff]
          %v1909 = vld [vmem:[%s869 + $0xb0] sm:$0xff]
          %1911 = vrot.lane.b32.xlu0 %v1905, 64
          %v1912 = vpop.permute.xlu0 %1911
          %1915 = vrot.lane.b32.xlu0 %v1906, 64
          %v1916 = vpop.permute.xlu0 %1915
          %1917 = vrot.lane.b32.xlu0 %v1907, 64
          %v1918 = vpop.permute.xlu0 %1917
          %v1920 = vsel %vm874, %v1912, 0
          %v1923 = vsel %vm874, %v1916, 0
          %v1926 = vsel %vm874, %v1918, 0
          %1928 = vmatprep.subr.bf16.mxu0 0
          %1929 = vmatpush1.bf16.xpose.msra.mxu0 %v1923
          %1930 = vmatprep.subr.bf16.mxu0 0
          %1931 = vmatpush1.bf16.xpose.msra.mxu0 %v1926
          %1932 = vmatprep.subr.bf16.mxu0 0
          %1933 = vmatpush1.bf16.xpose.msra.mxu0 0
          %1934 = vmatprep.subr.bf16.mxu0 0
          %1935 = vmatpush1.bf16.xpose.msra.mxu0 0
          %1936 = vmatprep.subr.bf16.mxu0 0
          %1937 = vmatpush1.bf16.xpose.msra.mxu0 0
          %1938 = vmatprep.subr.bf16.mxu0 0
          %1939 = vmatpush1.bf16.xpose.msra.mxu0 0
          %1940 = vmatprep.subr.bf16.mxu0 0
          %1941 = vmatpush1.bf16.xpose.msra.mxu0 0
          %1942 = vmatprep.subr.bf16.mxu0 0
          %1943 = vmatpush1.bf16.xpose.msra.mxu0 0
          %1944 = vmatprep.subr.bf16.mxu0 0
          %1945 = vmatpush1.bf16.xpose.msra.mxu0 0
          %1946 = vmatprep.subr.bf16.mxu0 0
          %1947 = vmatpush1.bf16.xpose.msra.mxu0 0
          %1948 = vmatprep.subr.bf16.mxu0 0
          %1949 = vmatpush1.bf16.xpose.msra.mxu0 0
          %1950 = vmatprep.subr.bf16.mxu0 0
          %1951 = vmatpush1.bf16.xpose.msra.mxu0 0
          %1952 = vmatprep.subr.bf16.mxu0 0
          %1953 = vmatpush1.bf16.xpose.msra.mxu0 0
          %1954 = vmatprep.subr.bf16.mxu0 0
          %1955 = vmatpush1.bf16.xpose.msra.mxu0 0
          %1956 = vmatprep.subr.bf16.mxu0 0
          %1957 = vmatpush1.bf16.xpose.msra.mxu0 0
          %1958 = vmatprep.subr.bf16.mxu0 0
          %1959 = vmatpush1.bf16.xpose.msra.mxu0 0
          %1960 = vmatprep.mubr.bf16.mxu0 0
          %1961 = vmatmul.mubr.bf16.gmra.mrb[0].mxu0 %v1920
          %v1962 = vpop.f32.mrb[0].mxu0
          %v1963 = vadd.f32 %v857, %v1962
          %v1964 = vpop.f32.mrb[0].mxu0
          %v1965 = vpop.f32.mrb[0].mxu0
          %v1966 = vadd.f32 %v858, %v1965
          %v1967 = vpop.f32.mrb[0].mxu0
          %1968 = vdwg.mxu0
          %v1969 = vsel %vm455, %v1963, -inf
          %1970 = vmax.xlane.f32.xlu0 %v1969
          %v1971 = vpop.xlane.xlu0 %1970
          %v1972 = vsel %vm455, %v1966, -inf
          %1973 = vmax.xlane.f32.xlu0 %v1972
          %v1974 = vpop.xlane.xlu0 %1973
          %v1975 = vsub.f32 %v1963, %v1971
          %v1976 = vsub.f32 %v1966, %v1974
          %v1977 = vmul.f32 %v1975, 1.442695
          %v1978 = vpow.pop %v1977
          %v1979 = vmul.f32 %v1976, 1.442695
          %v1980 = vpow.pop %v1979
          %v1981 = vsel %vm455, %v1978, 0.0
          %1982 = vadd.xlane.f32.xlu0 %v1981
          %v1983 = vpop.xlane.xlu0 %1982
          %v1984 = vsel %vm455, %v1980, 0.0
          %1985 = vadd.xlane.f32.xlu0 %v1984
          %v1986 = vpop.xlane.xlu0 %1985
          %v1987 = vrcp.pop %v1983
          %v1988 = vrcp.pop %v1986
          %v1989 = vmul.f32 %v1978, %v1987
          %v1990 = vmul.f32 %v1980, %v1988
          %v1991 = vpack.c.bf16 %v1990, %v1989
          %1994 = vrot.lane.b32.xlu0 %v1908, 64
          %v1995 = vpop.permute.xlu0 %1994
          %1996 = vrot.lane.b32.xlu0 %v1909, 64
          %v1997 = vpop.permute.xlu0 %1996
          %v2001 = vsel %vm455, %v1991, 0
          %2003 = vmatprep.subr.bf16.mxu0 0
          %2004 = vmatpush1.bf16.msra.mxu0 %v1995
          %2005 = vmatprep.subr.bf16.mxu0 0
          %2006 = vmatpush1.bf16.msra.mxu0 %v1997
          %2007 = vmatprep.subr.bf16.mxu0 0
          %2008 = vmatpush1.bf16.msra.mxu0 0
          %2009 = vmatprep.subr.bf16.mxu0 0
          %2010 = vmatpush1.bf16.msra.mxu0 0
          %2011 = vmatprep.subr.bf16.mxu0 0
          %2012 = vmatpush1.bf16.msra.mxu0 0
          %2013 = vmatprep.subr.bf16.mxu0 0
          %2014 = vmatpush1.bf16.msra.mxu0 0
          %2015 = vmatprep.subr.bf16.mxu0 0
          %2016 = vmatpush1.bf16.msra.mxu0 0
          %2017 = vmatprep.subr.bf16.mxu0 0
          %2018 = vmatpush1.bf16.msra.mxu0 0
          %2019 = vmatprep.subr.bf16.mxu0 0
          %2020 = vmatpush1.bf16.msra.mxu0 0
          %2021 = vmatprep.subr.bf16.mxu0 0
          %2022 = vmatpush1.bf16.msra.mxu0 0
          %2023 = vmatprep.subr.bf16.mxu0 0
          %2024 = vmatpush1.bf16.msra.mxu0 0
          %2025 = vmatprep.subr.bf16.mxu0 0
          %2026 = vmatpush1.bf16.msra.mxu0 0
          %2027 = vmatprep.subr.bf16.mxu0 0
          %2028 = vmatpush1.bf16.msra.mxu0 0
          %2029 = vmatprep.subr.bf16.mxu0 0
          %2030 = vmatpush1.bf16.msra.mxu0 0
          %2031 = vmatprep.subr.bf16.mxu0 0
          %2032 = vmatpush1.bf16.msra.mxu0 0
          %2033 = vmatprep.subr.bf16.mxu0 0
          %2034 = vmatpush1.bf16.msra.mxu0 0
          %2035 = vmatprep.mubr.bf16.mxu0 0
          %2036 = vmatmul.mubr.bf16.gmra.mrb[0].mxu0 %v2001
          %v2037 = vpop.f32.mrb[0].mxu0
          %v2038 = vadd.f32 0.0, %v2037
          %v2039 = vpop.f32.mrb[0].mxu0
          %v2040 = vpop.f32.mrb[0].mxu0
          %v2041 = vadd.f32 0.0, %v2040
          %v2042 = vpop.f32.mrb[0].mxu0
          %2043 = vdwg.mxu0
          %v2044 = vpack.c.bf16 %v2041, %v2038
          %v2045 = vld [vmem:[%s2 + $0xa0] sm:$0xf]
          %v2046 = vld [vmem:[%s2 + $0xa4] sm:$0xf]
          %v2047 = vld [vmem:[%s2 + $0xa8] sm:$0xf]
          %v2048 = vld [vmem:[%s2 + $0xac] sm:$0xf]
          %v2049 = vld [vmem:[%s2 + $0xb0] sm:$0xf]
          %v2050 = vld [vmem:[%s2 + $0xb4] sm:$0xf]
          %v2051 = vld [vmem:[%s2 + $0xb8] sm:$0xf]
          %v2052 = vld [vmem:[%s2 + $0xbc] sm:$0xf]
          %v2061 = vunpack.c.l.b16 %v2045
          %v2062 = vunpack.c.l.b16 %v2046
          %v2063 = vunpack.c.l.b16 %v2047
          %v2064 = vunpack.c.l.b16 %v2048
          %v2065 = vunpack.c.l.b16 %v2049
          %v2066 = vunpack.c.l.b16 %v2050
          %v2067 = vunpack.c.l.b16 %v2051
          %v2068 = vunpack.c.l.b16 %v2052
          %v2069 = vpack.c.b16 %v2062, %v2061
          %v2070 = vpack.c.b16 %v2064, %v2063
          %v2071 = vpack.c.b16 %v2066, %v2065
          %v2072 = vpack.c.b16 %v2068, %v2067
          %v2078 = vsel %vm874, %v2044, 0
          %2080 = vmatprep.subr.bf16.mxu0 0
          %2081 = vmatpush1.bf16.msra.mxu0 %v2069
          %2082 = vmatprep.subr.bf16.mxu0 0
          %2083 = vmatpush1.bf16.msra.mxu0 %v2070
          %2084 = vmatprep.subr.bf16.mxu0 0
          %2085 = vmatpush1.bf16.msra.mxu0 %v2071
          %2086 = vmatprep.subr.bf16.mxu0 0
          %2087 = vmatpush1.bf16.msra.mxu0 %v2072
          %2088 = vmatprep.subr.bf16.mxu0 0
          %2089 = vmatpush1.bf16.msra.mxu0 0
          %2090 = vmatprep.subr.bf16.mxu0 0
          %2091 = vmatpush1.bf16.msra.mxu0 0
          %2092 = vmatprep.subr.bf16.mxu0 0
          %2093 = vmatpush1.bf16.msra.mxu0 0
          %2094 = vmatprep.subr.bf16.mxu0 0
          %2095 = vmatpush1.bf16.msra.mxu0 0
          %2096 = vmatprep.subr.bf16.mxu0 0
          %2097 = vmatpush1.bf16.msra.mxu0 0
          %2098 = vmatprep.subr.bf16.mxu0 0
          %2099 = vmatpush1.bf16.msra.mxu0 0
          %2100 = vmatprep.subr.bf16.mxu0 0
          %2101 = vmatpush1.bf16.msra.mxu0 0
          %2102 = vmatprep.subr.bf16.mxu0 0
          %2103 = vmatpush1.bf16.msra.mxu0 0
          %2104 = vmatprep.subr.bf16.mxu0 0
          %2105 = vmatpush1.bf16.msra.mxu0 0
          %2106 = vmatprep.subr.bf16.mxu0 0
          %2107 = vmatpush1.bf16.msra.mxu0 0
          %2108 = vmatprep.subr.bf16.mxu0 0
          %2109 = vmatpush1.bf16.msra.mxu0 0
          %2110 = vmatprep.subr.bf16.mxu0 0
          %2111 = vmatpush1.bf16.msra.mxu0 0
          %2112 = vmatprep.mubr.bf16.mxu0 0
          %2113 = vmatmul.mubr.bf16.gmra.mrb[0].mxu0 %v2078
          %v2114 = vpop.f32.mrb[0].mxu0
          %v2115 = vadd.f32 0.0, %v2114
          %v2116 = vpop.f32.mrb[0].mxu0
          %v2117 = vpop.f32.mrb[0].mxu0
          %v2118 = vadd.f32 0.0, %v2117
          %v2119 = vpop.f32.mrb[0].mxu0
          %2120 = vdwg.mxu0
          %v2121 = vadd.f32 %v1903, %v2115
          %v2122 = vadd.f32 %v1904, %v2118
          %v2123 = vld [vmem:[%s863 + $0x18] sm:$0xff]
          %v2124 = vld [vmem:[%s869 + $0x38] sm:$0xff]
          %v2125 = vld [vmem:[%s869 + $0x98] sm:$0xff]
          %v2126 = vld [vmem:[%s869 + $0x58] sm:$0xff]
          %v2127 = vld [vmem:[%s869 + $0xb8] sm:$0xff]
          %v2129 = vsel %vm874, %v2123, 0
          %v2132 = vsel %vm874, %v2124, 0
          %v2135 = vsel %vm874, %v2125, 0
          %2137 = vmatprep.subr.bf16.mxu0 0
          %2138 = vmatpush1.bf16.xpose.msra.mxu0 %v2132
          %2139 = vmatprep.subr.bf16.mxu0 0
          %2140 = vmatpush1.bf16.xpose.msra.mxu0 %v2135
          %2141 = vmatprep.subr.bf16.mxu0 0
          %2142 = vmatpush1.bf16.xpose.msra.mxu0 0
          %2143 = vmatprep.subr.bf16.mxu0 0
          %2144 = vmatpush1.bf16.xpose.msra.mxu0 0
          %2145 = vmatprep.subr.bf16.mxu0 0
          %2146 = vmatpush1.bf16.xpose.msra.mxu0 0
          %2147 = vmatprep.subr.bf16.mxu0 0
          %2148 = vmatpush1.bf16.xpose.msra.mxu0 0
          %2149 = vmatprep.subr.bf16.mxu0 0
          %2150 = vmatpush1.bf16.xpose.msra.mxu0 0
          %2151 = vmatprep.subr.bf16.mxu0 0
          %2152 = vmatpush1.bf16.xpose.msra.mxu0 0
          %2153 = vmatprep.subr.bf16.mxu0 0
          %2154 = vmatpush1.bf16.xpose.msra.mxu0 0
          %2155 = vmatprep.subr.bf16.mxu0 0
          %2156 = vmatpush1.bf16.xpose.msra.mxu0 0
          %2157 = vmatprep.subr.bf16.mxu0 0
          %2158 = vmatpush1.bf16.xpose.msra.mxu0 0
          %2159 = vmatprep.subr.bf16.mxu0 0
          %2160 = vmatpush1.bf16.xpose.msra.mxu0 0
          %2161 = vmatprep.subr.bf16.mxu0 0
          %2162 = vmatpush1.bf16.xpose.msra.mxu0 0
          %2163 = vmatprep.subr.bf16.mxu0 0
          %2164 = vmatpush1.bf16.xpose.msra.mxu0 0
          %2165 = vmatprep.subr.bf16.mxu0 0
          %2166 = vmatpush1.bf16.xpose.msra.mxu0 0
          %2167 = vmatprep.subr.bf16.mxu0 0
          %2168 = vmatpush1.bf16.xpose.msra.mxu0 0
          %2169 = vmatprep.mubr.bf16.mxu0 0
          %2170 = vmatmul.mubr.bf16.gmra.mrb[0].mxu0 %v2129
          %v2171 = vpop.f32.mrb[0].mxu0
          %v2172 = vadd.f32 %v857, %v2171
          %v2173 = vpop.f32.mrb[0].mxu0
          %v2174 = vpop.f32.mrb[0].mxu0
          %v2175 = vadd.f32 %v858, %v2174
          %v2176 = vpop.f32.mrb[0].mxu0
          %2177 = vdwg.mxu0
          %v2178 = vsel %vm455, %v2172, -inf
          %2179 = vmax.xlane.f32.xlu0 %v2178
          %v2180 = vpop.xlane.xlu0 %2179
          %v2181 = vsel %vm455, %v2175, -inf
          %2182 = vmax.xlane.f32.xlu0 %v2181
          %v2183 = vpop.xlane.xlu0 %2182
          %v2184 = vsub.f32 %v2172, %v2180
          %v2185 = vsub.f32 %v2175, %v2183
          %v2186 = vmul.f32 %v2184, 1.442695
          %v2187 = vpow.pop %v2186
          %v2188 = vmul.f32 %v2185, 1.442695
          %v2189 = vpow.pop %v2188
          %v2190 = vsel %vm455, %v2187, 0.0
          %2191 = vadd.xlane.f32.xlu0 %v2190
          %v2192 = vpop.xlane.xlu0 %2191
          %v2193 = vsel %vm455, %v2189, 0.0
          %2194 = vadd.xlane.f32.xlu0 %v2193
          %v2195 = vpop.xlane.xlu0 %2194
          %v2196 = vrcp.pop %v2192
          %v2197 = vrcp.pop %v2195
          %v2198 = vmul.f32 %v2187, %v2196
          %v2199 = vmul.f32 %v2189, %v2197
          %v2200 = vpack.c.bf16 %v2199, %v2198
          %v2202 = vsel %vm455, %v2200, 0
          %2204 = vmatprep.subr.bf16.mxu0 0
          %2205 = vmatpush1.bf16.msra.mxu0 %v2126
          %2206 = vmatprep.subr.bf16.mxu0 0
          %2207 = vmatpush1.bf16.msra.mxu0 %v2127
          %2208 = vmatprep.subr.bf16.mxu0 0
          %2209 = vmatpush1.bf16.msra.mxu0 0
          %2210 = vmatprep.subr.bf16.mxu0 0
          %2211 = vmatpush1.bf16.msra.mxu0 0
          %2212 = vmatprep.subr.bf16.mxu0 0
          %2213 = vmatpush1.bf16.msra.mxu0 0
          %2214 = vmatprep.subr.bf16.mxu0 0
          %2215 = vmatpush1.bf16.msra.mxu0 0
          %2216 = vmatprep.subr.bf16.mxu0 0
          %2217 = vmatpush1.bf16.msra.mxu0 0
          %2218 = vmatprep.subr.bf16.mxu0 0
          %2219 = vmatpush1.bf16.msra.mxu0 0
          %2220 = vmatprep.subr.bf16.mxu0 0
          %2221 = vmatpush1.bf16.msra.mxu0 0
          %2222 = vmatprep.subr.bf16.mxu0 0
          %2223 = vmatpush1.bf16.msra.mxu0 0
          %2224 = vmatprep.subr.bf16.mxu0 0
          %2225 = vmatpush1.bf16.msra.mxu0 0
          %2226 = vmatprep.subr.bf16.mxu0 0
          %2227 = vmatpush1.bf16.msra.mxu0 0
          %2228 = vmatprep.subr.bf16.mxu0 0
          %2229 = vmatpush1.bf16.msra.mxu0 0
          %2230 = vmatprep.subr.bf16.mxu0 0
          %2231 = vmatpush1.bf16.msra.mxu0 0
          %2232 = vmatprep.subr.bf16.mxu0 0
          %2233 = vmatpush1.bf16.msra.mxu0 0
          %2234 = vmatprep.subr.bf16.mxu0 0
          %2235 = vmatpush1.bf16.msra.mxu0 0
          %2236 = vmatprep.mubr.bf16.mxu0 0
          %2237 = vmatmul.mubr.bf16.gmra.mrb[0].mxu0 %v2202
          %v2238 = vpop.f32.mrb[0].mxu0
          %v2239 = vadd.f32 0.0, %v2238
          %v2240 = vpop.f32.mrb[0].mxu0
          %v2241 = vpop.f32.mrb[0].mxu0
          %v2242 = vadd.f32 0.0, %v2241
          %v2243 = vpop.f32.mrb[0].mxu0
          %2244 = vdwg.mxu0
          %v2245 = vpack.c.bf16 %v2242, %v2239
          %v2246 = vld [vmem:[%s2 + $0xc0] sm:$0xf]
          %v2247 = vld [vmem:[%s2 + $0xc4] sm:$0xf]
          %v2248 = vld [vmem:[%s2 + $0xc8] sm:$0xf]
          %v2249 = vld [vmem:[%s2 + $0xcc] sm:$0xf]
          %v2250 = vld [vmem:[%s2 + $0xd0] sm:$0xf]
          %v2251 = vld [vmem:[%s2 + $0xd4] sm:$0xf]
          %v2252 = vld [vmem:[%s2 + $0xd8] sm:$0xf]
          %v2253 = vld [vmem:[%s2 + $0xdc] sm:$0xf]
          %v2262 = vunpack.c.l.b16 %v2246
          %v2263 = vunpack.c.l.b16 %v2247
          %v2264 = vunpack.c.l.b16 %v2248
          %v2265 = vunpack.c.l.b16 %v2249
          %v2266 = vunpack.c.l.b16 %v2250
          %v2267 = vunpack.c.l.b16 %v2251
          %v2268 = vunpack.c.l.b16 %v2252
          %v2269 = vunpack.c.l.b16 %v2253
          %v2270 = vpack.c.b16 %v2263, %v2262
          %v2271 = vpack.c.b16 %v2265, %v2264
          %v2272 = vpack.c.b16 %v2267, %v2266
          %v2273 = vpack.c.b16 %v2269, %v2268
          %v2279 = vsel %vm874, %v2245, 0
          %2281 = vmatprep.subr.bf16.mxu0 0
          %2282 = vmatpush1.bf16.msra.mxu0 %v2270
          %2283 = vmatprep.subr.bf16.mxu0 0
          %2284 = vmatpush1.bf16.msra.mxu0 %v2271
          %2285 = vmatprep.subr.bf16.mxu0 0
          %2286 = vmatpush1.bf16.msra.mxu0 %v2272
          %2287 = vmatprep.subr.bf16.mxu0 0
          %2288 = vmatpush1.bf16.msra.mxu0 %v2273
          %2289 = vmatprep.subr.bf16.mxu0 0
          %2290 = vmatpush1.bf16.msra.mxu0 0
          %2291 = vmatprep.subr.bf16.mxu0 0
          %2292 = vmatpush1.bf16.msra.mxu0 0
          %2293 = vmatprep.subr.bf16.mxu0 0
          %2294 = vmatpush1.bf16.msra.mxu0 0
          %2295 = vmatprep.subr.bf16.mxu0 0
          %2296 = vmatpush1.bf16.msra.mxu0 0
          %2297 = vmatprep.subr.bf16.mxu0 0
          %2298 = vmatpush1.bf16.msra.mxu0 0
          %2299 = vmatprep.subr.bf16.mxu0 0
          %2300 = vmatpush1.bf16.msra.mxu0 0
          %2301 = vmatprep.subr.bf16.mxu0 0
          %2302 = vmatpush1.bf16.msra.mxu0 0
          %2303 = vmatprep.subr.bf16.mxu0 0
          %2304 = vmatpush1.bf16.msra.mxu0 0
          %2305 = vmatprep.subr.bf16.mxu0 0
          %2306 = vmatpush1.bf16.msra.mxu0 0
          %2307 = vmatprep.subr.bf16.mxu0 0
          %2308 = vmatpush1.bf16.msra.mxu0 0
          %2309 = vmatprep.subr.bf16.mxu0 0
          %2310 = vmatpush1.bf16.msra.mxu0 0
          %2311 = vmatprep.subr.bf16.mxu0 0
          %2312 = vmatpush1.bf16.msra.mxu0 0
          %2313 = vmatprep.mubr.bf16.mxu0 0
          %2314 = vmatmul.mubr.bf16.gmra.mrb[0].mxu0 %v2279
          %v2315 = vpop.f32.mrb[0].mxu0
          %v2316 = vadd.f32 0.0, %v2315
          %v2317 = vpop.f32.mrb[0].mxu0
          %v2318 = vpop.f32.mrb[0].mxu0
          %v2319 = vadd.f32 0.0, %v2318
          %v2320 = vpop.f32.mrb[0].mxu0
          %2321 = vdwg.mxu0
          %v2322 = vadd.f32 %v2121, %v2316
          %v2323 = vadd.f32 %v2122, %v2319
          %v2324 = vld [vmem:[%s863 + $0x18] sm:$0xff]
          %v2325 = vld [vmem:[%s869 + $0x38] sm:$0xff]
          %v2326 = vld [vmem:[%s869 + $0x98] sm:$0xff]
          %v2327 = vld [vmem:[%s869 + $0x58] sm:$0xff]
          %v2328 = vld [vmem:[%s869 + $0xb8] sm:$0xff]
          %2330 = vrot.lane.b32.xlu0 %v2324, 64
          %v2331 = vpop.permute.xlu0 %2330
          %2334 = vrot.lane.b32.xlu0 %v2325, 64
          %v2335 = vpop.permute.xlu0 %2334
          %2336 = vrot.lane.b32.xlu0 %v2326, 64
          %v2337 = vpop.permute.xlu0 %2336
          %v2339 = vsel %vm874, %v2331, 0
          %v2342 = vsel %vm874, %v2335, 0
          %v2345 = vsel %vm874, %v2337, 0
          %2347 = vmatprep.subr.bf16.mxu0 0
          %2348 = vmatpush1.bf16.xpose.msra.mxu0 %v2342
          %2349 = vmatprep.subr.bf16.mxu0 0
          %2350 = vmatpush1.bf16.xpose.msra.mxu0 %v2345
          %2351 = vmatprep.subr.bf16.mxu0 0
          %2352 = vmatpush1.bf16.xpose.msra.mxu0 0
          %2353 = vmatprep.subr.bf16.mxu0 0
          %2354 = vmatpush1.bf16.xpose.msra.mxu0 0
          %2355 = vmatprep.subr.bf16.mxu0 0
          %2356 = vmatpush1.bf16.xpose.msra.mxu0 0
          %2357 = vmatprep.subr.bf16.mxu0 0
          %2358 = vmatpush1.bf16.xpose.msra.mxu0 0
          %2359 = vmatprep.subr.bf16.mxu0 0
          %2360 = vmatpush1.bf16.xpose.msra.mxu0 0
          %2361 = vmatprep.subr.bf16.mxu0 0
          %2362 = vmatpush1.bf16.xpose.msra.mxu0 0
          %2363 = vmatprep.subr.bf16.mxu0 0
          %2364 = vmatpush1.bf16.xpose.msra.mxu0 0
          %2365 = vmatprep.subr.bf16.mxu0 0
          %2366 = vmatpush1.bf16.xpose.msra.mxu0 0
          %2367 = vmatprep.subr.bf16.mxu0 0
          %2368 = vmatpush1.bf16.xpose.msra.mxu0 0
          %2369 = vmatprep.subr.bf16.mxu0 0
          %2370 = vmatpush1.bf16.xpose.msra.mxu0 0
          %2371 = vmatprep.subr.bf16.mxu0 0
          %2372 = vmatpush1.bf16.xpose.msra.mxu0 0
          %2373 = vmatprep.subr.bf16.mxu0 0
          %2374 = vmatpush1.bf16.xpose.msra.mxu0 0
          %2375 = vmatprep.subr.bf16.mxu0 0
          %2376 = vmatpush1.bf16.xpose.msra.mxu0 0
          %2377 = vmatprep.subr.bf16.mxu0 0
          %2378 = vmatpush1.bf16.xpose.msra.mxu0 0
          %2379 = vmatprep.mubr.bf16.mxu0 0
          %2380 = vmatmul.mubr.bf16.gmra.mrb[0].mxu0 %v2339
          %v2381 = vpop.f32.mrb[0].mxu0
          %v2382 = vadd.f32 %v857, %v2381
          %v2383 = vpop.f32.mrb[0].mxu0
          %v2384 = vpop.f32.mrb[0].mxu0
          %v2385 = vadd.f32 %v858, %v2384
          %v2386 = vpop.f32.mrb[0].mxu0
          %2387 = vdwg.mxu0
          %v2388 = vsel %vm455, %v2382, -inf
          %2389 = vmax.xlane.f32.xlu0 %v2388
          %v2390 = vpop.xlane.xlu0 %2389
          %v2391 = vsel %vm455, %v2385, -inf
          %2392 = vmax.xlane.f32.xlu0 %v2391
          %v2393 = vpop.xlane.xlu0 %2392
          %v2394 = vsub.f32 %v2382, %v2390
          %v2395 = vsub.f32 %v2385, %v2393
          %v2396 = vmul.f32 %v2394, 1.442695
          %v2397 = vpow.pop %v2396
          %v2398 = vmul.f32 %v2395, 1.442695
          %v2399 = vpow.pop %v2398
          %v2400 = vsel %vm455, %v2397, 0.0
          %2401 = vadd.xlane.f32.xlu0 %v2400
          %v2402 = vpop.xlane.xlu0 %2401
          %v2403 = vsel %vm455, %v2399, 0.0
          %2404 = vadd.xlane.f32.xlu0 %v2403
          %v2405 = vpop.xlane.xlu0 %2404
          %v2406 = vrcp.pop %v2402
          %v2407 = vrcp.pop %v2405
          %v2408 = vmul.f32 %v2397, %v2406
          %v2409 = vmul.f32 %v2399, %v2407
          %v2410 = vpack.c.bf16 %v2409, %v2408
          %2413 = vrot.lane.b32.xlu0 %v2327, 64
          %v2414 = vpop.permute.xlu0 %2413
          %2415 = vrot.lane.b32.xlu0 %v2328, 64
          %v2416 = vpop.permute.xlu0 %2415
          %v2420 = vsel %vm455, %v2410, 0
          %2422 = vmatprep.subr.bf16.mxu0 0
          %2423 = vmatpush1.bf16.msra.mxu0 %v2414
          %2424 = vmatprep.subr.bf16.mxu0 0
          %2425 = vmatpush1.bf16.msra.mxu0 %v2416
          %2426 = vmatprep.subr.bf16.mxu0 0
          %2427 = vmatpush1.bf16.msra.mxu0 0
          %2428 = vmatprep.subr.bf16.mxu0 0
          %2429 = vmatpush1.bf16.msra.mxu0 0
          %2430 = vmatprep.subr.bf16.mxu0 0
          %2431 = vmatpush1.bf16.msra.mxu0 0
          %2432 = vmatprep.subr.bf16.mxu0 0
          %2433 = vmatpush1.bf16.msra.mxu0 0
          %2434 = vmatprep.subr.bf16.mxu0 0
          %2435 = vmatpush1.bf16.msra.mxu0 0
          %2436 = vmatprep.subr.bf16.mxu0 0
          %2437 = vmatpush1.bf16.msra.mxu0 0
          %2438 = vmatprep.subr.bf16.mxu0 0
          %2439 = vmatpush1.bf16.msra.mxu0 0
          %2440 = vmatprep.subr.bf16.mxu0 0
          %2441 = vmatpush1.bf16.msra.mxu0 0
          %2442 = vmatprep.subr.bf16.mxu0 0
          %2443 = vmatpush1.bf16.msra.mxu0 0
          %2444 = vmatprep.subr.bf16.mxu0 0
          %2445 = vmatpush1.bf16.msra.mxu0 0
          %2446 = vmatprep.subr.bf16.mxu0 0
          %2447 = vmatpush1.bf16.msra.mxu0 0
          %2448 = vmatprep.subr.bf16.mxu0 0
          %2449 = vmatpush1.bf16.msra.mxu0 0
          %2450 = vmatprep.subr.bf16.mxu0 0
          %2451 = vmatpush1.bf16.msra.mxu0 0
          %2452 = vmatprep.subr.bf16.mxu0 0
          %2453 = vmatpush1.bf16.msra.mxu0 0
          %2454 = vmatprep.mubr.bf16.mxu0 0
          %2455 = vmatmul.mubr.bf16.gmra.mrb[0].mxu0 %v2420
          %v2456 = vpop.f32.mrb[0].mxu0
          %v2457 = vadd.f32 0.0, %v2456
          %v2458 = vpop.f32.mrb[0].mxu0
          %v2459 = vpop.f32.mrb[0].mxu0
          %v2460 = vadd.f32 0.0, %v2459
          %v2461 = vpop.f32.mrb[0].mxu0
          %2462 = vdwg.mxu0
          %v2463 = vpack.c.bf16 %v2460, %v2457
          %v2464 = vld [vmem:[%s2 + $0xe0] sm:$0xf]
          %v2465 = vld [vmem:[%s2 + $0xe4] sm:$0xf]
          %v2466 = vld [vmem:[%s2 + $0xe8] sm:$0xf]
          %v2467 = vld [vmem:[%s2 + $0xec] sm:$0xf]
          %v2468 = vld [vmem:[%s2 + $0xf0] sm:$0xf]
          %v2469 = vld [vmem:[%s2 + $0xf4] sm:$0xf]
          %v2470 = vld [vmem:[%s2 + $0xf8] sm:$0xf]
          %v2471 = vld [vmem:[%s2 + $0xfc] sm:$0xf]
          %v2480 = vunpack.c.l.b16 %v2464
          %v2481 = vunpack.c.l.b16 %v2465
          %v2482 = vunpack.c.l.b16 %v2466
          %v2483 = vunpack.c.l.b16 %v2467
          %v2484 = vunpack.c.l.b16 %v2468
          %v2485 = vunpack.c.l.b16 %v2469
          %v2486 = vunpack.c.l.b16 %v2470
          %v2487 = vunpack.c.l.b16 %v2471
          %v2488 = vpack.c.b16 %v2481, %v2480
          %v2489 = vpack.c.b16 %v2483, %v2482
          %v2490 = vpack.c.b16 %v2485, %v2484
          %v2491 = vpack.c.b16 %v2487, %v2486
          %v2497 = vsel %vm874, %v2463, 0
          %2499 = vmatprep.subr.bf16.mxu0 0
          %2500 = vmatpush1.bf16.msra.mxu0 %v2488
          %2501 = vmatprep.subr.bf16.mxu0 0
          %2502 = vmatpush1.bf16.msra.mxu0 %v2489
          %2503 = vmatprep.subr.bf16.mxu0 0
          %2504 = vmatpush1.bf16.msra.mxu0 %v2490
          %2505 = vmatprep.subr.bf16.mxu0 0
          %2506 = vmatpush1.bf16.msra.mxu0 %v2491
          %2507 = vmatprep.subr.bf16.mxu0 0
          %2508 = vmatpush1.bf16.msra.mxu0 0
          %2509 = vmatprep.subr.bf16.mxu0 0
          %2510 = vmatpush1.bf16.msra.mxu0 0
          %2511 = vmatprep.subr.bf16.mxu0 0
          %2512 = vmatpush1.bf16.msra.mxu0 0
          %2513 = vmatprep.subr.bf16.mxu0 0
          %2514 = vmatpush1.bf16.msra.mxu0 0
          %2515 = vmatprep.subr.bf16.mxu0 0
          %2516 = vmatpush1.bf16.msra.mxu0 0
          %2517 = vmatprep.subr.bf16.mxu0 0
          %2518 = vmatpush1.bf16.msra.mxu0 0
          %2519 = vmatprep.subr.bf16.mxu0 0
          %2520 = vmatpush1.bf16.msra.mxu0 0
          %2521 = vmatprep.subr.bf16.mxu0 0
          %2522 = vmatpush1.bf16.msra.mxu0 0
          %2523 = vmatprep.subr.bf16.mxu0 0
          %2524 = vmatpush1.bf16.msra.mxu0 0
          %2525 = vmatprep.subr.bf16.mxu0 0
          %2526 = vmatpush1.bf16.msra.mxu0 0
          %2527 = vmatprep.subr.bf16.mxu0 0
          %2528 = vmatpush1.bf16.msra.mxu0 0
          %2529 = vmatprep.subr.bf16.mxu0 0
          %2530 = vmatpush1.bf16.msra.mxu0 0
          %2531 = vmatprep.mubr.bf16.mxu0 0
          %2532 = vmatmul.mubr.bf16.gmra.mrb[0].mxu0 %v2497
          %v2533 = vpop.f32.mrb[0].mxu0
          %v2534 = vadd.f32 0.0, %v2533
          %v2535 = vpop.f32.mrb[0].mxu0
          %v2536 = vpop.f32.mrb[0].mxu0
          %v2537 = vadd.f32 0.0, %v2536
          %v2538 = vpop.f32.mrb[0].mxu0
          %2539 = vdwg.mxu0
          %v2540 = vadd.f32 %v2322, %v2534
          %v2541 = vadd.f32 %v2323, %v2537
          %v2542 = vpack.c.bf16 %v2541, %v2540
          %s2543 = smul.addr %s859, 8
          %s2544 = scalar_lea.vmem [#allocation3], %s2543
          %2545 = vst.msk [vmem:[%s2544] sm:$0xff] %vm455, %v2542
        $region57: #{sequence_attention_forward.1} parent=51 // loop_footer
          %s833 = sadd.s32 1, %s829
        $region58: #{sequence_attention_forward.1} parent=51 // loop_footer_branch
          %828 = sbr.rel target = $region54
        $region59: #{sequence_attention_forward.1} parent=51 // loop_exit
          _
        %v2546 = vld [vmem:[#allocation3] sm:$0xff]
        %v2547 = vld [vmem:[#allocation3 + $0x8] sm:$0xff]
        %v2548 = vunpack.c.l.bf16 %v2546
        %v2549 = vunpack.c.h.bf16 %v2546
        %v2550 = vunpack.c.l.bf16 %v2547
        %v2551 = vunpack.c.h.bf16 %v2547
        %v2552 = vadd.f32 %v305, %v2548
        %v2553 = vadd.f32 %v306, %v2549
        %v2554 = vadd.f32 %v307, %v2550
        %v2555 = vadd.f32 %v308, %v2551
        %v2556 = vpack.c.bf16 %v2553, %v2552
        %v2557 = vpack.c.bf16 %v2555, %v2554
        %v2558 = vld [vmem:[%s3] sm:$0xf]
        %v2559 = vld [vmem:[%s3 + $0x4] sm:$0xf]
        %v2560 = vld [vmem:[%s3 + $0x8] sm:$0xf]
        %v2561 = vld [vmem:[%s3 + $0xc] sm:$0xf]
        %v2566 = vunpack.c.l.b16 %v2558
        %v2567 = vunpack.c.l.b16 %v2559
        %v2568 = vunpack.c.l.b16 %v2560
        %v2569 = vunpack.c.l.b16 %v2561
        %v2570 = vpack.c.b16 %v2567, %v2566
        %v2571 = vpack.c.b16 %v2569, %v2568
        %v2575 = vsel %vm455, %v2556, 0
        %v2578 = vsel %vm455, %v2557, 0
        %2580 = vmatprep.subr.bf16.mxu0 0
        %2581 = vmatpush1.bf16.msra.mxu0 %v2570
        %2582 = vmatprep.subr.bf16.mxu0 0
        %2583 = vmatpush1.bf16.msra.mxu0 %v2571
        %2584 = vmatprep.subr.bf16.mxu0 0
        %2585 = vmatpush1.bf16.msra.mxu0 0
        %2586 = vmatprep.subr.bf16.mxu0 0
        %2587 = vmatpush1.bf16.msra.mxu0 0
        %2588 = vmatprep.subr.bf16.mxu0 0
        %2589 = vmatpush1.bf16.msra.mxu0 0
        %2590 = vmatprep.subr.bf16.mxu0 0
        %2591 = vmatpush1.bf16.msra.mxu0 0
        %2592 = vmatprep.subr.bf16.mxu0 0
        %2593 = vmatpush1.bf16.msra.mxu0 0
        %2594 = vmatprep.subr.bf16.mxu0 0
        %2595 = vmatpush1.bf16.msra.mxu0 0
        %2596 = vmatprep.subr.bf16.mxu0 0
        %2597 = vmatpush1.bf16.msra.mxu0 0
        %2598 = vmatprep.subr.bf16.mxu0 0
        %2599 = vmatpush1.bf16.msra.mxu0 0
        %2600 = vmatprep.subr.bf16.mxu0 0
        %2601 = vmatpush1.bf16.msra.mxu0 0
        %2602 = vmatprep.subr.bf16.mxu0 0
        %2603 = vmatpush1.bf16.msra.mxu0 0
        %2604 = vmatprep.subr.bf16.mxu0 0
        %2605 = vmatpush1.bf16.msra.mxu0 0
        %2606 = vmatprep.subr.bf16.mxu0 0
        %2607 = vmatpush1.bf16.msra.mxu0 0
        %2608 = vmatprep.subr.bf16.mxu0 0
        %2609 = vmatpush1.bf16.msra.mxu0 0
        %2610 = vmatprep.subr.bf16.mxu0 0
        %2611 = vmatpush1.bf16.msra.mxu0 0
        %2612 = vmatprep.mubr.bf16.mxu0 0
        %2613 = vmatmul.mubr.bf16.gmra.mrb[0].mxu0 %v2575
        %v2614 = vpop.f32.mrb[0].mxu0
        %v2615 = vadd.f32 0.0, %v2614
        %v2616 = vpop.f32.mrb[0].mxu0
        %v2617 = vpop.f32.mrb[0].mxu0
        %v2618 = vadd.f32 0.0, %v2617
        %v2619 = vpop.f32.mrb[0].mxu0
        %2620 = vmatprep.mubr.bf16.mxu0 0
        %2621 = vmatmul.mubr.bf16.gmra.mrb[0].mxu0 %v2578
        %v2622 = vpop.f32.mrb[0].mxu0
        %v2623 = vadd.f32 0.0, %v2622
        %v2624 = vpop.f32.mrb[0].mxu0
        %v2625 = vpop.f32.mrb[0].mxu0
        %v2626 = vadd.f32 0.0, %v2625
        %v2627 = vpop.f32.mrb[0].mxu0
        %2628 = vdwg.mxu0
        %v2629 = vpack.c.bf16 %v2618, %v2615
        %v2630 = vpack.c.bf16 %v2626, %v2623
        %vm2631 = vcmask 785408
        %2632 = vst.msk [vmem:[#allocation4] sm:$0xff] %vm2631, %v2629
        %2633 = vst.msk [vmem:[#allocation4 + $0x8] sm:$0xff] %vm2631, %v2630
        %v2634 = vld [vmem:[#allocation4] sm:$0xff]
        %v2635 = vld [vmem:[#allocation4 + $0x8] sm:$0xff]
        %v2636 = vunpack.c.l.bf16 %v2634
        %v2637 = vunpack.c.h.bf16 %v2634
        %v2638 = vunpack.c.l.bf16 %v2635
        %v2639 = vunpack.c.h.bf16 %v2635
        %vm2640 = vcmask 785920
        %v2641 = vsel %vm2640, %v2636, 0.0
        %v2642 = vsel %vm2640, %v2637, 0.0
        %v2643 = vadd.f32 %v2641, %v2642
        %v2644 = vsel %vm2640, %v2638, 0.0
        %v2645 = vadd.f32 %v2643, %v2644
        %v2646 = vsel %vm2640, %v2639, 0.0
        %v2647 = vadd.f32 %v2645, %v2646
        %v2648 = vrot.slane %v2647, 4
        %v2649 = vadd.f32 %v2647, %v2648
        %v2650 = vrot.slane %v2649, 2
        %v2651 = vadd.f32 %v2649, %v2650
        %v2652 = vrot.slane %v2651, 1
        %v2653 = vadd.f32 %v2651, %v2652
        %v2654 = vld [vmem:[%s5] sm:$0x1]
        %v2656 = vlaneseq
        %v2657 = vshrl.u32 %v2656, 7
        %v2658 = vsub.s32 0, %v2657
        %v2659 = vrot.slane %v2654, %v2658
        %2660 = vrot.lane.b32.xlu0 %v2659, 64
        %v2661 = vpop.permute.xlu0 %2660
        %v2663 = vmul.f32 %v2653, %v2661
        %2666 = vrot.lane.b32.xlu0 %v2634, 96
        %v2667 = vpop.permute.xlu0 %2666
        %2668 = vrot.lane.b32.xlu0 %v2635, 96
        %v2669 = vpop.permute.xlu0 %2668
        %vm2670 = vcmask 31744
        %v2672 = vsel %vm2670, %v2634, 0
        %v2675 = vsel %vm2670, %v2635, 0
        %v2678 = vsel %vm2670, %v2667, 0
        %v2681 = vsel %vm2670, %v2669, 0
        %2683 = vmatprep.subr.bf16.mxu0 0
        %2684 = vmatpush1.bf16.xpose.msra.mxu0 %v2678
        %2685 = vmatprep.subr.bf16.mxu0 0
        %2686 = vmatpush1.bf16.xpose.msra.mxu0 %v2681
        %2687 = vmatprep.subr.bf16.mxu0 0
        %2688 = vmatpush1.bf16.xpose.msra.mxu0 0
        %2689 = vmatprep.subr.bf16.mxu0 0
        %2690 = vmatpush1.bf16.xpose.msra.mxu0 0
        %2691 = vmatprep.subr.bf16.mxu0 0
        %2692 = vmatpush1.bf16.xpose.msra.mxu0 0
        %2693 = vmatprep.subr.bf16.mxu0 0
        %2694 = vmatpush1.bf16.xpose.msra.mxu0 0
        %2695 = vmatprep.subr.bf16.mxu0 0
        %2696 = vmatpush1.bf16.xpose.msra.mxu0 0
        %2697 = vmatprep.subr.bf16.mxu0 0
        %2698 = vmatpush1.bf16.xpose.msra.mxu0 0
        %2699 = vmatprep.subr.bf16.mxu0 0
        %2700 = vmatpush1.bf16.xpose.msra.mxu0 0
        %2701 = vmatprep.subr.bf16.mxu0 0
        %2702 = vmatpush1.bf16.xpose.msra.mxu0 0
        %2703 = vmatprep.subr.bf16.mxu0 0
        %2704 = vmatpush1.bf16.xpose.msra.mxu0 0
        %2705 = vmatprep.subr.bf16.mxu0 0
        %2706 = vmatpush1.bf16.xpose.msra.mxu0 0
        %2707 = vmatprep.subr.bf16.mxu0 0
        %2708 = vmatpush1.bf16.xpose.msra.mxu0 0
        %2709 = vmatprep.subr.bf16.mxu0 0
        %2710 = vmatpush1.bf16.xpose.msra.mxu0 0
        %2711 = vmatprep.subr.bf16.mxu0 0
        %2712 = vmatpush1.bf16.xpose.msra.mxu0 0
        %2713 = vmatprep.subr.bf16.mxu0 0
        %2714 = vmatpush1.bf16.xpose.msra.mxu0 0
        %2715 = vmatprep.mubr.bf16.mxu0 0
        %2716 = vmatmul.mubr.bf16.gmra.mrb[0].mxu0 %v2672
        %v2717 = vpop.f32.mrb[0].mxu0
        %v2718 = vadd.f32 0.0, %v2717
        %v2719 = vpop.f32.mrb[0].mxu0
        %v2720 = vpop.f32.mrb[0].mxu0
        %v2721 = vadd.f32 0.0, %v2720
        %v2722 = vpop.f32.mrb[0].mxu0
        %2723 = vmatprep.mubr.bf16.mxu0 0
        %2724 = vmatmul.mubr.bf16.gmra.mrb[0].mxu0 %v2675
        %v2725 = vpop.f32.mrb[0].mxu0
        %v2726 = vadd.f32 0.0, %v2725
        %v2727 = vpop.f32.mrb[0].mxu0
        %v2728 = vpop.f32.mrb[0].mxu0
        %v2729 = vadd.f32 0.0, %v2728
        %v2730 = vpop.f32.mrb[0].mxu0
        %2731 = vdwg.mxu0
        %v2732 = vsel %vm455, %v2718, -inf
        %2733 = vmax.xlane.f32.xlu0 %v2732
        %v2734 = vpop.xlane.xlu0 %2733
        %v2735 = vsel %vm455, %v2721, -inf
        %2736 = vmax.xlane.f32.xlu0 %v2735
        %v2737 = vpop.xlane.xlu0 %2736
        %v2738 = vsel %vm455, %v2726, -inf
        %2739 = vmax.xlane.f32.xlu0 %v2738
        %v2740 = vpop.xlane.xlu0 %2739
        %v2741 = vsel %vm455, %v2729, -inf
        %2742 = vmax.xlane.f32.xlu0 %v2741
        %v2743 = vpop.xlane.xlu0 %2742
        %v2744 = vsub.f32 %v2718, %v2734
        %v2745 = vsub.f32 %v2721, %v2737
        %v2746 = vsub.f32 %v2726, %v2740
        %v2747 = vsub.f32 %v2729, %v2743
        %v2748 = vmul.f32 %v2744, 1.442695
        %v2749 = vpow.pop %v2748
        %v2750 = vmul.f32 %v2745, 1.442695
        %v2751 = vpow.pop %v2750
        %v2752 = vmul.f32 %v2746, 1.442695
        %v2753 = vpow.pop %v2752
        %v2754 = vmul.f32 %v2747, 1.442695
        %v2755 = vpow.pop %v2754
        %v2756 = vsel %vm455, %v2749, 0.0
        %2757 = vadd.xlane.f32.xlu0 %v2756
        %v2758 = vpop.xlane.xlu0 %2757
        %v2759 = vsel %vm455, %v2751, 0.0
        %2760 = vadd.xlane.f32.xlu0 %v2759
        %v2761 = vpop.xlane.xlu0 %2760
        %v2762 = vsel %vm455, %v2753, 0.0
        %2763 = vadd.xlane.f32.xlu0 %v2762
        %v2764 = vpop.xlane.xlu0 %2763
        %v2765 = vsel %vm455, %v2755, 0.0
        %2766 = vadd.xlane.f32.xlu0 %v2765
        %v2767 = vpop.xlane.xlu0 %2766
        %v2768 = vrcp.pop %v2758
        %v2769 = vrcp.pop %v2761
        %v2770 = vrcp.pop %v2764
        %v2771 = vrcp.pop %v2767
        %v2772 = vmul.f32 %v2749, %v2768
        %v2773 = vmul.f32 %v2751, %v2769
        %v2774 = vmul.f32 %v2753, %v2770
        %v2775 = vmul.f32 %v2755, %v2771
        %v2776 = vpack.c.bf16 %v2773, %v2772
        %v2777 = vpack.c.bf16 %v2775, %v2774
        %2778 = vrot.lane.b32.xlu0 %v2634, 64
        %v2779 = vpop.permute.xlu0 %2778
        %2780 = vrot.lane.b32.xlu0 %v2635, 64
        %v2781 = vpop.permute.xlu0 %2780
        %v2785 = vsel %vm455, %v2776, 0
        %v2788 = vsel %vm455, %v2777, 0
        %2790 = vmatprep.subr.bf16.mxu0 0
        %2791 = vmatpush1.bf16.msra.mxu0 %v2779
        %2792 = vmatprep.subr.bf16.mxu0 0
        %2793 = vmatpush1.bf16.msra.mxu0 %v2781
        %2794 = vmatprep.subr.bf16.mxu0 0
        %2795 = vmatpush1.bf16.msra.mxu0 0
        %2796 = vmatprep.subr.bf16.mxu0 0
        %2797 = vmatpush1.bf16.msra.mxu0 0
        %2798 = vmatprep.subr.bf16.mxu0 0
        %2799 = vmatpush1.bf16.msra.mxu0 0
        %2800 = vmatprep.subr.bf16.mxu0 0
        %2801 = vmatpush1.bf16.msra.mxu0 0
        %2802 = vmatprep.subr.bf16.mxu0 0
        %2803 = vmatpush1.bf16.msra.mxu0 0
        %2804 = vmatprep.subr.bf16.mxu0 0
        %2805 = vmatpush1.bf16.msra.mxu0 0
        %2806 = vmatprep.subr.bf16.mxu0 0
        %2807 = vmatpush1.bf16.msra.mxu0 0
        %2808 = vmatprep.subr.bf16.mxu0 0
        %2809 = vmatpush1.bf16.msra.mxu0 0
        %2810 = vmatprep.subr.bf16.mxu0 0
        %2811 = vmatpush1.bf16.msra.mxu0 0
        %2812 = vmatprep.subr.bf16.mxu0 0
        %2813 = vmatpush1.bf16.msra.mxu0 0
        %2814 = vmatprep.subr.bf16.mxu0 0
        %2815 = vmatpush1.bf16.msra.mxu0 0
        %2816 = vmatprep.subr.bf16.mxu0 0
        %2817 = vmatpush1.bf16.msra.mxu0 0
        %2818 = vmatprep.subr.bf16.mxu0 0
        %2819 = vmatpush1.bf16.msra.mxu0 0
        %2820 = vmatprep.subr.bf16.mxu0 0
        %2821 = vmatpush1.bf16.msra.mxu0 0
        %2822 = vmatprep.mubr.bf16.mxu0 0
        %2823 = vmatmul.mubr.bf16.gmra.mrb[0].mxu0 %v2785
        %v2824 = vpop.f32.mrb[0].mxu0
        %v2825 = vadd.f32 0.0, %v2824
        %v2826 = vpop.f32.mrb[0].mxu0
        %v2827 = vpop.f32.mrb[0].mxu0
        %v2828 = vadd.f32 0.0, %v2827
        %v2829 = vpop.f32.mrb[0].mxu0
        %2830 = vmatprep.mubr.bf16.mxu0 0
        %2831 = vmatmul.mubr.bf16.gmra.mrb[0].mxu0 %v2788
        %v2832 = vpop.f32.mrb[0].mxu0
        %v2833 = vadd.f32 0.0, %v2832
        %v2834 = vpop.f32.mrb[0].mxu0
        %v2835 = vpop.f32.mrb[0].mxu0
        %v2836 = vadd.f32 0.0, %v2835
        %v2837 = vpop.f32.mrb[0].mxu0
        %2838 = vdwg.mxu0
        %v2839 = vld [vmem:[%s4] sm:$0x1]
        %v2840 = vlaneseq
        %v2841 = vshrl.u32 %v2840, 7
        %v2842 = vsub.s32 0, %v2841
        %v2843 = vrot.slane %v2839, %v2842
        %v2844 = vmul.f32 %v2825, %v2843
        %v2845 = vmul.f32 %v2828, %v2843
        %v2846 = vmul.f32 %v2833, %v2843
        %v2847 = vmul.f32 %v2836, %v2843
        %v2848 = vlaneseq
        %v2849 = vshrl.u32 %v2848, 7
        %v2850 = vsub.s32 0, %v2849
        %v2851 = vrot.slane %v2663, %v2850
        %2856 = vrot.lane.b32.xlu0 %v2844, 64
        %v2857 = vpop.permute.xlu0 %2856
        %2858 = vrot.lane.b32.xlu0 %v2845, 64
        %v2859 = vpop.permute.xlu0 %2858
        %2860 = vrot.lane.b32.xlu0 %v2846, 64
        %v2861 = vpop.permute.xlu0 %2860
        %2862 = vrot.lane.b32.xlu0 %v2847, 64
        %v2863 = vpop.permute.xlu0 %2862
        %v2868 = vadd.f32 %v2851, %v2857
        %v2869 = vadd.f32 %v2851, %v2859
        %v2870 = vadd.f32 %v2851, %v2861
        %v2871 = vadd.f32 %v2851, %v2863
        %v2872 = vld [vmem:[#allocation4] sm:$0xff]
        %v2873 = vld [vmem:[#allocation4 + $0x8] sm:$0xff]
        %2876 = vrot.lane.b32.xlu0 %v2872, 124
        %v2877 = vpop.permute.xlu0 %2876
        %2878 = vrot.lane.b32.xlu0 %v2873, 124
        %v2879 = vpop.permute.xlu0 %2878
        %2880 = vrot.lane.b32.xlu0 %v2872, 92
        %v2881 = vpop.permute.xlu0 %2880
        %2882 = vrot.lane.b32.xlu0 %v2873, 92
        %v2883 = vpop.permute.xlu0 %2882
        %v2885 = vsel %vm2670, %v2877, 0
        %v2888 = vsel %vm2670, %v2879, 0
        %v2891 = vsel %vm2670, %v2881, 0
        %v2894 = vsel %vm2670, %v2883, 0
        %2896 = vmatprep.subr.bf16.mxu0 0
        %2897 = vmatpush1.bf16.xpose.msra.mxu0 %v2891
        %2898 = vmatprep.subr.bf16.mxu0 0
        %2899 = vmatpush1.bf16.xpose.msra.mxu0 %v2894
        %2900 = vmatprep.subr.bf16.mxu0 0
        %2901 = vmatpush1.bf16.xpose.msra.mxu0 0
        %2902 = vmatprep.subr.bf16.mxu0 0
        %2903 = vmatpush1.bf16.xpose.msra.mxu0 0
        %2904 = vmatprep.subr.bf16.mxu0 0
        %2905 = vmatpush1.bf16.xpose.msra.mxu0 0
        %2906 = vmatprep.subr.bf16.mxu0 0
        %2907 = vmatpush1.bf16.xpose.msra.mxu0 0
        %2908 = vmatprep.subr.bf16.mxu0 0
        %2909 = vmatpush1.bf16.xpose.msra.mxu0 0
        %2910 = vmatprep.subr.bf16.mxu0 0
        %2911 = vmatpush1.bf16.xpose.msra.mxu0 0
        %2912 = vmatprep.subr.bf16.mxu0 0
        %2913 = vmatpush1.bf16.xpose.msra.mxu0 0
        %2914 = vmatprep.subr.bf16.mxu0 0
        %2915 = vmatpush1.bf16.xpose.msra.mxu0 0
        %2916 = vmatprep.subr.bf16.mxu0 0
        %2917 = vmatpush1.bf16.xpose.msra.mxu0 0
        %2918 = vmatprep.subr.bf16.mxu0 0
        %2919 = vmatpush1.bf16.xpose.msra.mxu0 0
        %2920 = vmatprep.subr.bf16.mxu0 0
        %2921 = vmatpush1.bf16.xpose.msra.mxu0 0
        %2922 = vmatprep.subr.bf16.mxu0 0
        %2923 = vmatpush1.bf16.xpose.msra.mxu0 0
        %2924 = vmatprep.subr.bf16.mxu0 0
        %2925 = vmatpush1.bf16.xpose.msra.mxu0 0
        %2926 = vmatprep.subr.bf16.mxu0 0
        %2927 = vmatpush1.bf16.xpose.msra.mxu0 0
        %2928 = vmatprep.mubr.bf16.mxu0 0
        %2929 = vmatmul.mubr.bf16.gmra.mrb[0].mxu0 %v2885
        %v2930 = vpop.f32.mrb[0].mxu0
        %v2931 = vadd.f32 0.0, %v2930
        %v2932 = vpop.f32.mrb[0].mxu0
        %v2933 = vpop.f32.mrb[0].mxu0
        %v2934 = vadd.f32 0.0, %v2933
        %v2935 = vpop.f32.mrb[0].mxu0
        %2936 = vmatprep.mubr.bf16.mxu0 0
        %2937 = vmatmul.mubr.bf16.gmra.mrb[0].mxu0 %v2888
        %v2938 = vpop.f32.mrb[0].mxu0
        %v2939 = vadd.f32 0.0, %v2938
        %v2940 = vpop.f32.mrb[0].mxu0
        %v2941 = vpop.f32.mrb[0].mxu0
        %v2942 = vadd.f32 0.0, %v2941
        %v2943 = vpop.f32.mrb[0].mxu0
        %2944 = vdwg.mxu0
        %v2945 = vsel %vm455, %v2931, -inf
        %2946 = vmax.xlane.f32.xlu0 %v2945
        %v2947 = vpop.xlane.xlu0 %2946
        %v2948 = vsel %vm455, %v2934, -inf
        %2949 = vmax.xlane.f32.xlu0 %v2948
        %v2950 = vpop.xlane.xlu0 %2949
        %v2951 = vsel %vm455, %v2939, -inf
        %2952 = vmax.xlane.f32.xlu0 %v2951
        %v2953 = vpop.xlane.xlu0 %2952
        %v2954 = vsel %vm455, %v2942, -inf
        %2955 = vmax.xlane.f32.xlu0 %v2954
        %v2956 = vpop.xlane.xlu0 %2955
        %v2957 = vsub.f32 %v2931, %v2947
        %v2958 = vsub.f32 %v2934, %v2950
        %v2959 = vsub.f32 %v2939, %v2953
        %v2960 = vsub.f32 %v2942, %v2956
        %v2961 = vmul.f32 %v2957, 1.442695
        %v2962 = vpow.pop %v2961
        %v2963 = vmul.f32 %v2958, 1.442695
        %v2964 = vpow.pop %v2963
        %v2965 = vmul.f32 %v2959, 1.442695
        %v2966 = vpow.pop %v2965
        %v2967 = vmul.f32 %v2960, 1.442695
        %v2968 = vpow.pop %v2967
        %v2969 = vsel %vm455, %v2962, 0.0
        %2970 = vadd.xlane.f32.xlu0 %v2969
        %v2971 = vpop.xlane.xlu0 %2970
        %v2972 = vsel %vm455, %v2964, 0.0
        %2973 = vadd.xlane.f32.xlu0 %v2972
        %v2974 = vpop.xlane.xlu0 %2973
        %v2975 = vsel %vm455, %v2966, 0.0
        %2976 = vadd.xlane.f32.xlu0 %v2975
        %v2977 = vpop.xlane.xlu0 %2976
        %v2978 = vsel %vm455, %v2968, 0.0
        %2979 = vadd.xlane.f32.xlu0 %v2978
        %v2980 = vpop.xlane.xlu0 %2979
        %v2981 = vrcp.pop %v2971
        %v2982 = vrcp.pop %v2974
        %v2983 = vrcp.pop %v2977
        %v2984 = vrcp.pop %v2980
        %v2985 = vmul.f32 %v2962, %v2981
        %v2986 = vmul.f32 %v2964, %v2982
        %v2987 = vmul.f32 %v2966, %v2983
        %v2988 = vmul.f32 %v2968, %v2984
        %v2989 = vpack.c.bf16 %v2986, %v2985
        %v2990 = vpack.c.bf16 %v2988, %v2987
        %v2992 = vsel %vm455, %v2989, 0
        %v2995 = vsel %vm455, %v2990, 0
        %2997 = vmatprep.subr.bf16.mxu0 0
        %2998 = vmatpush1.bf16.msra.mxu0 %v2779
        %2999 = vmatprep.subr.bf16.mxu0 0
        %3000 = vmatpush1.bf16.msra.mxu0 %v2781
        %3001 = vmatprep.subr.bf16.mxu0 0
        %3002 = vmatpush1.bf16.msra.mxu0 0
        %3003 = vmatprep.subr.bf16.mxu0 0
        %3004 = vmatpush1.bf16.msra.mxu0 0
        %3005 = vmatprep.subr.bf16.mxu0 0
        %3006 = vmatpush1.bf16.msra.mxu0 0
        %3007 = vmatprep.subr.bf16.mxu0 0
        %3008 = vmatpush1.bf16.msra.mxu0 0
        %3009 = vmatprep.subr.bf16.mxu0 0
        %3010 = vmatpush1.bf16.msra.mxu0 0
        %3011 = vmatprep.subr.bf16.mxu0 0
        %3012 = vmatpush1.bf16.msra.mxu0 0
        %3013 = vmatprep.subr.bf16.mxu0 0
        %3014 = vmatpush1.bf16.msra.mxu0 0
        %3015 = vmatprep.subr.bf16.mxu0 0
        %3016 = vmatpush1.bf16.msra.mxu0 0
        %3017 = vmatprep.subr.bf16.mxu0 0
        %3018 = vmatpush1.bf16.msra.mxu0 0
        %3019 = vmatprep.subr.bf16.mxu0 0
        %3020 = vmatpush1.bf16.msra.mxu0 0
        %3021 = vmatprep.subr.bf16.mxu0 0
        %3022 = vmatpush1.bf16.msra.mxu0 0
        %3023 = vmatprep.subr.bf16.mxu0 0
        %3024 = vmatpush1.bf16.msra.mxu0 0
        %3025 = vmatprep.subr.bf16.mxu0 0
        %3026 = vmatpush1.bf16.msra.mxu0 0
        %3027 = vmatprep.subr.bf16.mxu0 0
        %3028 = vmatpush1.bf16.msra.mxu0 0
        %3029 = vmatprep.mubr.bf16.mxu0 0
        %3030 = vmatmul.mubr.bf16.gmra.mrb[0].mxu0 %v2992
        %v3031 = vpop.f32.mrb[0].mxu0
        %v3032 = vadd.f32 0.0, %v3031
        %v3033 = vpop.f32.mrb[0].mxu0
        %v3034 = vpop.f32.mrb[0].mxu0
        %v3035 = vadd.f32 0.0, %v3034
        %v3036 = vpop.f32.mrb[0].mxu0
        %3037 = vmatprep.mubr.bf16.mxu0 0
        %3038 = vmatmul.mubr.bf16.gmra.mrb[0].mxu0 %v2995
        %v3039 = vpop.f32.mrb[0].mxu0
        %v3040 = vadd.f32 0.0, %v3039
        %v3041 = vpop.f32.mrb[0].mxu0
        %v3042 = vpop.f32.mrb[0].mxu0
        %v3043 = vadd.f32 0.0, %v3042
        %v3044 = vpop.f32.mrb[0].mxu0
        %3045 = vdwg.mxu0
        %v3046 = vld [vmem:[%s4 + $0x1] sm:$0x1]
        %v3047 = vlaneseq
        %v3048 = vshrl.u32 %v3047, 7
        %v3049 = vsub.s32 0, %v3048
        %v3050 = vrot.slane %v3046, %v3049
        %v3051 = vmul.f32 %v3032, %v3050
        %v3052 = vmul.f32 %v3035, %v3050
        %v3053 = vmul.f32 %v3040, %v3050
        %v3054 = vmul.f32 %v3043, %v3050
        %3059 = vrot.lane.b32.xlu0 %v3051, 64
        %v3060 = vpop.permute.xlu0 %3059
        %3061 = vrot.lane.b32.xlu0 %v3052, 64
        %v3062 = vpop.permute.xlu0 %3061
        %3063 = vrot.lane.b32.xlu0 %v3053, 64
        %v3064 = vpop.permute.xlu0 %3063
        %3065 = vrot.lane.b32.xlu0 %v3054, 64
        %v3066 = vpop.permute.xlu0 %3065
        %v3071 = vadd.f32 %v2868, %v3060
        %v3072 = vadd.f32 %v2869, %v3062
        %v3073 = vadd.f32 %v2870, %v3064
        %v3074 = vadd.f32 %v2871, %v3066
        %v3075 = vld [vmem:[#allocation4] sm:$0xff]
        %v3076 = vld [vmem:[#allocation4 + $0x8] sm:$0xff]
        %3079 = vrot.lane.b32.xlu0 %v3075, 120
        %v3080 = vpop.permute.xlu0 %3079
        %3081 = vrot.lane.b32.xlu0 %v3076, 120
        %v3082 = vpop.permute.xlu0 %3081
        %3083 = vrot.lane.b32.xlu0 %v3075, 88
        %v3084 = vpop.permute.xlu0 %3083
        %3085 = vrot.lane.b32.xlu0 %v3076, 88
        %v3086 = vpop.permute.xlu0 %3085
        %v3088 = vsel %vm2670, %v3080, 0
        %v3091 = vsel %vm2670, %v3082, 0
        %v3094 = vsel %vm2670, %v3084, 0
        %v3097 = vsel %vm2670, %v3086, 0
        %3099 = vmatprep.subr.bf16.mxu0 0
        %3100 = vmatpush1.bf16.xpose.msra.mxu0 %v3094
        %3101 = vmatprep.subr.bf16.mxu0 0
        %3102 = vmatpush1.bf16.xpose.msra.mxu0 %v3097
        %3103 = vmatprep.subr.bf16.mxu0 0
        %3104 = vmatpush1.bf16.xpose.msra.mxu0 0
        %3105 = vmatprep.subr.bf16.mxu0 0
        %3106 = vmatpush1.bf16.xpose.msra.mxu0 0
        %3107 = vmatprep.subr.bf16.mxu0 0
        %3108 = vmatpush1.bf16.xpose.msra.mxu0 0
        %3109 = vmatprep.subr.bf16.mxu0 0
        %3110 = vmatpush1.bf16.xpose.msra.mxu0 0
        %3111 = vmatprep.subr.bf16.mxu0 0
        %3112 = vmatpush1.bf16.xpose.msra.mxu0 0
        %3113 = vmatprep.subr.bf16.mxu0 0
        %3114 = vmatpush1.bf16.xpose.msra.mxu0 0
        %3115 = vmatprep.subr.bf16.mxu0 0
        %3116 = vmatpush1.bf16.xpose.msra.mxu0 0
        %3117 = vmatprep.subr.bf16.mxu0 0
        %3118 = vmatpush1.bf16.xpose.msra.mxu0 0
        %3119 = vmatprep.subr.bf16.mxu0 0
        %3120 = vmatpush1.bf16.xpose.msra.mxu0 0
        %3121 = vmatprep.subr.bf16.mxu0 0
        %3122 = vmatpush1.bf16.xpose.msra.mxu0 0
        %3123 = vmatprep.subr.bf16.mxu0 0
        %3124 = vmatpush1.bf16.xpose.msra.mxu0 0
        %3125 = vmatprep.subr.bf16.mxu0 0
        %3126 = vmatpush1.bf16.xpose.msra.mxu0 0
        %3127 = vmatprep.subr.bf16.mxu0 0
        %3128 = vmatpush1.bf16.xpose.msra.mxu0 0
        %3129 = vmatprep.subr.bf16.mxu0 0
        %3130 = vmatpush1.bf16.xpose.msra.mxu0 0
        %3131 = vmatprep.mubr.bf16.mxu0 0
        %3132 = vmatmul.mubr.bf16.gmra.mrb[0].mxu0 %v3088
        %v3133 = vpop.f32.mrb[0].mxu0
        %v3134 = vadd.f32 0.0, %v3133
        %v3135 = vpop.f32.mrb[0].mxu0
        %v3136 = vpop.f32.mrb[0].mxu0
        %v3137 = vadd.f32 0.0, %v3136
        %v3138 = vpop.f32.mrb[0].mxu0
        %3139 = vmatprep.mubr.bf16.mxu0 0
        %3140 = vmatmul.mubr.bf16.gmra.mrb[0].mxu0 %v3091
        %v3141 = vpop.f32.mrb[0].mxu0
        %v3142 = vadd.f32 0.0, %v3141
        %v3143 = vpop.f32.mrb[0].mxu0
        %v3144 = vpop.f32.mrb[0].mxu0
        %v3145 = vadd.f32 0.0, %v3144
        %v3146 = vpop.f32.mrb[0].mxu0
        %3147 = vdwg.mxu0
        %v3148 = vsel %vm455, %v3134, -inf
        %3149 = vmax.xlane.f32.xlu0 %v3148
        %v3150 = vpop.xlane.xlu0 %3149
        %v3151 = vsel %vm455, %v3137, -inf
        %3152 = vmax.xlane.f32.xlu0 %v3151
        %v3153 = vpop.xlane.xlu0 %3152
        %v3154 = vsel %vm455, %v3142, -inf
        %3155 = vmax.xlane.f32.xlu0 %v3154
        %v3156 = vpop.xlane.xlu0 %3155
        %v3157 = vsel %vm455, %v3145, -inf
        %3158 = vmax.xlane.f32.xlu0 %v3157
        %v3159 = vpop.xlane.xlu0 %3158
        %v3160 = vsub.f32 %v3134, %v3150
        %v3161 = vsub.f32 %v3137, %v3153
        %v3162 = vsub.f32 %v3142, %v3156
        %v3163 = vsub.f32 %v3145, %v3159
        %v3164 = vmul.f32 %v3160, 1.442695
        %v3165 = vpow.pop %v3164
        %v3166 = vmul.f32 %v3161, 1.442695
        %v3167 = vpow.pop %v3166
        %v3168 = vmul.f32 %v3162, 1.442695
        %v3169 = vpow.pop %v3168
        %v3170 = vmul.f32 %v3163, 1.442695
        %v3171 = vpow.pop %v3170
        %v3172 = vsel %vm455, %v3165, 0.0
        %3173 = vadd.xlane.f32.xlu0 %v3172
        %v3174 = vpop.xlane.xlu0 %3173
        %v3175 = vsel %vm455, %v3167, 0.0
        %3176 = vadd.xlane.f32.xlu0 %v3175
        %v3177 = vpop.xlane.xlu0 %3176
        %v3178 = vsel %vm455, %v3169, 0.0
        %3179 = vadd.xlane.f32.xlu0 %v3178
        %v3180 = vpop.xlane.xlu0 %3179
        %v3181 = vsel %vm455, %v3171, 0.0
        %3182 = vadd.xlane.f32.xlu0 %v3181
        %v3183 = vpop.xlane.xlu0 %3182
        %v3184 = vrcp.pop %v3174
        %v3185 = vrcp.pop %v3177
        %v3186 = vrcp.pop %v3180
        %v3187 = vrcp.pop %v3183
        %v3188 = vmul.f32 %v3165, %v3184
        %v3189 = vmul.f32 %v3167, %v3185
        %v3190 = vmul.f32 %v3169, %v3186
        %v3191 = vmul.f32 %v3171, %v3187
        %v3192 = vpack.c.bf16 %v3189, %v3188
        %v3193 = vpack.c.bf16 %v3191, %v3190
        %v3195 = vsel %vm455, %v3192, 0
        %v3198 = vsel %vm455, %v3193, 0
        %3200 = vmatprep.subr.bf16.mxu0 0
        %3201 = vmatpush1.bf16.msra.mxu0 %v2779
        %3202 = vmatprep.subr.bf16.mxu0 0
        %3203 = vmatpush1.bf16.msra.mxu0 %v2781
        %3204 = vmatprep.subr.bf16.mxu0 0
        %3205 = vmatpush1.bf16.msra.mxu0 0
        %3206 = vmatprep.subr.bf16.mxu0 0
        %3207 = vmatpush1.bf16.msra.mxu0 0
        %3208 = vmatprep.subr.bf16.mxu0 0
        %3209 = vmatpush1.bf16.msra.mxu0 0
        %3210 = vmatprep.subr.bf16.mxu0 0
        %3211 = vmatpush1.bf16.msra.mxu0 0
        %3212 = vmatprep.subr.bf16.mxu0 0
        %3213 = vmatpush1.bf16.msra.mxu0 0
        %3214 = vmatprep.subr.bf16.mxu0 0
        %3215 = vmatpush1.bf16.msra.mxu0 0
        %3216 = vmatprep.subr.bf16.mxu0 0
        %3217 = vmatpush1.bf16.msra.mxu0 0
        %3218 = vmatprep.subr.bf16.mxu0 0
        %3219 = vmatpush1.bf16.msra.mxu0 0
        %3220 = vmatprep.subr.bf16.mxu0 0
        %3221 = vmatpush1.bf16.msra.mxu0 0
        %3222 = vmatprep.subr.bf16.mxu0 0
        %3223 = vmatpush1.bf16.msra.mxu0 0
        %3224 = vmatprep.subr.bf16.mxu0 0
        %3225 = vmatpush1.bf16.msra.mxu0 0
        %3226 = vmatprep.subr.bf16.mxu0 0
        %3227 = vmatpush1.bf16.msra.mxu0 0
        %3228 = vmatprep.subr.bf16.mxu0 0
        %3229 = vmatpush1.bf16.msra.mxu0 0
        %3230 = vmatprep.subr.bf16.mxu0 0
        %3231 = vmatpush1.bf16.msra.mxu0 0
        %3232 = vmatprep.mubr.bf16.mxu0 0
        %3233 = vmatmul.mubr.bf16.gmra.mrb[0].mxu0 %v3195
        %v3234 = vpop.f32.mrb[0].mxu0
        %v3235 = vadd.f32 0.0, %v3234
        %v3236 = vpop.f32.mrb[0].mxu0
        %v3237 = vpop.f32.mrb[0].mxu0
        %v3238 = vadd.f32 0.0, %v3237
        %v3239 = vpop.f32.mrb[0].mxu0
        %3240 = vmatprep.mubr.bf16.mxu0 0
        %3241 = vmatmul.mubr.bf16.gmra.mrb[0].mxu0 %v3198
        %v3242 = vpop.f32.mrb[0].mxu0
        %v3243 = vadd.f32 0.0, %v3242
        %v3244 = vpop.f32.mrb[0].mxu0
        %v3245 = vpop.f32.mrb[0].mxu0
        %v3246 = vadd.f32 0.0, %v3245
        %v3247 = vpop.f32.mrb[0].mxu0
        %3248 = vdwg.mxu0
        %v3249 = vld [vmem:[%s4 + $0x2] sm:$0x1]
        %v3250 = vlaneseq
        %v3251 = vshrl.u32 %v3250, 7
        %v3252 = vsub.s32 0, %v3251
        %v3253 = vrot.slane %v3249, %v3252
        %v3254 = vmul.f32 %v3235, %v3253
        %v3255 = vmul.f32 %v3238, %v3253
        %v3256 = vmul.f32 %v3243, %v3253
        %v3257 = vmul.f32 %v3246, %v3253
        %3262 = vrot.lane.b32.xlu0 %v3254, 64
        %v3263 = vpop.permute.xlu0 %3262
        %3264 = vrot.lane.b32.xlu0 %v3255, 64
        %v3265 = vpop.permute.xlu0 %3264
        %3266 = vrot.lane.b32.xlu0 %v3256, 64
        %v3267 = vpop.permute.xlu0 %3266
        %3268 = vrot.lane.b32.xlu0 %v3257, 64
        %v3269 = vpop.permute.xlu0 %3268
        %v3274 = vadd.f32 %v3071, %v3263
        %v3275 = vadd.f32 %v3072, %v3265
        %v3276 = vadd.f32 %v3073, %v3267
        %v3277 = vadd.f32 %v3074, %v3269
        %v3278 = vld [vmem:[#allocation4] sm:$0xff]
        %v3279 = vld [vmem:[#allocation4 + $0x8] sm:$0xff]
        %3282 = vrot.lane.b32.xlu0 %v3278, 116
        %v3283 = vpop.permute.xlu0 %3282
        %3284 = vrot.lane.b32.xlu0 %v3279, 116
        %v3285 = vpop.permute.xlu0 %3284
        %3286 = vrot.lane.b32.xlu0 %v3278, 84
        %v3287 = vpop.permute.xlu0 %3286
        %3288 = vrot.lane.b32.xlu0 %v3279, 84
        %v3289 = vpop.permute.xlu0 %3288
        %v3291 = vsel %vm2670, %v3283, 0
        %v3294 = vsel %vm2670, %v3285, 0
        %v3297 = vsel %vm2670, %v3287, 0
        %v3300 = vsel %vm2670, %v3289, 0
        %3302 = vmatprep.subr.bf16.mxu0 0
        %3303 = vmatpush1.bf16.xpose.msra.mxu0 %v3297
        %3304 = vmatprep.subr.bf16.mxu0 0
        %3305 = vmatpush1.bf16.xpose.msra.mxu0 %v3300
        %3306 = vmatprep.subr.bf16.mxu0 0
        %3307 = vmatpush1.bf16.xpose.msra.mxu0 0
        %3308 = vmatprep.subr.bf16.mxu0 0
        %3309 = vmatpush1.bf16.xpose.msra.mxu0 0
        %3310 = vmatprep.subr.bf16.mxu0 0
        %3311 = vmatpush1.bf16.xpose.msra.mxu0 0
        %3312 = vmatprep.subr.bf16.mxu0 0
        %3313 = vmatpush1.bf16.xpose.msra.mxu0 0
        %3314 = vmatprep.subr.bf16.mxu0 0
        %3315 = vmatpush1.bf16.xpose.msra.mxu0 0
        %3316 = vmatprep.subr.bf16.mxu0 0
        %3317 = vmatpush1.bf16.xpose.msra.mxu0 0
        %3318 = vmatprep.subr.bf16.mxu0 0
        %3319 = vmatpush1.bf16.xpose.msra.mxu0 0
        %3320 = vmatprep.subr.bf16.mxu0 0
        %3321 = vmatpush1.bf16.xpose.msra.mxu0 0
        %3322 = vmatprep.subr.bf16.mxu0 0
        %3323 = vmatpush1.bf16.xpose.msra.mxu0 0
        %3324 = vmatprep.subr.bf16.mxu0 0
        %3325 = vmatpush1.bf16.xpose.msra.mxu0 0
        %3326 = vmatprep.subr.bf16.mxu0 0
        %3327 = vmatpush1.bf16.xpose.msra.mxu0 0
        %3328 = vmatprep.subr.bf16.mxu0 0
        %3329 = vmatpush1.bf16.xpose.msra.mxu0 0
        %3330 = vmatprep.subr.bf16.mxu0 0
        %3331 = vmatpush1.bf16.xpose.msra.mxu0 0
        %3332 = vmatprep.subr.bf16.mxu0 0
        %3333 = vmatpush1.bf16.xpose.msra.mxu0 0
        %3334 = vmatprep.mubr.bf16.mxu0 0
        %3335 = vmatmul.mubr.bf16.gmra.mrb[0].mxu0 %v3291
        %v3336 = vpop.f32.mrb[0].mxu0
        %v3337 = vadd.f32 0.0, %v3336
        %v3338 = vpop.f32.mrb[0].mxu0
        %v3339 = vpop.f32.mrb[0].mxu0
        %v3340 = vadd.f32 0.0, %v3339
        %v3341 = vpop.f32.mrb[0].mxu0
        %3342 = vmatprep.mubr.bf16.mxu0 0
        %3343 = vmatmul.mubr.bf16.gmra.mrb[0].mxu0 %v3294
        %v3344 = vpop.f32.mrb[0].mxu0
        %v3345 = vadd.f32 0.0, %v3344
        %v3346 = vpop.f32.mrb[0].mxu0
        %v3347 = vpop.f32.mrb[0].mxu0
        %v3348 = vadd.f32 0.0, %v3347
        %v3349 = vpop.f32.mrb[0].mxu0
        %3350 = vdwg.mxu0
        %v3351 = vsel %vm455, %v3337, -inf
        %3352 = vmax.xlane.f32.xlu0 %v3351
        %v3353 = vpop.xlane.xlu0 %3352
        %v3354 = vsel %vm455, %v3340, -inf
        %3355 = vmax.xlane.f32.xlu0 %v3354
        %v3356 = vpop.xlane.xlu0 %3355
        %v3357 = vsel %vm455, %v3345, -inf
        %3358 = vmax.xlane.f32.xlu0 %v3357
        %v3359 = vpop.xlane.xlu0 %3358
        %v3360 = vsel %vm455, %v3348, -inf
        %3361 = vmax.xlane.f32.xlu0 %v3360
        %v3362 = vpop.xlane.xlu0 %3361
        %v3363 = vsub.f32 %v3337, %v3353
        %v3364 = vsub.f32 %v3340, %v3356
        %v3365 = vsub.f32 %v3345, %v3359
        %v3366 = vsub.f32 %v3348, %v3362
        %v3367 = vmul.f32 %v3363, 1.442695
        %v3368 = vpow.pop %v3367
        %v3369 = vmul.f32 %v3364, 1.442695
        %v3370 = vpow.pop %v3369
        %v3371 = vmul.f32 %v3365, 1.442695
        %v3372 = vpow.pop %v3371
        %v3373 = vmul.f32 %v3366, 1.442695
        %v3374 = vpow.pop %v3373
        %v3375 = vsel %vm455, %v3368, 0.0
        %3376 = vadd.xlane.f32.xlu0 %v3375
        %v3377 = vpop.xlane.xlu0 %3376
        %v3378 = vsel %vm455, %v3370, 0.0
        %3379 = vadd.xlane.f32.xlu0 %v3378
        %v3380 = vpop.xlane.xlu0 %3379
        %v3381 = vsel %vm455, %v3372, 0.0
        %3382 = vadd.xlane.f32.xlu0 %v3381
        %v3383 = vpop.xlane.xlu0 %3382
        %v3384 = vsel %vm455, %v3374, 0.0
        %3385 = vadd.xlane.f32.xlu0 %v3384
        %v3386 = vpop.xlane.xlu0 %3385
        %v3387 = vrcp.pop %v3377
        %v3388 = vrcp.pop %v3380
        %v3389 = vrcp.pop %v3383
        %v3390 = vrcp.pop %v3386
        %v3391 = vmul.f32 %v3368, %v3387
        %v3392 = vmul.f32 %v3370, %v3388
        %v3393 = vmul.f32 %v3372, %v3389
        %v3394 = vmul.f32 %v3374, %v3390
        %v3395 = vpack.c.bf16 %v3392, %v3391
        %v3396 = vpack.c.bf16 %v3394, %v3393
        %v3398 = vsel %vm455, %v3395, 0
        %v3401 = vsel %vm455, %v3396, 0
        %3403 = vmatprep.subr.bf16.mxu0 0
        %3404 = vmatpush1.bf16.msra.mxu0 %v2779
        %3405 = vmatprep.subr.bf16.mxu0 0
        %3406 = vmatpush1.bf16.msra.mxu0 %v2781
        %3407 = vmatprep.subr.bf16.mxu0 0
        %3408 = vmatpush1.bf16.msra.mxu0 0
        %3409 = vmatprep.subr.bf16.mxu0 0
        %3410 = vmatpush1.bf16.msra.mxu0 0
        %3411 = vmatprep.subr.bf16.mxu0 0
        %3412 = vmatpush1.bf16.msra.mxu0 0
        %3413 = vmatprep.subr.bf16.mxu0 0
        %3414 = vmatpush1.bf16.msra.mxu0 0
        %3415 = vmatprep.subr.bf16.mxu0 0
        %3416 = vmatpush1.bf16.msra.mxu0 0
        %3417 = vmatprep.subr.bf16.mxu0 0
        %3418 = vmatpush1.bf16.msra.mxu0 0
        %3419 = vmatprep.subr.bf16.mxu0 0
        %3420 = vmatpush1.bf16.msra.mxu0 0
        %3421 = vmatprep.subr.bf16.mxu0 0
        %3422 = vmatpush1.bf16.msra.mxu0 0
        %3423 = vmatprep.subr.bf16.mxu0 0
        %3424 = vmatpush1.bf16.msra.mxu0 0
        %3425 = vmatprep.subr.bf16.mxu0 0
        %3426 = vmatpush1.bf16.msra.mxu0 0
        %3427 = vmatprep.subr.bf16.mxu0 0
        %3428 = vmatpush1.bf16.msra.mxu0 0
        %3429 = vmatprep.subr.bf16.mxu0 0
        %3430 = vmatpush1.bf16.msra.mxu0 0
        %3431 = vmatprep.subr.bf16.mxu0 0
        %3432 = vmatpush1.bf16.msra.mxu0 0
        %3433 = vmatprep.subr.bf16.mxu0 0
        %3434 = vmatpush1.bf16.msra.mxu0 0
        %3435 = vmatprep.mubr.bf16.mxu0 0
        %3436 = vmatmul.mubr.bf16.gmra.mrb[0].mxu0 %v3398
        %v3437 = vpop.f32.mrb[0].mxu0
        %v3438 = vadd.f32 0.0, %v3437
        %v3439 = vpop.f32.mrb[0].mxu0
        %v3440 = vpop.f32.mrb[0].mxu0
        %v3441 = vadd.f32 0.0, %v3440
        %v3442 = vpop.f32.mrb[0].mxu0
        %3443 = vmatprep.mubr.bf16.mxu0 0
        %3444 = vmatmul.mubr.bf16.gmra.mrb[0].mxu0 %v3401
        %v3445 = vpop.f32.mrb[0].mxu0
        %v3446 = vadd.f32 0.0, %v3445
        %v3447 = vpop.f32.mrb[0].mxu0
        %v3448 = vpop.f32.mrb[0].mxu0
        %v3449 = vadd.f32 0.0, %v3448
        %v3450 = vpop.f32.mrb[0].mxu0
        %3451 = vdwg.mxu0
        %v3452 = vld [vmem:[%s4 + $0x3] sm:$0x1]
        %v3453 = vlaneseq
        %v3454 = vshrl.u32 %v3453, 7
        %v3455 = vsub.s32 0, %v3454
        %v3456 = vrot.slane %v3452, %v3455
        %v3457 = vmul.f32 %v3438, %v3456
        %v3458 = vmul.f32 %v3441, %v3456
        %v3459 = vmul.f32 %v3446, %v3456
        %v3460 = vmul.f32 %v3449, %v3456
        %3465 = vrot.lane.b32.xlu0 %v3457, 64
        %v3466 = vpop.permute.xlu0 %3465
        %3467 = vrot.lane.b32.xlu0 %v3458, 64
        %v3468 = vpop.permute.xlu0 %3467
        %3469 = vrot.lane.b32.xlu0 %v3459, 64
        %v3470 = vpop.permute.xlu0 %3469
        %3471 = vrot.lane.b32.xlu0 %v3460, 64
        %v3472 = vpop.permute.xlu0 %3471
        %v3477 = vadd.f32 %v3274, %v3466
        %v3478 = vadd.f32 %v3275, %v3468
        %v3479 = vadd.f32 %v3276, %v3470
        %v3480 = vadd.f32 %v3277, %v3472
        %v3481 = vld [vmem:[#allocation4] sm:$0xff]
        %v3482 = vld [vmem:[#allocation4 + $0x8] sm:$0xff]
        %3485 = vrot.lane.b32.xlu0 %v3481, 112
        %v3486 = vpop.permute.xlu0 %3485
        %3487 = vrot.lane.b32.xlu0 %v3482, 112
        %v3488 = vpop.permute.xlu0 %3487
        %3489 = vrot.lane.b32.xlu0 %v3481, 80
        %v3490 = vpop.permute.xlu0 %3489
        %3491 = vrot.lane.b32.xlu0 %v3482, 80
        %v3492 = vpop.permute.xlu0 %3491
        %v3494 = vsel %vm2670, %v3486, 0
        %v3497 = vsel %vm2670, %v3488, 0
        %v3500 = vsel %vm2670, %v3490, 0
        %v3503 = vsel %vm2670, %v3492, 0
        %3505 = vmatprep.subr.bf16.mxu0 0
        %3506 = vmatpush1.bf16.xpose.msra.mxu0 %v3500
        %3507 = vmatprep.subr.bf16.mxu0 0
        %3508 = vmatpush1.bf16.xpose.msra.mxu0 %v3503
        %3509 = vmatprep.subr.bf16.mxu0 0
        %3510 = vmatpush1.bf16.xpose.msra.mxu0 0
        %3511 = vmatprep.subr.bf16.mxu0 0
        %3512 = vmatpush1.bf16.xpose.msra.mxu0 0
        %3513 = vmatprep.subr.bf16.mxu0 0
        %3514 = vmatpush1.bf16.xpose.msra.mxu0 0
        %3515 = vmatprep.subr.bf16.mxu0 0
        %3516 = vmatpush1.bf16.xpose.msra.mxu0 0
        %3517 = vmatprep.subr.bf16.mxu0 0
        %3518 = vmatpush1.bf16.xpose.msra.mxu0 0
        %3519 = vmatprep.subr.bf16.mxu0 0
        %3520 = vmatpush1.bf16.xpose.msra.mxu0 0
        %3521 = vmatprep.subr.bf16.mxu0 0
        %3522 = vmatpush1.bf16.xpose.msra.mxu0 0
        %3523 = vmatprep.subr.bf16.mxu0 0
        %3524 = vmatpush1.bf16.xpose.msra.mxu0 0
        %3525 = vmatprep.subr.bf16.mxu0 0
        %3526 = vmatpush1.bf16.xpose.msra.mxu0 0
        %3527 = vmatprep.subr.bf16.mxu0 0
        %3528 = vmatpush1.bf16.xpose.msra.mxu0 0
        %3529 = vmatprep.subr.bf16.mxu0 0
        %3530 = vmatpush1.bf16.xpose.msra.mxu0 0
        %3531 = vmatprep.subr.bf16.mxu0 0
        %3532 = vmatpush1.bf16.xpose.msra.mxu0 0
        %3533 = vmatprep.subr.bf16.mxu0 0
        %3534 = vmatpush1.bf16.xpose.msra.mxu0 0
        %3535 = vmatprep.subr.bf16.mxu0 0
        %3536 = vmatpush1.bf16.xpose.msra.mxu0 0
        %3537 = vmatprep.mubr.bf16.mxu0 0
        %3538 = vmatmul.mubr.bf16.gmra.mrb[0].mxu0 %v3494
        %v3539 = vpop.f32.mrb[0].mxu0
        %v3540 = vadd.f32 0.0, %v3539
        %v3541 = vpop.f32.mrb[0].mxu0
        %v3542 = vpop.f32.mrb[0].mxu0
        %v3543 = vadd.f32 0.0, %v3542
        %v3544 = vpop.f32.mrb[0].mxu0
        %3545 = vmatprep.mubr.bf16.mxu0 0
        %3546 = vmatmul.mubr.bf16.gmra.mrb[0].mxu0 %v3497
        %v3547 = vpop.f32.mrb[0].mxu0
        %v3548 = vadd.f32 0.0, %v3547
        %v3549 = vpop.f32.mrb[0].mxu0
        %v3550 = vpop.f32.mrb[0].mxu0
        %v3551 = vadd.f32 0.0, %v3550
        %v3552 = vpop.f32.mrb[0].mxu0
        %3553 = vdwg.mxu0
        %v3554 = vsel %vm455, %v3540, -inf
        %3555 = vmax.xlane.f32.xlu0 %v3554
        %v3556 = vpop.xlane.xlu0 %3555
        %v3557 = vsel %vm455, %v3543, -inf
        %3558 = vmax.xlane.f32.xlu0 %v3557
        %v3559 = vpop.xlane.xlu0 %3558
        %v3560 = vsel %vm455, %v3548, -inf
        %3561 = vmax.xlane.f32.xlu0 %v3560
        %v3562 = vpop.xlane.xlu0 %3561
        %v3563 = vsel %vm455, %v3551, -inf
        %3564 = vmax.xlane.f32.xlu0 %v3563
        %v3565 = vpop.xlane.xlu0 %3564
        %v3566 = vsub.f32 %v3540, %v3556
        %v3567 = vsub.f32 %v3543, %v3559
        %v3568 = vsub.f32 %v3548, %v3562
        %v3569 = vsub.f32 %v3551, %v3565
        %v3570 = vmul.f32 %v3566, 1.442695
        %v3571 = vpow.pop %v3570
        %v3572 = vmul.f32 %v3567, 1.442695
        %v3573 = vpow.pop %v3572
        %v3574 = vmul.f32 %v3568, 1.442695
        %v3575 = vpow.pop %v3574
        %v3576 = vmul.f32 %v3569, 1.442695
        %v3577 = vpow.pop %v3576
        %v3578 = vsel %vm455, %v3571, 0.0
        %3579 = vadd.xlane.f32.xlu0 %v3578
        %v3580 = vpop.xlane.xlu0 %3579
        %v3581 = vsel %vm455, %v3573, 0.0
        %3582 = vadd.xlane.f32.xlu0 %v3581
        %v3583 = vpop.xlane.xlu0 %3582
        %v3584 = vsel %vm455, %v3575, 0.0
        %3585 = vadd.xlane.f32.xlu0 %v3584
        %v3586 = vpop.xlane.xlu0 %3585
        %v3587 = vsel %vm455, %v3577, 0.0
        %3588 = vadd.xlane.f32.xlu0 %v3587
        %v3589 = vpop.xlane.xlu0 %3588
        %v3590 = vrcp.pop %v3580
        %v3591 = vrcp.pop %v3583
        %v3592 = vrcp.pop %v3586
        %v3593 = vrcp.pop %v3589
        %v3594 = vmul.f32 %v3571, %v3590
        %v3595 = vmul.f32 %v3573, %v3591
        %v3596 = vmul.f32 %v3575, %v3592
        %v3597 = vmul.f32 %v3577, %v3593
        %v3598 = vpack.c.bf16 %v3595, %v3594
        %v3599 = vpack.c.bf16 %v3597, %v3596
        %v3601 = vsel %vm455, %v3598, 0
        %v3604 = vsel %vm455, %v3599, 0
        %3606 = vmatprep.subr.bf16.mxu0 0
        %3607 = vmatpush1.bf16.msra.mxu0 %v2779
        %3608 = vmatprep.subr.bf16.mxu0 0
        %3609 = vmatpush1.bf16.msra.mxu0 %v2781
        %3610 = vmatprep.subr.bf16.mxu0 0
        %3611 = vmatpush1.bf16.msra.mxu0 0
        %3612 = vmatprep.subr.bf16.mxu0 0
        %3613 = vmatpush1.bf16.msra.mxu0 0
        %3614 = vmatprep.subr.bf16.mxu0 0
        %3615 = vmatpush1.bf16.msra.mxu0 0
        %3616 = vmatprep.subr.bf16.mxu0 0
        %3617 = vmatpush1.bf16.msra.mxu0 0
        %3618 = vmatprep.subr.bf16.mxu0 0
        %3619 = vmatpush1.bf16.msra.mxu0 0
        %3620 = vmatprep.subr.bf16.mxu0 0
        %3621 = vmatpush1.bf16.msra.mxu0 0
        %3622 = vmatprep.subr.bf16.mxu0 0
        %3623 = vmatpush1.bf16.msra.mxu0 0
        %3624 = vmatprep.subr.bf16.mxu0 0
        %3625 = vmatpush1.bf16.msra.mxu0 0
        %3626 = vmatprep.subr.bf16.mxu0 0
        %3627 = vmatpush1.bf16.msra.mxu0 0
        %3628 = vmatprep.subr.bf16.mxu0 0
        %3629 = vmatpush1.bf16.msra.mxu0 0
        %3630 = vmatprep.subr.bf16.mxu0 0
        %3631 = vmatpush1.bf16.msra.mxu0 0
        %3632 = vmatprep.subr.bf16.mxu0 0
        %3633 = vmatpush1.bf16.msra.mxu0 0
        %3634 = vmatprep.subr.bf16.mxu0 0
        %3635 = vmatpush1.bf16.msra.mxu0 0
        %3636 = vmatprep.subr.bf16.mxu0 0
        %3637 = vmatpush1.bf16.msra.mxu0 0
        %3638 = vmatprep.mubr.bf16.mxu0 0
        %3639 = vmatmul.mubr.bf16.gmra.mrb[0].mxu0 %v3601
        %v3640 = vpop.f32.mrb[0].mxu0
        %v3641 = vadd.f32 0.0, %v3640
        %v3642 = vpop.f32.mrb[0].mxu0
        %v3643 = vpop.f32.mrb[0].mxu0
        %v3644 = vadd.f32 0.0, %v3643
        %v3645 = vpop.f32.mrb[0].mxu0
        %3646 = vmatprep.mubr.bf16.mxu0 0
        %3647 = vmatmul.mubr.bf16.gmra.mrb[0].mxu0 %v3604
        %v3648 = vpop.f32.mrb[0].mxu0
        %v3649 = vadd.f32 0.0, %v3648
        %v3650 = vpop.f32.mrb[0].mxu0
        %v3651 = vpop.f32.mrb[0].mxu0
        %v3652 = vadd.f32 0.0, %v3651
        %v3653 = vpop.f32.mrb[0].mxu0
        %3654 = vdwg.mxu0
        %v3655 = vld [vmem:[%s4 + $0x4] sm:$0x1]
        %v3656 = vlaneseq
        %v3657 = vshrl.u32 %v3656, 7
        %v3658 = vsub.s32 0, %v3657
        %v3659 = vrot.slane %v3655, %v3658
        %v3660 = vmul.f32 %v3641, %v3659
        %v3661 = vmul.f32 %v3644, %v3659
        %v3662 = vmul.f32 %v3649, %v3659
        %v3663 = vmul.f32 %v3652, %v3659
        %3668 = vrot.lane.b32.xlu0 %v3660, 64
        %v3669 = vpop.permute.xlu0 %3668
        %3670 = vrot.lane.b32.xlu0 %v3661, 64
        %v3671 = vpop.permute.xlu0 %3670
        %3672 = vrot.lane.b32.xlu0 %v3662, 64
        %v3673 = vpop.permute.xlu0 %3672
        %3674 = vrot.lane.b32.xlu0 %v3663, 64
        %v3675 = vpop.permute.xlu0 %3674
        %v3680 = vadd.f32 %v3477, %v3669
        %v3681 = vadd.f32 %v3478, %v3671
        %v3682 = vadd.f32 %v3479, %v3673
        %v3683 = vadd.f32 %v3480, %v3675
        %v3684 = vld [vmem:[#allocation4] sm:$0xff]
        %v3685 = vld [vmem:[#allocation4 + $0x8] sm:$0xff]
        %3688 = vrot.lane.b32.xlu0 %v3684, 108
        %v3689 = vpop.permute.xlu0 %3688
        %3690 = vrot.lane.b32.xlu0 %v3685, 108
        %v3691 = vpop.permute.xlu0 %3690
        %3692 = vrot.lane.b32.xlu0 %v3684, 76
        %v3693 = vpop.permute.xlu0 %3692
        %3694 = vrot.lane.b32.xlu0 %v3685, 76
        %v3695 = vpop.permute.xlu0 %3694
        %v3697 = vsel %vm2670, %v3689, 0
        %v3700 = vsel %vm2670, %v3691, 0
        %v3703 = vsel %vm2670, %v3693, 0
        %v3706 = vsel %vm2670, %v3695, 0
        %3708 = vmatprep.subr.bf16.mxu0 0
        %3709 = vmatpush1.bf16.xpose.msra.mxu0 %v3703
        %3710 = vmatprep.subr.bf16.mxu0 0
        %3711 = vmatpush1.bf16.xpose.msra.mxu0 %v3706
        %3712 = vmatprep.subr.bf16.mxu0 0
        %3713 = vmatpush1.bf16.xpose.msra.mxu0 0
        %3714 = vmatprep.subr.bf16.mxu0 0
        %3715 = vmatpush1.bf16.xpose.msra.mxu0 0
        %3716 = vmatprep.subr.bf16.mxu0 0
        %3717 = vmatpush1.bf16.xpose.msra.mxu0 0
        %3718 = vmatprep.subr.bf16.mxu0 0
        %3719 = vmatpush1.bf16.xpose.msra.mxu0 0
        %3720 = vmatprep.subr.bf16.mxu0 0
        %3721 = vmatpush1.bf16.xpose.msra.mxu0 0
        %3722 = vmatprep.subr.bf16.mxu0 0
        %3723 = vmatpush1.bf16.xpose.msra.mxu0 0
        %3724 = vmatprep.subr.bf16.mxu0 0
        %3725 = vmatpush1.bf16.xpose.msra.mxu0 0
        %3726 = vmatprep.subr.bf16.mxu0 0
        %3727 = vmatpush1.bf16.xpose.msra.mxu0 0
        %3728 = vmatprep.subr.bf16.mxu0 0
        %3729 = vmatpush1.bf16.xpose.msra.mxu0 0
        %3730 = vmatprep.subr.bf16.mxu0 0
        %3731 = vmatpush1.bf16.xpose.msra.mxu0 0
        %3732 = vmatprep.subr.bf16.mxu0 0
        %3733 = vmatpush1.bf16.xpose.msra.mxu0 0
        %3734 = vmatprep.subr.bf16.mxu0 0
        %3735 = vmatpush1.bf16.xpose.msra.mxu0 0
        %3736 = vmatprep.subr.bf16.mxu0 0
        %3737 = vmatpush1.bf16.xpose.msra.mxu0 0
        %3738 = vmatprep.subr.bf16.mxu0 0
        %3739 = vmatpush1.bf16.xpose.msra.mxu0 0
        %3740 = vmatprep.mubr.bf16.mxu0 0
        %3741 = vmatmul.mubr.bf16.gmra.mrb[0].mxu0 %v3697
        %v3742 = vpop.f32.mrb[0].mxu0
        %v3743 = vadd.f32 0.0, %v3742
        %v3744 = vpop.f32.mrb[0].mxu0
        %v3745 = vpop.f32.mrb[0].mxu0
        %v3746 = vadd.f32 0.0, %v3745
        %v3747 = vpop.f32.mrb[0].mxu0
        %3748 = vmatprep.mubr.bf16.mxu0 0
        %3749 = vmatmul.mubr.bf16.gmra.mrb[0].mxu0 %v3700
        %v3750 = vpop.f32.mrb[0].mxu0
        %v3751 = vadd.f32 0.0, %v3750
        %v3752 = vpop.f32.mrb[0].mxu0
        %v3753 = vpop.f32.mrb[0].mxu0
        %v3754 = vadd.f32 0.0, %v3753
        %v3755 = vpop.f32.mrb[0].mxu0
        %3756 = vdwg.mxu0
        %v3757 = vsel %vm455, %v3743, -inf
        %3758 = vmax.xlane.f32.xlu0 %v3757
        %v3759 = vpop.xlane.xlu0 %3758
        %v3760 = vsel %vm455, %v3746, -inf
        %3761 = vmax.xlane.f32.xlu0 %v3760
        %v3762 = vpop.xlane.xlu0 %3761
        %v3763 = vsel %vm455, %v3751, -inf
        %3764 = vmax.xlane.f32.xlu0 %v3763
        %v3765 = vpop.xlane.xlu0 %3764
        %v3766 = vsel %vm455, %v3754, -inf
        %3767 = vmax.xlane.f32.xlu0 %v3766
        %v3768 = vpop.xlane.xlu0 %3767
        %v3769 = vsub.f32 %v3743, %v3759
        %v3770 = vsub.f32 %v3746, %v3762
        %v3771 = vsub.f32 %v3751, %v3765
        %v3772 = vsub.f32 %v3754, %v3768
        %v3773 = vmul.f32 %v3769, 1.442695
        %v3774 = vpow.pop %v3773
        %v3775 = vmul.f32 %v3770, 1.442695
        %v3776 = vpow.pop %v3775
        %v3777 = vmul.f32 %v3771, 1.442695
        %v3778 = vpow.pop %v3777
        %v3779 = vmul.f32 %v3772, 1.442695
        %v3780 = vpow.pop %v3779
        %v3781 = vsel %vm455, %v3774, 0.0
        %3782 = vadd.xlane.f32.xlu0 %v3781
        %v3783 = vpop.xlane.xlu0 %3782
        %v3784 = vsel %vm455, %v3776, 0.0
        %3785 = vadd.xlane.f32.xlu0 %v3784
        %v3786 = vpop.xlane.xlu0 %3785
        %v3787 = vsel %vm455, %v3778, 0.0
        %3788 = vadd.xlane.f32.xlu0 %v3787
        %v3789 = vpop.xlane.xlu0 %3788
        %v3790 = vsel %vm455, %v3780, 0.0
        %3791 = vadd.xlane.f32.xlu0 %v3790
        %v3792 = vpop.xlane.xlu0 %3791
        %v3793 = vrcp.pop %v3783
        %v3794 = vrcp.pop %v3786
        %v3795 = vrcp.pop %v3789
        %v3796 = vrcp.pop %v3792
        %v3797 = vmul.f32 %v3774, %v3793
        %v3798 = vmul.f32 %v3776, %v3794
        %v3799 = vmul.f32 %v3778, %v3795
        %v3800 = vmul.f32 %v3780, %v3796
        %v3801 = vpack.c.bf16 %v3798, %v3797
        %v3802 = vpack.c.bf16 %v3800, %v3799
        %v3804 = vsel %vm455, %v3801, 0
        %v3807 = vsel %vm455, %v3802, 0
        %3809 = vmatprep.subr.bf16.mxu0 0
        %3810 = vmatpush1.bf16.msra.mxu0 %v2779
        %3811 = vmatprep.subr.bf16.mxu0 0
        %3812 = vmatpush1.bf16.msra.mxu0 %v2781
        %3813 = vmatprep.subr.bf16.mxu0 0
        %3814 = vmatpush1.bf16.msra.mxu0 0
        %3815 = vmatprep.subr.bf16.mxu0 0
        %3816 = vmatpush1.bf16.msra.mxu0 0
        %3817 = vmatprep.subr.bf16.mxu0 0
        %3818 = vmatpush1.bf16.msra.mxu0 0
        %3819 = vmatprep.subr.bf16.mxu0 0
        %3820 = vmatpush1.bf16.msra.mxu0 0
        %3821 = vmatprep.subr.bf16.mxu0 0
        %3822 = vmatpush1.bf16.msra.mxu0 0
        %3823 = vmatprep.subr.bf16.mxu0 0
        %3824 = vmatpush1.bf16.msra.mxu0 0
        %3825 = vmatprep.subr.bf16.mxu0 0
        %3826 = vmatpush1.bf16.msra.mxu0 0
        %3827 = vmatprep.subr.bf16.mxu0 0
        %3828 = vmatpush1.bf16.msra.mxu0 0
        %3829 = vmatprep.subr.bf16.mxu0 0
        %3830 = vmatpush1.bf16.msra.mxu0 0
        %3831 = vmatprep.subr.bf16.mxu0 0
        %3832 = vmatpush1.bf16.msra.mxu0 0
        %3833 = vmatprep.subr.bf16.mxu0 0
        %3834 = vmatpush1.bf16.msra.mxu0 0
        %3835 = vmatprep.subr.bf16.mxu0 0
        %3836 = vmatpush1.bf16.msra.mxu0 0
        %3837 = vmatprep.subr.bf16.mxu0 0
        %3838 = vmatpush1.bf16.msra.mxu0 0
        %3839 = vmatprep.subr.bf16.mxu0 0
        %3840 = vmatpush1.bf16.msra.mxu0 0
        %3841 = vmatprep.mubr.bf16.mxu0 0
        %3842 = vmatmul.mubr.bf16.gmra.mrb[0].mxu0 %v3804
        %v3843 = vpop.f32.mrb[0].mxu0
        %v3844 = vadd.f32 0.0, %v3843
        %v3845 = vpop.f32.mrb[0].mxu0
        %v3846 = vpop.f32.mrb[0].mxu0
        %v3847 = vadd.f32 0.0, %v3846
        %v3848 = vpop.f32.mrb[0].mxu0
        %3849 = vmatprep.mubr.bf16.mxu0 0
        %3850 = vmatmul.mubr.bf16.gmra.mrb[0].mxu0 %v3807
        %v3851 = vpop.f32.mrb[0].mxu0
        %v3852 = vadd.f32 0.0, %v3851
        %v3853 = vpop.f32.mrb[0].mxu0
        %v3854 = vpop.f32.mrb[0].mxu0
        %v3855 = vadd.f32 0.0, %v3854
        %v3856 = vpop.f32.mrb[0].mxu0
        %3857 = vdwg.mxu0
        %v3858 = vld [vmem:[%s4 + $0x5] sm:$0x1]
        %v3859 = vlaneseq
        %v3860 = vshrl.u32 %v3859, 7
        %v3861 = vsub.s32 0, %v3860
        %v3862 = vrot.slane %v3858, %v3861
        %v3863 = vmul.f32 %v3844, %v3862
        %v3864 = vmul.f32 %v3847, %v3862
        %v3865 = vmul.f32 %v3852, %v3862
        %v3866 = vmul.f32 %v3855, %v3862
        %3871 = vrot.lane.b32.xlu0 %v3863, 64
        %v3872 = vpop.permute.xlu0 %3871
        %3873 = vrot.lane.b32.xlu0 %v3864, 64
        %v3874 = vpop.permute.xlu0 %3873
        %3875 = vrot.lane.b32.xlu0 %v3865, 64
        %v3876 = vpop.permute.xlu0 %3875
        %3877 = vrot.lane.b32.xlu0 %v3866, 64
        %v3878 = vpop.permute.xlu0 %3877
        %v3883 = vadd.f32 %v3680, %v3872
        %v3884 = vadd.f32 %v3681, %v3874
        %v3885 = vadd.f32 %v3682, %v3876
        %v3886 = vadd.f32 %v3683, %v3878
        %v3887 = vld [vmem:[#allocation4] sm:$0xff]
        %v3888 = vld [vmem:[#allocation4 + $0x8] sm:$0xff]
        %3891 = vrot.lane.b32.xlu0 %v3887, 104
        %v3892 = vpop.permute.xlu0 %3891
        %3893 = vrot.lane.b32.xlu0 %v3888, 104
        %v3894 = vpop.permute.xlu0 %3893
        %3895 = vrot.lane.b32.xlu0 %v3887, 72
        %v3896 = vpop.permute.xlu0 %3895
        %3897 = vrot.lane.b32.xlu0 %v3888, 72
        %v3898 = vpop.permute.xlu0 %3897
        %v3900 = vsel %vm2670, %v3892, 0
        %v3903 = vsel %vm2670, %v3894, 0
        %v3906 = vsel %vm2670, %v3896, 0
        %v3909 = vsel %vm2670, %v3898, 0
        %3911 = vmatprep.subr.bf16.mxu0 0
        %3912 = vmatpush1.bf16.xpose.msra.mxu0 %v3906
        %3913 = vmatprep.subr.bf16.mxu0 0
        %3914 = vmatpush1.bf16.xpose.msra.mxu0 %v3909
        %3915 = vmatprep.subr.bf16.mxu0 0
        %3916 = vmatpush1.bf16.xpose.msra.mxu0 0
        %3917 = vmatprep.subr.bf16.mxu0 0
        %3918 = vmatpush1.bf16.xpose.msra.mxu0 0
        %3919 = vmatprep.subr.bf16.mxu0 0
        %3920 = vmatpush1.bf16.xpose.msra.mxu0 0
        %3921 = vmatprep.subr.bf16.mxu0 0
        %3922 = vmatpush1.bf16.xpose.msra.mxu0 0
        %3923 = vmatprep.subr.bf16.mxu0 0
        %3924 = vmatpush1.bf16.xpose.msra.mxu0 0
        %3925 = vmatprep.subr.bf16.mxu0 0
        %3926 = vmatpush1.bf16.xpose.msra.mxu0 0
        %3927 = vmatprep.subr.bf16.mxu0 0
        %3928 = vmatpush1.bf16.xpose.msra.mxu0 0
        %3929 = vmatprep.subr.bf16.mxu0 0
        %3930 = vmatpush1.bf16.xpose.msra.mxu0 0
        %3931 = vmatprep.subr.bf16.mxu0 0
        %3932 = vmatpush1.bf16.xpose.msra.mxu0 0
        %3933 = vmatprep.subr.bf16.mxu0 0
        %3934 = vmatpush1.bf16.xpose.msra.mxu0 0
        %3935 = vmatprep.subr.bf16.mxu0 0
        %3936 = vmatpush1.bf16.xpose.msra.mxu0 0
        %3937 = vmatprep.subr.bf16.mxu0 0
        %3938 = vmatpush1.bf16.xpose.msra.mxu0 0
        %3939 = vmatprep.subr.bf16.mxu0 0
        %3940 = vmatpush1.bf16.xpose.msra.mxu0 0
        %3941 = vmatprep.subr.bf16.mxu0 0
        %3942 = vmatpush1.bf16.xpose.msra.mxu0 0
        %3943 = vmatprep.mubr.bf16.mxu0 0
        %3944 = vmatmul.mubr.bf16.gmra.mrb[0].mxu0 %v3900
        %v3945 = vpop.f32.mrb[0].mxu0
        %v3946 = vadd.f32 0.0, %v3945
        %v3947 = vpop.f32.mrb[0].mxu0
        %v3948 = vpop.f32.mrb[0].mxu0
        %v3949 = vadd.f32 0.0, %v3948
        %v3950 = vpop.f32.mrb[0].mxu0
        %3951 = vmatprep.mubr.bf16.mxu0 0
        %3952 = vmatmul.mubr.bf16.gmra.mrb[0].mxu0 %v3903
        %v3953 = vpop.f32.mrb[0].mxu0
        %v3954 = vadd.f32 0.0, %v3953
        %v3955 = vpop.f32.mrb[0].mxu0
        %v3956 = vpop.f32.mrb[0].mxu0
        %v3957 = vadd.f32 0.0, %v3956
        %v3958 = vpop.f32.mrb[0].mxu0
        %3959 = vdwg.mxu0
        %v3960 = vsel %vm455, %v3946, -inf
        %3961 = vmax.xlane.f32.xlu0 %v3960
        %v3962 = vpop.xlane.xlu0 %3961
        %v3963 = vsel %vm455, %v3949, -inf
        %3964 = vmax.xlane.f32.xlu0 %v3963
        %v3965 = vpop.xlane.xlu0 %3964
        %v3966 = vsel %vm455, %v3954, -inf
        %3967 = vmax.xlane.f32.xlu0 %v3966
        %v3968 = vpop.xlane.xlu0 %3967
        %v3969 = vsel %vm455, %v3957, -inf
        %3970 = vmax.xlane.f32.xlu0 %v3969
        %v3971 = vpop.xlane.xlu0 %3970
        %v3972 = vsub.f32 %v3946, %v3962
        %v3973 = vsub.f32 %v3949, %v3965
        %v3974 = vsub.f32 %v3954, %v3968
        %v3975 = vsub.f32 %v3957, %v3971
        %v3976 = vmul.f32 %v3972, 1.442695
        %v3977 = vpow.pop %v3976
        %v3978 = vmul.f32 %v3973, 1.442695
        %v3979 = vpow.pop %v3978
        %v3980 = vmul.f32 %v3974, 1.442695
        %v3981 = vpow.pop %v3980
        %v3982 = vmul.f32 %v3975, 1.442695
        %v3983 = vpow.pop %v3982
        %v3984 = vsel %vm455, %v3977, 0.0
        %3985 = vadd.xlane.f32.xlu0 %v3984
        %v3986 = vpop.xlane.xlu0 %3985
        %v3987 = vsel %vm455, %v3979, 0.0
        %3988 = vadd.xlane.f32.xlu0 %v3987
        %v3989 = vpop.xlane.xlu0 %3988
        %v3990 = vsel %vm455, %v3981, 0.0
        %3991 = vadd.xlane.f32.xlu0 %v3990
        %v3992 = vpop.xlane.xlu0 %3991
        %v3993 = vsel %vm455, %v3983, 0.0
        %3994 = vadd.xlane.f32.xlu0 %v3993
        %v3995 = vpop.xlane.xlu0 %3994
        %v3996 = vrcp.pop %v3986
        %v3997 = vrcp.pop %v3989
        %v3998 = vrcp.pop %v3992
        %v3999 = vrcp.pop %v3995
        %v4000 = vmul.f32 %v3977, %v3996
        %v4001 = vmul.f32 %v3979, %v3997
        %v4002 = vmul.f32 %v3981, %v3998
        %v4003 = vmul.f32 %v3983, %v3999
        %v4004 = vpack.c.bf16 %v4001, %v4000
        %v4005 = vpack.c.bf16 %v4003, %v4002
        %v4007 = vsel %vm455, %v4004, 0
        %v4010 = vsel %vm455, %v4005, 0
        %4012 = vmatprep.subr.bf16.mxu0 0
        %4013 = vmatpush1.bf16.msra.mxu0 %v2779
        %4014 = vmatprep.subr.bf16.mxu0 0
        %4015 = vmatpush1.bf16.msra.mxu0 %v2781
        %4016 = vmatprep.subr.bf16.mxu0 0
        %4017 = vmatpush1.bf16.msra.mxu0 0
        %4018 = vmatprep.subr.bf16.mxu0 0
        %4019 = vmatpush1.bf16.msra.mxu0 0
        %4020 = vmatprep.subr.bf16.mxu0 0
        %4021 = vmatpush1.bf16.msra.mxu0 0
        %4022 = vmatprep.subr.bf16.mxu0 0
        %4023 = vmatpush1.bf16.msra.mxu0 0
        %4024 = vmatprep.subr.bf16.mxu0 0
        %4025 = vmatpush1.bf16.msra.mxu0 0
        %4026 = vmatprep.subr.bf16.mxu0 0
        %4027 = vmatpush1.bf16.msra.mxu0 0
        %4028 = vmatprep.subr.bf16.mxu0 0
        %4029 = vmatpush1.bf16.msra.mxu0 0
        %4030 = vmatprep.subr.bf16.mxu0 0
        %4031 = vmatpush1.bf16.msra.mxu0 0
        %4032 = vmatprep.subr.bf16.mxu0 0
        %4033 = vmatpush1.bf16.msra.mxu0 0
        %4034 = vmatprep.subr.bf16.mxu0 0
        %4035 = vmatpush1.bf16.msra.mxu0 0
        %4036 = vmatprep.subr.bf16.mxu0 0
        %4037 = vmatpush1.bf16.msra.mxu0 0
        %4038 = vmatprep.subr.bf16.mxu0 0
        %4039 = vmatpush1.bf16.msra.mxu0 0
        %4040 = vmatprep.subr.bf16.mxu0 0
        %4041 = vmatpush1.bf16.msra.mxu0 0
        %4042 = vmatprep.subr.bf16.mxu0 0
        %4043 = vmatpush1.bf16.msra.mxu0 0
        %4044 = vmatprep.mubr.bf16.mxu0 0
        %4045 = vmatmul.mubr.bf16.gmra.mrb[0].mxu0 %v4007
        %v4046 = vpop.f32.mrb[0].mxu0
        %v4047 = vadd.f32 0.0, %v4046
        %v4048 = vpop.f32.mrb[0].mxu0
        %v4049 = vpop.f32.mrb[0].mxu0
        %v4050 = vadd.f32 0.0, %v4049
        %v4051 = vpop.f32.mrb[0].mxu0
        %4052 = vmatprep.mubr.bf16.mxu0 0
        %4053 = vmatmul.mubr.bf16.gmra.mrb[0].mxu0 %v4010
        %v4054 = vpop.f32.mrb[0].mxu0
        %v4055 = vadd.f32 0.0, %v4054
        %v4056 = vpop.f32.mrb[0].mxu0
        %v4057 = vpop.f32.mrb[0].mxu0
        %v4058 = vadd.f32 0.0, %v4057
        %v4059 = vpop.f32.mrb[0].mxu0
        %4060 = vdwg.mxu0
        %v4061 = vld [vmem:[%s4 + $0x6] sm:$0x1]
        %v4062 = vlaneseq
        %v4063 = vshrl.u32 %v4062, 7
        %v4064 = vsub.s32 0, %v4063
        %v4065 = vrot.slane %v4061, %v4064
        %v4066 = vmul.f32 %v4047, %v4065
        %v4067 = vmul.f32 %v4050, %v4065
        %v4068 = vmul.f32 %v4055, %v4065
        %v4069 = vmul.f32 %v4058, %v4065
        %4074 = vrot.lane.b32.xlu0 %v4066, 64
        %v4075 = vpop.permute.xlu0 %4074
        %4076 = vrot.lane.b32.xlu0 %v4067, 64
        %v4077 = vpop.permute.xlu0 %4076
        %4078 = vrot.lane.b32.xlu0 %v4068, 64
        %v4079 = vpop.permute.xlu0 %4078
        %4080 = vrot.lane.b32.xlu0 %v4069, 64
        %v4081 = vpop.permute.xlu0 %4080
        %v4086 = vadd.f32 %v3883, %v4075
        %v4087 = vadd.f32 %v3884, %v4077
        %v4088 = vadd.f32 %v3885, %v4079
        %v4089 = vadd.f32 %v3886, %v4081
        %v4090 = vld [vmem:[#allocation4] sm:$0xff]
        %v4091 = vld [vmem:[#allocation4 + $0x8] sm:$0xff]
        %4094 = vrot.lane.b32.xlu0 %v4090, 100
        %v4095 = vpop.permute.xlu0 %4094
        %4096 = vrot.lane.b32.xlu0 %v4091, 100
        %v4097 = vpop.permute.xlu0 %4096
        %4098 = vrot.lane.b32.xlu0 %v4090, 68
        %v4099 = vpop.permute.xlu0 %4098
        %4100 = vrot.lane.b32.xlu0 %v4091, 68
        %v4101 = vpop.permute.xlu0 %4100
        %v4103 = vsel %vm2670, %v4095, 0
        %v4106 = vsel %vm2670, %v4097, 0
        %v4109 = vsel %vm2670, %v4099, 0
        %v4112 = vsel %vm2670, %v4101, 0
        %4114 = vmatprep.subr.bf16.mxu0 0
        %4115 = vmatpush1.bf16.xpose.msra.mxu0 %v4109
        %4116 = vmatprep.subr.bf16.mxu0 0
        %4117 = vmatpush1.bf16.xpose.msra.mxu0 %v4112
        %4118 = vmatprep.subr.bf16.mxu0 0
        %4119 = vmatpush1.bf16.xpose.msra.mxu0 0
        %4120 = vmatprep.subr.bf16.mxu0 0
        %4121 = vmatpush1.bf16.xpose.msra.mxu0 0
        %4122 = vmatprep.subr.bf16.mxu0 0
        %4123 = vmatpush1.bf16.xpose.msra.mxu0 0
        %4124 = vmatprep.subr.bf16.mxu0 0
        %4125 = vmatpush1.bf16.xpose.msra.mxu0 0
        %4126 = vmatprep.subr.bf16.mxu0 0
        %4127 = vmatpush1.bf16.xpose.msra.mxu0 0
        %4128 = vmatprep.subr.bf16.mxu0 0
        %4129 = vmatpush1.bf16.xpose.msra.mxu0 0
        %4130 = vmatprep.subr.bf16.mxu0 0
        %4131 = vmatpush1.bf16.xpose.msra.mxu0 0
        %4132 = vmatprep.subr.bf16.mxu0 0
        %4133 = vmatpush1.bf16.xpose.msra.mxu0 0
        %4134 = vmatprep.subr.bf16.mxu0 0
        %4135 = vmatpush1.bf16.xpose.msra.mxu0 0
        %4136 = vmatprep.subr.bf16.mxu0 0
        %4137 = vmatpush1.bf16.xpose.msra.mxu0 0
        %4138 = vmatprep.subr.bf16.mxu0 0
        %4139 = vmatpush1.bf16.xpose.msra.mxu0 0
        %4140 = vmatprep.subr.bf16.mxu0 0
        %4141 = vmatpush1.bf16.xpose.msra.mxu0 0
        %4142 = vmatprep.subr.bf16.mxu0 0
        %4143 = vmatpush1.bf16.xpose.msra.mxu0 0
        %4144 = vmatprep.subr.bf16.mxu0 0
        %4145 = vmatpush1.bf16.xpose.msra.mxu0 0
        %4146 = vmatprep.mubr.bf16.mxu0 0
        %4147 = vmatmul.mubr.bf16.gmra.mrb[0].mxu0 %v4103
        %v4148 = vpop.f32.mrb[0].mxu0
        %v4149 = vadd.f32 0.0, %v4148
        %v4150 = vpop.f32.mrb[0].mxu0
        %v4151 = vpop.f32.mrb[0].mxu0
        %v4152 = vadd.f32 0.0, %v4151
        %v4153 = vpop.f32.mrb[0].mxu0
        %4154 = vmatprep.mubr.bf16.mxu0 0
        %4155 = vmatmul.mubr.bf16.gmra.mrb[0].mxu0 %v4106
        %v4156 = vpop.f32.mrb[0].mxu0
        %v4157 = vadd.f32 0.0, %v4156
        %v4158 = vpop.f32.mrb[0].mxu0
        %v4159 = vpop.f32.mrb[0].mxu0
        %v4160 = vadd.f32 0.0, %v4159
        %v4161 = vpop.f32.mrb[0].mxu0
        %4162 = vdwg.mxu0
        %v4163 = vsel %vm455, %v4149, -inf
        %4164 = vmax.xlane.f32.xlu0 %v4163
        %v4165 = vpop.xlane.xlu0 %4164
        %v4166 = vsel %vm455, %v4152, -inf
        %4167 = vmax.xlane.f32.xlu0 %v4166
        %v4168 = vpop.xlane.xlu0 %4167
        %v4169 = vsel %vm455, %v4157, -inf
        %4170 = vmax.xlane.f32.xlu0 %v4169
        %v4171 = vpop.xlane.xlu0 %4170
        %v4172 = vsel %vm455, %v4160, -inf
        %4173 = vmax.xlane.f32.xlu0 %v4172
        %v4174 = vpop.xlane.xlu0 %4173
        %v4175 = vsub.f32 %v4149, %v4165
        %v4176 = vsub.f32 %v4152, %v4168
        %v4177 = vsub.f32 %v4157, %v4171
        %v4178 = vsub.f32 %v4160, %v4174
        %v4179 = vmul.f32 %v4175, 1.442695
        %v4180 = vpow.pop %v4179
        %v4181 = vmul.f32 %v4176, 1.442695
        %v4182 = vpow.pop %v4181
        %v4183 = vmul.f32 %v4177, 1.442695
        %v4184 = vpow.pop %v4183
        %v4185 = vmul.f32 %v4178, 1.442695
        %v4186 = vpow.pop %v4185
        %v4187 = vsel %vm455, %v4180, 0.0
        %4188 = vadd.xlane.f32.xlu0 %v4187
        %v4189 = vpop.xlane.xlu0 %4188
        %v4190 = vsel %vm455, %v4182, 0.0
        %4191 = vadd.xlane.f32.xlu0 %v4190
        %v4192 = vpop.xlane.xlu0 %4191
        %v4193 = vsel %vm455, %v4184, 0.0
        %4194 = vadd.xlane.f32.xlu0 %v4193
        %v4195 = vpop.xlane.xlu0 %4194
        %v4196 = vsel %vm455, %v4186, 0.0
        %4197 = vadd.xlane.f32.xlu0 %v4196
        %v4198 = vpop.xlane.xlu0 %4197
        %v4199 = vrcp.pop %v4189
        %v4200 = vrcp.pop %v4192
        %v4201 = vrcp.pop %v4195
        %v4202 = vrcp.pop %v4198
        %v4203 = vmul.f32 %v4180, %v4199
        %v4204 = vmul.f32 %v4182, %v4200
        %v4205 = vmul.f32 %v4184, %v4201
        %v4206 = vmul.f32 %v4186, %v4202
        %v4207 = vpack.c.bf16 %v4204, %v4203
        %v4208 = vpack.c.bf16 %v4206, %v4205
        %v4210 = vsel %vm455, %v4207, 0
        %v4213 = vsel %vm455, %v4208, 0
        %4215 = vmatprep.subr.bf16.mxu0 0
        %4216 = vmatpush1.bf16.msra.mxu0 %v2779
        %4217 = vmatprep.subr.bf16.mxu0 0
        %4218 = vmatpush1.bf16.msra.mxu0 %v2781
        %4219 = vmatprep.subr.bf16.mxu0 0
        %4220 = vmatpush1.bf16.msra.mxu0 0
        %4221 = vmatprep.subr.bf16.mxu0 0
        %4222 = vmatpush1.bf16.msra.mxu0 0
        %4223 = vmatprep.subr.bf16.mxu0 0
        %4224 = vmatpush1.bf16.msra.mxu0 0
        %4225 = vmatprep.subr.bf16.mxu0 0
        %4226 = vmatpush1.bf16.msra.mxu0 0
        %4227 = vmatprep.subr.bf16.mxu0 0
        %4228 = vmatpush1.bf16.msra.mxu0 0
        %4229 = vmatprep.subr.bf16.mxu0 0
        %4230 = vmatpush1.bf16.msra.mxu0 0
        %4231 = vmatprep.subr.bf16.mxu0 0
        %4232 = vmatpush1.bf16.msra.mxu0 0
        %4233 = vmatprep.subr.bf16.mxu0 0
        %4234 = vmatpush1.bf16.msra.mxu0 0
        %4235 = vmatprep.subr.bf16.mxu0 0
        %4236 = vmatpush1.bf16.msra.mxu0 0
        %4237 = vmatprep.subr.bf16.mxu0 0
        %4238 = vmatpush1.bf16.msra.mxu0 0
        %4239 = vmatprep.subr.bf16.mxu0 0
        %4240 = vmatpush1.bf16.msra.mxu0 0
        %4241 = vmatprep.subr.bf16.mxu0 0
        %4242 = vmatpush1.bf16.msra.mxu0 0
        %4243 = vmatprep.subr.bf16.mxu0 0
        %4244 = vmatpush1.bf16.msra.mxu0 0
        %4245 = vmatprep.subr.bf16.mxu0 0
        %4246 = vmatpush1.bf16.msra.mxu0 0
        %4247 = vmatprep.mubr.bf16.mxu0 0
        %4248 = vmatmul.mubr.bf16.gmra.mrb[0].mxu0 %v4210
        %v4249 = vpop.f32.mrb[0].mxu0
        %v4250 = vadd.f32 0.0, %v4249
        %v4251 = vpop.f32.mrb[0].mxu0
        %v4252 = vpop.f32.mrb[0].mxu0
        %v4253 = vadd.f32 0.0, %v4252
        %v4254 = vpop.f32.mrb[0].mxu0
        %4255 = vmatprep.mubr.bf16.mxu0 0
        %4256 = vmatmul.mubr.bf16.gmra.mrb[0].mxu0 %v4213
        %v4257 = vpop.f32.mrb[0].mxu0
        %v4258 = vadd.f32 0.0, %v4257
        %v4259 = vpop.f32.mrb[0].mxu0
        %v4260 = vpop.f32.mrb[0].mxu0
        %v4261 = vadd.f32 0.0, %v4260
        %v4262 = vpop.f32.mrb[0].mxu0
        %4263 = vdwg.mxu0
        %v4264 = vld [vmem:[%s4 + $0x7] sm:$0x1]
        %v4265 = vlaneseq
        %v4266 = vshrl.u32 %v4265, 7
        %v4267 = vsub.s32 0, %v4266
        %v4268 = vrot.slane %v4264, %v4267
        %v4269 = vmul.f32 %v4250, %v4268
        %v4270 = vmul.f32 %v4253, %v4268
        %v4271 = vmul.f32 %v4258, %v4268
        %v4272 = vmul.f32 %v4261, %v4268
        %4277 = vrot.lane.b32.xlu0 %v4269, 64
        %v4278 = vpop.permute.xlu0 %4277
        %4279 = vrot.lane.b32.xlu0 %v4270, 64
        %v4280 = vpop.permute.xlu0 %4279
        %4281 = vrot.lane.b32.xlu0 %v4271, 64
        %v4282 = vpop.permute.xlu0 %4281
        %4283 = vrot.lane.b32.xlu0 %v4272, 64
        %v4284 = vpop.permute.xlu0 %4283
        %v4289 = vadd.f32 %v4086, %v4278
        %v4290 = vadd.f32 %v4087, %v4280
        %v4291 = vadd.f32 %v4088, %v4282
        %v4292 = vadd.f32 %v4089, %v4284
        %v4293 = vpack.c.bf16 %v4290, %v4289
        %v4294 = vpack.c.bf16 %v4292, %v4291
        %v4295 = vld [vmem:[%s6] sm:$0xf]
        %v4296 = vld [vmem:[%s6 + $0x4] sm:$0xf]
        %v4297 = vld [vmem:[%s6 + $0x8] sm:$0xf]
        %v4298 = vld [vmem:[%s6 + $0xc] sm:$0xf]
        %v4299 = vld [vmem:[%s7] sm:$0x1]
        %v4301 = vlaneseq
        %v4302 = vshrl.u32 %v4301, 7
        %v4303 = vsub.s32 0, %v4302
        %v4304 = vrot.slane %v4299, %v4303
        %4308 = vrot.lane.b32.xlu0 %v4293, 64
        %v4309 = vpop.permute.xlu0 %4308
        %4310 = vrot.lane.b32.xlu0 %v4294, 64
        %v4311 = vpop.permute.xlu0 %4310
        %v4316 = vunpack.c.l.b16 %v4295
        %v4317 = vunpack.c.l.b16 %v4296
        %v4318 = vunpack.c.l.b16 %v4297
        %v4319 = vunpack.c.l.b16 %v4298
        %v4320 = vpack.c.b16 %v4317, %v4316
        %v4321 = vpack.c.b16 %v4319, %v4318
        %v4325 = vsel %vm455, %v4309, 0
        %v4328 = vsel %vm455, %v4311, 0
        %4330 = vmatprep.subr.bf16.mxu0 0
        %4331 = vmatpush1.bf16.msra.mxu0 %v4320
        %4332 = vmatprep.subr.bf16.mxu0 0
        %4333 = vmatpush1.bf16.msra.mxu0 %v4321
        %4334 = vmatprep.subr.bf16.mxu0 0
        %4335 = vmatpush1.bf16.msra.mxu0 0
        %4336 = vmatprep.subr.bf16.mxu0 0
        %4337 = vmatpush1.bf16.msra.mxu0 0
        %4338 = vmatprep.subr.bf16.mxu0 0
        %4339 = vmatpush1.bf16.msra.mxu0 0
        %4340 = vmatprep.subr.bf16.mxu0 0
        %4341 = vmatpush1.bf16.msra.mxu0 0
        %4342 = vmatprep.subr.bf16.mxu0 0
        %4343 = vmatpush1.bf16.msra.mxu0 0
        %4344 = vmatprep.subr.bf16.mxu0 0
        %4345 = vmatpush1.bf16.msra.mxu0 0
        %4346 = vmatprep.subr.bf16.mxu0 0
        %4347 = vmatpush1.bf16.msra.mxu0 0
        %4348 = vmatprep.subr.bf16.mxu0 0
        %4349 = vmatpush1.bf16.msra.mxu0 0
        %4350 = vmatprep.subr.bf16.mxu0 0
        %4351 = vmatpush1.bf16.msra.mxu0 0
        %4352 = vmatprep.subr.bf16.mxu0 0
        %4353 = vmatpush1.bf16.msra.mxu0 0
        %4354 = vmatprep.subr.bf16.mxu0 0
        %4355 = vmatpush1.bf16.msra.mxu0 0
        %4356 = vmatprep.subr.bf16.mxu0 0
        %4357 = vmatpush1.bf16.msra.mxu0 0
        %4358 = vmatprep.subr.bf16.mxu0 0
        %4359 = vmatpush1.bf16.msra.mxu0 0
        %4360 = vmatprep.subr.bf16.mxu0 0
        %4361 = vmatpush1.bf16.msra.mxu0 0
        %4362 = vmatprep.mubr.bf16.mxu0 0
        %4363 = vmatmul.mubr.bf16.gmra.mrb[0].mxu0 %v4325
        %v4364 = vpop.f32.mrb[0].mxu0
        %v4365 = vadd.f32 %v4304, %v4364
        %v4366 = vpop.f32.mrb[0].mxu0
        %v4367 = vpop.f32.mrb[0].mxu0
        %v4368 = vadd.f32 %v4304, %v4367
        %v4369 = vpop.f32.mrb[0].mxu0
        %4370 = vmatprep.mubr.bf16.mxu0 0
        %4371 = vmatmul.mubr.bf16.gmra.mrb[0].mxu0 %v4328
        %v4372 = vpop.f32.mrb[0].mxu0
        %v4373 = vadd.f32 %v4304, %v4372
        %v4374 = vpop.f32.mrb[0].mxu0
        %v4375 = vpop.f32.mrb[0].mxu0
        %v4376 = vadd.f32 %v4304, %v4375
        %v4377 = vpop.f32.mrb[0].mxu0
        %4378 = vdwg.mxu0
        %4379 = vst.msk [vmem:[%s298] sm:$0xff] %vm455, %v4365
        %4380 = vst.msk [vmem:[%s298 + $0x8] sm:$0xff] %vm455, %v4368
        %4381 = vst.msk [vmem:[%s298 + $0x10] sm:$0xff] %vm455, %v4373
        %4382 = vst.msk [vmem:[%s298 + $0x18] sm:$0xff] %vm455, %v4376
        %s4383 = sand.u32 %s203, 1
        %s4384 = scalar_lea.sflag [#allocation6], %s4383
        %s4385 = sand.u32 %s203, 1
        %s4386 = smul.addr %s4385, 32
        %s4387 = scalar_lea.vmem [#allocation5], %s4386
        // Predicated region
        $region60: #{sequence_attention_forward.1} parent=51 // pred_check
          %p4388 = pneg %p213
        $region61: #{sequence_attention_forward.1} parent=51 // pred_check_branch
          %4390 = sbr.rel (%p4388) target = $region63
        $region62: #{sequence_attention_forward.1} parent=51 // pred_region
          %s4392 = ssub.s32 512, 512
          %4393 = vsyncadd %s4384, %s4392
          %s4394 = smul.addr %s22, 4
          %s4395 = smul.addr %s4394, 128
          %s4396 = scalar_lea.hbm %s8, %s4395
          %s4397 = sshll.u32 %s4387, 4
          %s4398 = int_to_ptr.vmem [resolvable:$true] %s4397
          %4403 = dma.vmem_to_hbm [thread:$0]  %s4398, 512, %s4396, %s4384, 128, 128, 8
        $region63: #{sequence_attention_forward.1} parent=51 // pred_fallthru
          _
      $region52: #{sequence_attention_forward.1} parent=5 // pred_fallthru
        _
      %p4404 = scmp.le.s32.totalorder 2, %s17
      // Predicated region
      $region64: #{sequence_attention_forward.1} parent=5 // pred_check
        %p4405 = pneg %p4404
      $region65: #{sequence_attention_forward.1} parent=5 // pred_check_branch
        %4407 = sbr.rel (%p4405) target = $region67
      $region66: #{sequence_attention_forward.1} parent=5 // pred_region
        %s4408 = ssub.s32 %s17, 2
        // Predicated region
        $region68: #{sequence_attention_forward.1} parent=66 // pred_check
          %p4409 = pneg %p219
        $region69: #{sequence_attention_forward.1} parent=66 // pred_check_branch
          %4411 = sbr.rel (%p4409) target = $region71
        $region70: #{sequence_attention_forward.1} parent=66 // pred_region
          %s4412 = sand.u32 %s204, 1
          %s4413 = scalar_lea.sflag [#allocation6], %s4412
          %s4414 = sand.u32 %s204, 1
          %s4415 = smul.addr %s4414, 32
          %s4416 = scalar_lea.vmem [#allocation5], %s4415
          %4417 = dma.done %s4413, 512
        $region71: #{sequence_attention_forward.1} parent=66 // pred_fallthru
          _
      $region67: #{sequence_attention_forward.1} parent=5 // pred_fallthru
        _
    $region6: #{sequence_attention_forward.1} parent=1 // loop_footer
      %s21 = sadd.s32 1, %s17
    $region7: #{sequence_attention_forward.1} parent=1 // loop_footer_branch
      %16 = sbr.rel target = $region3
    $region8: #{sequence_attention_forward.1} parent=1 // loop_exit
      _
    %4418 = vsyncpa [#allocation6], 1
    %s4419 = scalar_lea.sflag [#allocation6], 1
    %4420 = vsyncpa %s4419, 1

</llo_original>
